<compile_context>
chip_gen: v6e
topology: v6e:2x2x1
jax: 0.10.0
libtpu: 0.0.40
codegen_flags: <defaults>
</compile_context>

<pallas_src>
import functools

import jax
import jax.numpy as jnp
from jax.experimental import pallas as pl
from jax.experimental.pallas import tpu as pltpu

# Small, module-consistent sizes.
VOCAB_SIZE = 128
HIDDEN = 32          # hidden_size == embedding_size
EMBED = HIDDEN
NUM_LAYERS = 2
BATCH = 8
SEQ = 8              # decode steps folded into one kernel call


def _decoder_kernel(tok_ref, emb_ref, wx_ref, wh_ref, bg_ref, wlin_ref, blin_ref,
                    h0_ref, logp_ref, h_ref, xs_ref, hs_ref,
                    *, seq_len, num_layers, hidden, batch, vocab):
    """Single invocation (no grid). All T decode steps of a multi-layer GRU,
    then one batched vocab projection + log-softmax."""
    T, L, H, B, V = seq_len, num_layers, hidden, batch, vocab

    # ---- Embedding for ALL steps via one one-hot matmul on the MXU ---------
    tok = tok_ref[...]                                           # [T*B, 1] int32
    col = jax.lax.broadcasted_iota(jnp.int32, (T * B, V), 1)     # [T*B, V]
    one_hot = (col == tok).astype(jnp.float32)
    xs_ref[...] = jnp.dot(one_hot, emb_ref[...],
                          preferred_element_type=jnp.float32)    # [T*B, H]
    # NOTE: nn.Dropout is identity in eval mode.

    # ---- GRU recurrence over time (unrolled fori_loop) ----------------------
    def step(t, carry):
        x = xs_ref[pl.ds(t * B, B), :]                           # [B, H]
        hs = list(carry)
        for l in range(L):                                       # static, small
            h_prev = hs[l]
            g = (jnp.dot(x, wx_ref[l], preferred_element_type=jnp.float32)
                 + jnp.dot(h_prev, wh_ref[l], preferred_element_type=jnp.float32)
                 + bg_ref[l])                                    # [B, 4H]
            r = jax.nn.sigmoid(g[:, 0 * H:1 * H])
            z = jax.nn.sigmoid(g[:, 1 * H:2 * H])
            n = jnp.tanh(g[:, 2 * H:3 * H] + r * g[:, 3 * H:4 * H])
            h_new = (1.0 - z) * n + z * h_prev                   # [B, H]
            hs[l] = h_new
            # Inter-layer dropout of nn.GRU is identity in eval mode.
            x = h_new
        hs_ref[pl.ds(t * B, B), :] = x                           # stage top hidden
        return tuple(hs)

    h_init = tuple(h0_ref[l] for l in range(L))
    h_final = jax.lax.fori_loop(0, T, step, h_init, unroll=True)
    for l in range(L):
        h_ref[l] = h_final[l]

    # ---- Vocab projection + log-softmax for ALL steps at once --------------
    logits = jnp.dot(hs_ref[...], wlin_ref[...],
                     preferred_element_type=jnp.float32) + blin_ref[...]   # [T*B, V]
    m = jnp.max(logits, axis=-1, keepdims=True)
    s = logits - m
    lse = jnp.log(jnp.sum(jnp.exp(s), axis=-1, keepdims=True))
    logp_ref[...] = (s - lse).reshape(T, B, V)                   # lane-dense store


def pack_decoder_params(raw):
    """One-time conversion of PyTorch-layout params into kernel layout."""
    H = HIDDEN
    zeros = jnp.zeros((H, H), jnp.float32)
    w_x, w_h, b_g = [], [], []
    for l in range(NUM_LAYERS):
        wih_t = raw["w_ih"][l].T                                  # [H, 3H]  cols r|z|n
        whh_t = raw["w_hh"][l].T                                  # [H, 3H]
        w_x.append(jnp.concatenate([wih_t, zeros], axis=1))                        # r|z|n_x|0
        w_h.append(jnp.concatenate([whh_t[:, :2 * H], zeros, whh_t[:, 2 * H:]], 1))  # r|z|0|n_h
        b = jnp.concatenate([
            raw["b_ih"][l, :2 * H] + raw["b_hh"][l, :2 * H],      # r,z biases summed
            raw["b_ih"][l, 2 * H:],                               # b_in
            raw["b_hh"][l, 2 * H:],                               # b_hn
        ])
        b_g.append(b[None, :])                                    # [1, 4H]
    return {
        "embedding": raw["embedding"].astype(jnp.float32),        # [V, H]
        "w_x": jnp.stack(w_x, 0),                                 # [L, H, 4H]
        "w_h": jnp.stack(w_h, 0),                                 # [L, H, 4H]
        "b_gru": jnp.stack(b_g, 0),                               # [L, 1, 4H]
        "w_lin_t": raw["w_lin"].T,                                # [H, V]
        "b_lin": raw["b_lin"][None, :],                           # [1, V]
    }


@jax.jit
def decoder_decode(tokens, hidden_state, packed):
    """tokens: [T, B] int32; hidden_state: [L, B, H] f32.
    Runs T decode steps in one kernel invocation; returns
    (log_probs [T,B,V], hidden [L,B,H])."""
    T, B = tokens.shape
    L, _, H = hidden_state.shape
    V = packed["embedding"].shape[0]
    tok = tokens.reshape(T * B, 1).astype(jnp.int32)

    kernel = functools.partial(_decoder_kernel, seq_len=T, num_layers=L,
                               hidden=H, batch=B, vocab=V)

    vmem = pl.BlockSpec(memory_space=pltpu.MemorySpace.VMEM)

    # Advisory cost estimate (matmuls dominate).
    flops = int(2 * T * B * V * H                       # one-hot embedding matmul
                + T * L * 2 * (2 * B * H * 4 * H)       # GRU x/h matmuls
                + 2 * T * B * H * V)                    # vocab projection
    transcendentals = int(T * L * B * 3 * H + T * B * (V + 1))
    bytes_accessed = int(4 * (T * B + V * H + 2 * L * H * 4 * H + L * 4 * H
                              + H * V + V + 2 * L * B * H + T * B * V))

    logp, h_out = pl.pallas_call(
        kernel,
        out_shape=(
            jax.ShapeDtypeStruct((T, B, V), jnp.float32),
            jax.ShapeDtypeStruct((L, B, H), jnp.float32),
        ),
        in_specs=[vmem] * 8,
        out_specs=(vmem, vmem),
        scratch_shapes=[
            pltpu.VMEM((T * B, H), jnp.float32),   # embedded inputs, all steps
            pltpu.VMEM((T * B, H), jnp.float32),   # top-layer hidden, all steps
        ],
        input_output_aliases={7: 1},               # hidden_state buffer -> h_out
        cost_estimate=pl.CostEstimate(flops=flops,
                                      transcendentals=transcendentals,
                                      bytes_accessed=bytes_accessed),
    )(tok, packed["embedding"], packed["w_x"], packed["w_h"], packed["b_gru"],
      packed["w_lin_t"], packed["b_lin"], hidden_state)
    return logp, h_out


def decoder_forward(input_tokens, hidden_state, packed):
    """Module-parity single-step API: input [1, B] -> (logp [1,B,V], hidden, None)."""
    logp, h_new = decoder_decode(input_tokens, hidden_state, packed)
    return logp, h_new, None


def init_params(key):
    """Deterministic synthetic PyTorch-layout params (stands in for orth/linear init)."""
    ks = jax.random.split(key, 7)
    scale = 0.1
    return {
        "embedding": scale * jax.random.normal(ks[0], (VOCAB_SIZE, EMBED), jnp.float32),
        "w_ih": scale * jax.random.normal(ks[1], (NUM_LAYERS, 3 * HIDDEN, HIDDEN), jnp.float32),
        "w_hh": scale * jax.random.normal(ks[2], (NUM_LAYERS, 3 * HIDDEN, HIDDEN), jnp.float32),
        "b_ih": scale * jax.random.normal(ks[3], (NUM_LAYERS, 3 * HIDDEN), jnp.float32),
        "b_hh": scale * jax.random.normal(ks[4], (NUM_LAYERS, 3 * HIDDEN), jnp.float32),
        "w_lin": scale * jax.random.normal(ks[5], (VOCAB_SIZE, HIDDEN), jnp.float32),
        "b_lin": scale * jax.random.normal(ks[6], (VOCAB_SIZE,), jnp.float32),
    }


def _reference_decode(tokens, hidden_state, raw):
    """Pure-JAX reference matching PyTorch GRU + Linear + LogSoftmax semantics."""
    T, _ = tokens.shape
    H = HIDDEN
    h = hidden_state
    outs = []
    for t in range(T):
        x = raw["embedding"][tokens[t]]
        new_h = []
        for l in range(NUM_LAYERS):
            hl = h[l]
            gx = x @ raw["w_ih"][l].T + raw["b_ih"][l]
            gh = hl @ raw["w_hh"][l].T + raw["b_hh"][l]
            r = jax.nn.sigmoid(gx[:, :H] + gh[:, :H])
            z = jax.nn.sigmoid(gx[:, H:2 * H] + gh[:, H:2 * H])
            n = jnp.tanh(gx[:, 2 * H:] + r * gh[:, 2 * H:])
            h_new = (1.0 - z) * n + z * hl
            new_h.append(h_new)
            x = h_new
        h = jnp.stack(new_h, 0)
        logits = x @ raw["w_lin"].T + raw["b_lin"]
        outs.append(jax.nn.log_softmax(logits, axis=-1))
    return jnp.stack(outs, 0), h


if __name__ == "__main__":
    key = jax.random.PRNGKey(0)
    kp, kt, kh = jax.random.split(key, 3)

    raw_params = init_params(kp)
    packed = pack_decoder_params(raw_params)              # one-time packing

    tokens = jax.random.randint(kt, (SEQ, BATCH), 0, VOCAB_SIZE, dtype=jnp.int32)
    hidden0 = jax.random.normal(kh, (NUM_LAYERS, BATCH, HIDDEN), jnp.float32)

    # Multi-step decode (time loop inside the kernel, single grid-less call).
    logp, h_new = decoder_decode(tokens, hidden0, packed)
    jax.block_until_ready((logp, h_new))

    ref_logp, ref_h = _reference_decode(tokens, hidden0, raw_params)
    assert logp.shape == (SEQ, BATCH, VOCAB_SIZE)
    assert h_new.shape == (NUM_LAYERS, BATCH, HIDDEN)
    assert jnp.allclose(logp, ref_logp, atol=1e-4, rtol=1e-4)
    assert jnp.allclose(h_new, ref_h, atol=1e-4, rtol=1e-4)

    # Module-parity single-step call: forward(input [1,B], hidden) -> (out, hidden, None).
    logp1, h1, attn = decoder_forward(tokens[:1], hidden0, packed)
    jax.block_until_ready((logp1, h1))
    ref_logp1, ref_h1 = _reference_decode(tokens[:1], hidden0, raw_params)
    assert attn is None
    assert logp1.shape == (1, BATCH, VOCAB_SIZE)
    assert jnp.allclose(logp1, ref_logp1, atol=1e-4, rtol=1e-4)
    assert jnp.allclose(h1, ref_h1, atol=1e-4, rtol=1e-4)

    print("KERNEL_OK")
</pallas_src>

<mosaic_0001>
module attributes {stable_mosaic.version = 11 : i64} {
  func.func @_decoder_kernel(%arg0: memref<64x1xi32, #tpu.memory_space<vmem>>, %arg1: memref<128x32xf32, #tpu.memory_space<vmem>>, %arg2: memref<2x32x128xf32, #tpu.memory_space<vmem>>, %arg3: memref<2x32x128xf32, #tpu.memory_space<vmem>>, %arg4: memref<2x1x128xf32, #tpu.memory_space<vmem>>, %arg5: memref<32x128xf32, #tpu.memory_space<vmem>>, %arg6: memref<1x128xf32, #tpu.memory_space<vmem>>, %arg7: memref<2x8x32xf32, #tpu.memory_space<vmem>>, %arg8: memref<8x8x128xf32, #tpu.memory_space<vmem>>, %arg9: memref<2x8x32xf32, #tpu.memory_space<vmem>>, %arg10: memref<64x32xf32, #tpu.memory_space<vmem>>, %arg11: memref<64x32xf32, #tpu.memory_space<vmem>>) attributes {dimension_semantics = [], scalar_prefetch = 0 : i64, scratch_operands = 2 : i64, tpu.core_type = #tpu.core_type<tc>} {
    %c0 = arith.constant 0 : index
    %c0_0 = arith.constant 0 : index
    %0 = vector.load %arg0[%c0, %c0_0] : memref<64x1xi32, #tpu.memory_space<vmem>>, vector<64x1xi32>
    %1 = tpu.iota {dimensions = array<i32: 1>} : vector<64x128xi32>
    %2 = vector.broadcast %0 : vector<64x1xi32> to vector<64x128xi32>
    %3 = arith.cmpi eq, %1, %2 : vector<64x128xi32>
    %4 = arith.extui %3 : vector<64x128xi1> to vector<64x128xi32>
    %5 = arith.sitofp %4 : vector<64x128xi32> to vector<64x128xf32>
    %c0_1 = arith.constant 0 : index
    %c0_2 = arith.constant 0 : index
    %6 = vector.load %arg1[%c0_1, %c0_2] : memref<128x32xf32, #tpu.memory_space<vmem>>, vector<128x32xf32>
    %cst = arith.constant dense<0.000000e+00> : vector<64x32xf32>
    %7 = tpu.matmul %5, %6, %cst {dimension_numbers = #tpu.dot_dimension_numbers<[1], [0], [0], [1], [0, 0, 1, 1], [], []>} : vector<64x128xf32>, vector<128x32xf32>, vector<64x32xf32> -> vector<64x32xf32>
    %c0_3 = arith.constant 0 : index
    %c0_4 = arith.constant 0 : index
    %8 = vector.load %arg10[%c0_3, %c0_4] : memref<64x32xf32, #tpu.memory_space<vmem>>, vector<64x32xf32>
    tpu.vector_store %arg10[%c0_3, %c0_4], %7 {strides = array<i32>} : memref<64x32xf32, #tpu.memory_space<vmem>>, vector<64x32xf32>,
    %c0_5 = arith.constant 0 : index
    %c0_6 = arith.constant 0 : index
    %c0_7 = arith.constant 0 : index
    %9 = vector.load %arg7[%c0_5, %c0_6, %c0_7] : memref<2x8x32xf32, #tpu.memory_space<vmem>>, vector<1x8x32xf32>
    %10 = vector.shape_cast %9 : vector<1x8x32xf32> to vector<8x32xf32>
    %c1 = arith.constant 1 : index
    %c0_8 = arith.constant 0 : index
    %c0_9 = arith.constant 0 : index
    %11 = vector.load %arg7[%c1, %c0_8, %c0_9] : memref<2x8x32xf32, #tpu.memory_space<vmem>>, vector<1x8x32xf32>
    %12 = vector.shape_cast %11 : vector<1x8x32xf32> to vector<8x32xf32>
    %c0_i32 = arith.constant 0 : i32
    %c8_i32 = arith.constant 8 : i32
    %13 = arith.muli %c0_i32, %c8_i32 : i32
    %14 = arith.index_cast %13 : i32 to index
    %c0_10 = arith.constant 0 : index
    %15 = vector.load %arg10[%14, %c0_10] : memref<64x32xf32, #tpu.memory_space<vmem>>, vector<8x32xf32>
    %c0_11 = arith.constant 0 : index
    %c0_12 = arith.constant 0 : index
    %c0_13 = arith.constant 0 : index
    %16 = vector.load %arg2[%c0_11, %c0_12, %c0_13] : memref<2x32x128xf32, #tpu.memory_space<vmem>>, vector<1x32x128xf32>
    %17 = vector.shape_cast %16 : vector<1x32x128xf32> to vector<32x128xf32>
    %cst_14 = arith.constant dense<0.000000e+00> : vector<8x128xf32>
    %18 = tpu.matmul %15, %17, %cst_14 {dimension_numbers = #tpu.dot_dimension_numbers<[1], [0], [0], [1], [0, 0, 1, 1], [], []>} : vector<8x32xf32>, vector<32x128xf32>, vector<8x128xf32> -> vector<8x128xf32>
    %c0_15 = arith.constant 0 : index
    %c0_16 = arith.constant 0 : index
    %c0_17 = arith.constant 0 : index
    %19 = vector.load %arg3[%c0_15, %c0_16, %c0_17] : memref<2x32x128xf32, #tpu.memory_space<vmem>>, vector<1x32x128xf32>
    %20 = vector.shape_cast %19 : vector<1x32x128xf32> to vector<32x128xf32>
    %cst_18 = arith.constant dense<0.000000e+00> : vector<8x128xf32>
    %21 = tpu.matmul %10, %20, %cst_18 {dimension_numbers = #tpu.dot_dimension_numbers<[1], [0], [0], [1], [0, 0, 1, 1], [], []>} : vector<8x32xf32>, vector<32x128xf32>, vector<8x128xf32> -> vector<8x128xf32>
    %22 = arith.addf %18, %21 : vector<8x128xf32>
    %c0_19 = arith.constant 0 : index
    %c0_20 = arith.constant 0 : index
    %c0_21 = arith.constant 0 : index
    %23 = vector.load %arg4[%c0_19, %c0_20, %c0_21] : memref<2x1x128xf32, #tpu.memory_space<vmem>>, vector<1x1x128xf32>
    %24 = vector.shape_cast %23 : vector<1x1x128xf32> to vector<1x128xf32>
    %25 = vector.broadcast %24 : vector<1x128xf32> to vector<8x128xf32>
    %26 = arith.addf %22, %25 : vector<8x128xf32>
    %27 = vector.extract_strided_slice %26 {offsets = [0, 0], sizes = [8, 32], strides = [1, 1]} : vector<8x128xf32> to vector<8x32xf32>
    %28 = arith.negf %27 : vector<8x32xf32>
    %29 = math.exp %28 : vector<8x32xf32>
    %cst_22 = arith.constant 1.000000e+00 : f32
    %30 = vector.broadcast %cst_22 : f32 to vector<8x32xf32>
    %31 = arith.addf %30, %29 : vector<8x32xf32>
    %32 = arith.divf %30, %31 : vector<8x32xf32>
    %33 = vector.extract_strided_slice %26 {offsets = [0, 32], sizes = [8, 32], strides = [1, 1]} : vector<8x128xf32> to vector<8x32xf32>
    %34 = arith.negf %33 : vector<8x32xf32>
    %35 = math.exp %34 : vector<8x32xf32>
    %cst_23 = arith.constant 1.000000e+00 : f32
    %36 = vector.broadcast %cst_23 : f32 to vector<8x32xf32>
    %37 = arith.addf %36, %35 : vector<8x32xf32>
    %38 = arith.divf %36, %37 : vector<8x32xf32>
    %39 = vector.extract_strided_slice %26 {offsets = [0, 64], sizes = [8, 32], strides = [1, 1]} : vector<8x128xf32> to vector<8x32xf32>
    %40 = vector.extract_strided_slice %26 {offsets = [0, 96], sizes = [8, 32], strides = [1, 1]} : vector<8x128xf32> to vector<8x32xf32>
    %41 = arith.mulf %32, %40 : vector<8x32xf32>
    %42 = arith.addf %39, %41 : vector<8x32xf32>
    %43 = math.tanh %42 : vector<8x32xf32>
    %cst_24 = arith.constant 1.000000e+00 : f32
    %44 = vector.broadcast %cst_24 : f32 to vector<8x32xf32>
    %45 = arith.subf %44, %38 : vector<8x32xf32>
    %46 = arith.mulf %45, %43 : vector<8x32xf32>
    %47 = arith.mulf %38, %10 : vector<8x32xf32>
    %48 = arith.addf %46, %47 : vector<8x32xf32>
    %c1_25 = arith.constant 1 : index
    %c0_26 = arith.constant 0 : index
    %c0_27 = arith.constant 0 : index
    %49 = vector.load %arg2[%c1_25, %c0_26, %c0_27] : memref<2x32x128xf32, #tpu.memory_space<vmem>>, vector<1x32x128xf32>
    %50 = vector.shape_cast %49 : vector<1x32x128xf32> to vector<32x128xf32>
    %cst_28 = arith.constant dense<0.000000e+00> : vector<8x128xf32>
    %51 = tpu.matmul %48, %50, %cst_28 {dimension_numbers = #tpu.dot_dimension_numbers<[1], [0], [0], [1], [0, 0, 1, 1], [], []>} : vector<8x32xf32>, vector<32x128xf32>, vector<8x128xf32> -> vector<8x128xf32>
    %c1_29 = arith.constant 1 : index
    %c0_30 = arith.constant 0 : index
    %c0_31 = arith.constant 0 : index
    %52 = vector.load %arg3[%c1_29, %c0_30, %c0_31] : memref<2x32x128xf32, #tpu.memory_space<vmem>>, vector<1x32x128xf32>
    %53 = vector.shape_cast %52 : vector<1x32x128xf32> to vector<32x128xf32>
    %cst_32 = arith.constant dense<0.000000e+00> : vector<8x128xf32>
    %54 = tpu.matmul %12, %53, %cst_32 {dimension_numbers = #tpu.dot_dimension_numbers<[1], [0], [0], [1], [0, 0, 1, 1], [], []>} : vector<8x32xf32>, vector<32x128xf32>, vector<8x128xf32> -> vector<8x128xf32>
    %55 = arith.addf %51, %54 : vector<8x128xf32>
    %c1_33 = arith.constant 1 : index
    %c0_34 = arith.constant 0 : index
    %c0_35 = arith.constant 0 : index
    %56 = vector.load %arg4[%c1_33, %c0_34, %c0_35] : memref<2x1x128xf32, #tpu.memory_space<vmem>>, vector<1x1x128xf32>
    %57 = vector.shape_cast %56 : vector<1x1x128xf32> to vector<1x128xf32>
    %58 = vector.broadcast %57 : vector<1x128xf32> to vector<8x128xf32>
    %59 = arith.addf %55, %58 : vector<8x128xf32>
    %60 = vector.extract_strided_slice %59 {offsets = [0, 0], sizes = [8, 32], strides = [1, 1]} : vector<8x128xf32> to vector<8x32xf32>
    %61 = arith.negf %60 : vector<8x32xf32>
    %62 = math.exp %61 : vector<8x32xf32>
    %cst_36 = arith.constant 1.000000e+00 : f32
    %63 = vector.broadcast %cst_36 : f32 to vector<8x32xf32>
    %64 = arith.addf %63, %62 : vector<8x32xf32>
    %65 = arith.divf %63, %64 : vector<8x32xf32>
    %66 = vector.extract_strided_slice %59 {offsets = [0, 32], sizes = [8, 32], strides = [1, 1]} : vector<8x128xf32> to vector<8x32xf32>
    %67 = arith.negf %66 : vector<8x32xf32>
    %68 = math.exp %67 : vector<8x32xf32>
    %cst_37 = arith.constant 1.000000e+00 : f32
    %69 = vector.broadcast %cst_37 : f32 to vector<8x32xf32>
    %70 = arith.addf %69, %68 : vector<8x32xf32>
    %71 = arith.divf %69, %70 : vector<8x32xf32>
    %72 = vector.extract_strided_slice %59 {offsets = [0, 64], sizes = [8, 32], strides = [1, 1]} : vector<8x128xf32> to vector<8x32xf32>
    %73 = vector.extract_strided_slice %59 {offsets = [0, 96], sizes = [8, 32], strides = [1, 1]} : vector<8x128xf32> to vector<8x32xf32>
    %74 = arith.mulf %65, %73 : vector<8x32xf32>
    %75 = arith.addf %72, %74 : vector<8x32xf32>
    %76 = math.tanh %75 : vector<8x32xf32>
    %cst_38 = arith.constant 1.000000e+00 : f32
    %77 = vector.broadcast %cst_38 : f32 to vector<8x32xf32>
    %78 = arith.subf %77, %71 : vector<8x32xf32>
    %79 = arith.mulf %78, %76 : vector<8x32xf32>
    %80 = arith.mulf %71, %12 : vector<8x32xf32>
    %81 = arith.addf %79, %80 : vector<8x32xf32>
    %c8_i32_39 = arith.constant 8 : i32
    %82 = arith.muli %c0_i32, %c8_i32_39 : i32
    %83 = arith.index_cast %82 : i32 to index
    %c0_40 = arith.constant 0 : index
    %84 = vector.load %arg11[%83, %c0_40] : memref<64x32xf32, #tpu.memory_space<vmem>>, vector<8x32xf32>
    tpu.vector_store %arg11[%83, %c0_40], %81 {strides = array<i32>} : memref<64x32xf32, #tpu.memory_space<vmem>>, vector<8x32xf32>,
    %c1_i32 = arith.constant 1 : i32
    %c8_i32_41 = arith.constant 8 : i32
    %85 = arith.muli %c1_i32, %c8_i32_41 : i32
    %86 = arith.index_cast %85 : i32 to index
    %c0_42 = arith.constant 0 : index
    %87 = vector.load %arg10[%86, %c0_42] : memref<64x32xf32, #tpu.memory_space<vmem>>, vector<8x32xf32>
    %c0_43 = arith.constant 0 : index
    %c0_44 = arith.constant 0 : index
    %c0_45 = arith.constant 0 : index
    %88 = vector.load %arg2[%c0_43, %c0_44, %c0_45] : memref<2x32x128xf32, #tpu.memory_space<vmem>>, vector<1x32x128xf32>
    %89 = vector.shape_cast %88 : vector<1x32x128xf32> to vector<32x128xf32>
    %cst_46 = arith.constant dense<0.000000e+00> : vector<8x128xf32>
    %90 = tpu.matmul %87, %89, %cst_46 {dimension_numbers = #tpu.dot_dimension_numbers<[1], [0], [0], [1], [0, 0, 1, 1], [], []>} : vector<8x32xf32>, vector<32x128xf32>, vector<8x128xf32> -> vector<8x128xf32>
    %c0_47 = arith.constant 0 : index
    %c0_48 = arith.constant 0 : index
    %c0_49 = arith.constant 0 : index
    %91 = vector.load %arg3[%c0_47, %c0_48, %c0_49] : memref<2x32x128xf32, #tpu.memory_space<vmem>>, vector<1x32x128xf32>
    %92 = vector.shape_cast %91 : vector<1x32x128xf32> to vector<32x128xf32>
    %cst_50 = arith.constant dense<0.000000e+00> : vector<8x128xf32>
    %93 = tpu.matmul %48, %92, %cst_50 {dimension_numbers = #tpu.dot_dimension_numbers<[1], [0], [0], [1], [0, 0, 1, 1], [], []>} : vector<8x32xf32>, vector<32x128xf32>, vector<8x128xf32> -> vector<8x128xf32>
    %94 = arith.addf %90, %93 : vector<8x128xf32>
    %c0_51 = arith.constant 0 : index
    %c0_52 = arith.constant 0 : index
    %c0_53 = arith.constant 0 : index
    %95 = vector.load %arg4[%c0_51, %c0_52, %c0_53] : memref<2x1x128xf32, #tpu.memory_space<vmem>>, vector<1x1x128xf32>
    %96 = vector.shape_cast %95 : vector<1x1x128xf32> to vector<1x128xf32>
    %97 = vector.broadcast %96 : vector<1x128xf32> to vector<8x128xf32>
    %98 = arith.addf %94, %97 : vector<8x128xf32>
    %99 = vector.extract_strided_slice %98 {offsets = [0, 0], sizes = [8, 32], strides = [1, 1]} : vector<8x128xf32> to vector<8x32xf32>
    %100 = arith.negf %99 : vector<8x32xf32>
    %101 = math.exp %100 : vector<8x32xf32>
    %cst_54 = arith.constant 1.000000e+00 : f32
    %102 = vector.broadcast %cst_54 : f32 to vector<8x32xf32>
    %103 = arith.addf %102, %101 : vector<8x32xf32>
    %104 = arith.divf %102, %103 : vector<8x32xf32>
    %105 = vector.extract_strided_slice %98 {offsets = [0, 32], sizes = [8, 32], strides = [1, 1]} : vector<8x128xf32> to vector<8x32xf32>
    %106 = arith.negf %105 : vector<8x32xf32>
    %107 = math.exp %106 : vector<8x32xf32>
    %cst_55 = arith.constant 1.000000e+00 : f32
    %108 = vector.broadcast %cst_55 : f32 to vector<8x32xf32>
    %109 = arith.addf %108, %107 : vector<8x32xf32>
    %110 = arith.divf %108, %109 : vector<8x32xf32>
    %111 = vector.extract_strided_slice %98 {offsets = [0, 64], sizes = [8, 32], strides = [1, 1]} : vector<8x128xf32> to vector<8x32xf32>
    %112 = vector.extract_strided_slice %98 {offsets = [0, 96], sizes = [8, 32], strides = [1, 1]} : vector<8x128xf32> to vector<8x32xf32>
    %113 = arith.mulf %104, %112 : vector<8x32xf32>
    %114 = arith.addf %111, %113 : vector<8x32xf32>
    %115 = math.tanh %114 : vector<8x32xf32>
    %cst_56 = arith.constant 1.000000e+00 : f32
    %116 = vector.broadcast %cst_56 : f32 to vector<8x32xf32>
    %117 = arith.subf %116, %110 : vector<8x32xf32>
    %118 = arith.mulf %117, %115 : vector<8x32xf32>
    %119 = arith.mulf %110, %48 : vector<8x32xf32>
    %120 = arith.addf %118, %119 : vector<8x32xf32>
    %c1_57 = arith.constant 1 : index
    %c0_58 = arith.constant 0 : index
    %c0_59 = arith.constant 0 : index
    %121 = vector.load %arg2[%c1_57, %c0_58, %c0_59] : memref<2x32x128xf32, #tpu.memory_space<vmem>>, vector<1x32x128xf32>
    %122 = vector.shape_cast %121 : vector<1x32x128xf32> to vector<32x128xf32>
    %cst_60 = arith.constant dense<0.000000e+00> : vector<8x128xf32>
    %123 = tpu.matmul %120, %122, %cst_60 {dimension_numbers = #tpu.dot_dimension_numbers<[1], [0], [0], [1], [0, 0, 1, 1], [], []>} : vector<8x32xf32>, vector<32x128xf32>, vector<8x128xf32> -> vector<8x128xf32>
    %c1_61 = arith.constant 1 : index
    %c0_62 = arith.constant 0 : index
    %c0_63 = arith.constant 0 : index
    %124 = vector.load %arg3[%c1_61, %c0_62, %c0_63] : memref<2x32x128xf32, #tpu.memory_space<vmem>>, vector<1x32x128xf32>
    %125 = vector.shape_cast %124 : vector<1x32x128xf32> to vector<32x128xf32>
    %cst_64 = arith.constant dense<0.000000e+00> : vector<8x128xf32>
    %126 = tpu.matmul %81, %125, %cst_64 {dimension_numbers = #tpu.dot_dimension_numbers<[1], [0], [0], [1], [0, 0, 1, 1], [], []>} : vector<8x32xf32>, vector<32x128xf32>, vector<8x128xf32> -> vector<8x128xf32>
    %127 = arith.addf %123, %126 : vector<8x128xf32>
    %c1_65 = arith.constant 1 : index
    %c0_66 = arith.constant 0 : index
    %c0_67 = arith.constant 0 : index
    %128 = vector.load %arg4[%c1_65, %c0_66, %c0_67] : memref<2x1x128xf32, #tpu.memory_space<vmem>>, vector<1x1x128xf32>
    %129 = vector.shape_cast %128 : vector<1x1x128xf32> to vector<1x128xf32>
    %130 = vector.broadcast %129 : vector<1x128xf32> to vector<8x128xf32>
    %131 = arith.addf %127, %130 : vector<8x128xf32>
    %132 = vector.extract_strided_slice %131 {offsets = [0, 0], sizes = [8, 32], strides = [1, 1]} : vector<8x128xf32> to vector<8x32xf32>
    %133 = arith.negf %132 : vector<8x32xf32>
    %134 = math.exp %133 : vector<8x32xf32>
    %cst_68 = arith.constant 1.000000e+00 : f32
    %135 = vector.broadcast %cst_68 : f32 to vector<8x32xf32>
    %136 = arith.addf %135, %134 : vector<8x32xf32>
    %137 = arith.divf %135, %136 : vector<8x32xf32>
    %138 = vector.extract_strided_slice %131 {offsets = [0, 32], sizes = [8, 32], strides = [1, 1]} : vector<8x128xf32> to vector<8x32xf32>
    %139 = arith.negf %138 : vector<8x32xf32>
    %140 = math.exp %139 : vector<8x32xf32>
    %cst_69 = arith.constant 1.000000e+00 : f32
    %141 = vector.broadcast %cst_69 : f32 to vector<8x32xf32>
    %142 = arith.addf %141, %140 : vector<8x32xf32>
    %143 = arith.divf %141, %142 : vector<8x32xf32>
    %144 = vector.extract_strided_slice %131 {offsets = [0, 64], sizes = [8, 32], strides = [1, 1]} : vector<8x128xf32> to vector<8x32xf32>
    %145 = vector.extract_strided_slice %131 {offsets = [0, 96], sizes = [8, 32], strides = [1, 1]} : vector<8x128xf32> to vector<8x32xf32>
    %146 = arith.mulf %137, %145 : vector<8x32xf32>
    %147 = arith.addf %144, %146 : vector<8x32xf32>
    %148 = math.tanh %147 : vector<8x32xf32>
    %cst_70 = arith.constant 1.000000e+00 : f32
    %149 = vector.broadcast %cst_70 : f32 to vector<8x32xf32>
    %150 = arith.subf %149, %143 : vector<8x32xf32>
    %151 = arith.mulf %150, %148 : vector<8x32xf32>
    %152 = arith.mulf %143, %81 : vector<8x32xf32>
    %153 = arith.addf %151, %152 : vector<8x32xf32>
    %c8_i32_71 = arith.constant 8 : i32
    %154 = arith.muli %c1_i32, %c8_i32_71 : i32
    %155 = arith.index_cast %154 : i32 to index
    %c0_72 = arith.constant 0 : index
    %156 = vector.load %arg11[%155, %c0_72] : memref<64x32xf32, #tpu.memory_space<vmem>>, vector<8x32xf32>
    tpu.vector_store %arg11[%155, %c0_72], %153 {strides = array<i32>} : memref<64x32xf32, #tpu.memory_space<vmem>>, vector<8x32xf32>,
    %c2_i32 = arith.constant 2 : i32
    %c8_i32_73 = arith.constant 8 : i32
    %157 = arith.muli %c2_i32, %c8_i32_73 : i32
    %158 = arith.index_cast %157 : i32 to index
    %c0_74 = arith.constant 0 : index
    %159 = vector.load %arg10[%158, %c0_74] : memref<64x32xf32, #tpu.memory_space<vmem>>, vector<8x32xf32>
    %c0_75 = arith.constant 0 : index
    %c0_76 = arith.constant 0 : index
    %c0_77 = arith.constant 0 : index
    %160 = vector.load %arg2[%c0_75, %c0_76, %c0_77] : memref<2x32x128xf32, #tpu.memory_space<vmem>>, vector<1x32x128xf32>
    %161 = vector.shape_cast %160 : vector<1x32x128xf32> to vector<32x128xf32>
    %cst_78 = arith.constant dense<0.000000e+00> : vector<8x128xf32>
    %162 = tpu.matmul %159, %161, %cst_78 {dimension_numbers = #tpu.dot_dimension_numbers<[1], [0], [0], [1], [0, 0, 1, 1], [], []>} : vector<8x32xf32>, vector<32x128xf32>, vector<8x128xf32> -> vector<8x128xf32>
    %c0_79 = arith.constant 0 : index
    %c0_80 = arith.constant 0 : index
    %c0_81 = arith.constant 0 : index
    %163 = vector.load %arg3[%c0_79, %c0_80, %c0_81] : memref<2x32x128xf32, #tpu.memory_space<vmem>>, vector<1x32x128xf32>
    %164 = vector.shape_cast %163 : vector<1x32x128xf32> to vector<32x128xf32>
    %cst_82 = arith.constant dense<0.000000e+00> : vector<8x128xf32>
    %165 = tpu.matmul %120, %164, %cst_82 {dimension_numbers = #tpu.dot_dimension_numbers<[1], [0], [0], [1], [0, 0, 1, 1], [], []>} : vector<8x32xf32>, vector<32x128xf32>, vector<8x128xf32> -> vector<8x128xf32>
    %166 = arith.addf %162, %165 : vector<8x128xf32>
    %c0_83 = arith.constant 0 : index
    %c0_84 = arith.constant 0 : index
    %c0_85 = arith.constant 0 : index
    %167 = vector.load %arg4[%c0_83, %c0_84, %c0_85] : memref<2x1x128xf32, #tpu.memory_space<vmem>>, vector<1x1x128xf32>
    %168 = vector.shape_cast %167 : vector<1x1x128xf32> to vector<1x128xf32>
    %169 = vector.broadcast %168 : vector<1x128xf32> to vector<8x128xf32>
    %170 = arith.addf %166, %169 : vector<8x128xf32>
    %171 = vector.extract_strided_slice %170 {offsets = [0, 0], sizes = [8, 32], strides = [1, 1]} : vector<8x128xf32> to vector<8x32xf32>
    %172 = arith.negf %171 : vector<8x32xf32>
    %173 = math.exp %172 : vector<8x32xf32>
    %cst_86 = arith.constant 1.000000e+00 : f32
    %174 = vector.broadcast %cst_86 : f32 to vector<8x32xf32>
    %175 = arith.addf %174, %173 : vector<8x32xf32>
    %176 = arith.divf %174, %175 : vector<8x32xf32>
    %177 = vector.extract_strided_slice %170 {offsets = [0, 32], sizes = [8, 32], strides = [1, 1]} : vector<8x128xf32> to vector<8x32xf32>
    %178 = arith.negf %177 : vector<8x32xf32>
    %179 = math.exp %178 : vector<8x32xf32>
    %cst_87 = arith.constant 1.000000e+00 : f32
    %180 = vector.broadcast %cst_87 : f32 to vector<8x32xf32>
    %181 = arith.addf %180, %179 : vector<8x32xf32>
    %182 = arith.divf %180, %181 : vector<8x32xf32>
    %183 = vector.extract_strided_slice %170 {offsets = [0, 64], sizes = [8, 32], strides = [1, 1]} : vector<8x128xf32> to vector<8x32xf32>
    %184 = vector.extract_strided_slice %170 {offsets = [0, 96], sizes = [8, 32], strides = [1, 1]} : vector<8x128xf32> to vector<8x32xf32>
    %185 = arith.mulf %176, %184 : vector<8x32xf32>
    %186 = arith.addf %183, %185 : vector<8x32xf32>
    %187 = math.tanh %186 : vector<8x32xf32>
    %cst_88 = arith.constant 1.000000e+00 : f32
    %188 = vector.broadcast %cst_88 : f32 to vector<8x32xf32>
    %189 = arith.subf %188, %182 : vector<8x32xf32>
    %190 = arith.mulf %189, %187 : vector<8x32xf32>
    %191 = arith.mulf %182, %120 : vector<8x32xf32>
    %192 = arith.addf %190, %191 : vector<8x32xf32>
    %c1_89 = arith.constant 1 : index
    %c0_90 = arith.constant 0 : index
    %c0_91 = arith.constant 0 : index
    %193 = vector.load %arg2[%c1_89, %c0_90, %c0_91] : memref<2x32x128xf32, #tpu.memory_space<vmem>>, vector<1x32x128xf32>
    %194 = vector.shape_cast %193 : vector<1x32x128xf32> to vector<32x128xf32>
    %cst_92 = arith.constant dense<0.000000e+00> : vector<8x128xf32>
    %195 = tpu.matmul %192, %194, %cst_92 {dimension_numbers = #tpu.dot_dimension_numbers<[1], [0], [0], [1], [0, 0, 1, 1], [], []>} : vector<8x32xf32>, vector<32x128xf32>, vector<8x128xf32> -> vector<8x128xf32>
    %c1_93 = arith.constant 1 : index
    %c0_94 = arith.constant 0 : index
    %c0_95 = arith.constant 0 : index
    %196 = vector.load %arg3[%c1_93, %c0_94, %c0_95] : memref<2x32x128xf32, #tpu.memory_space<vmem>>, vector<1x32x128xf32>
    %197 = vector.shape_cast %196 : vector<1x32x128xf32> to vector<32x128xf32>
    %cst_96 = arith.constant dense<0.000000e+00> : vector<8x128xf32>
    %198 = tpu.matmul %153, %197, %cst_96 {dimension_numbers = #tpu.dot_dimension_numbers<[1], [0], [0], [1], [0, 0, 1, 1], [], []>} : vector<8x32xf32>, vector<32x128xf32>, vector<8x128xf32> -> vector<8x128xf32>
    %199 = arith.addf %195, %198 : vector<8x128xf32>
    %c1_97 = arith.constant 1 : index
    %c0_98 = arith.constant 0 : index
    %c0_99 = arith.constant 0 : index
    %200 = vector.load %arg4[%c1_97, %c0_98, %c0_99] : memref<2x1x128xf32, #tpu.memory_space<vmem>>, vector<1x1x128xf32>
    %201 = vector.shape_cast %200 : vector<1x1x128xf32> to vector<1x128xf32>
    %202 = vector.broadcast %201 : vector<1x128xf32> to vector<8x128xf32>
    %203 = arith.addf %199, %202 : vector<8x128xf32>
    %204 = vector.extract_strided_slice %203 {offsets = [0, 0], sizes = [8, 32], strides = [1, 1]} : vector<8x128xf32> to vector<8x32xf32>
    %205 = arith.negf %204 : vector<8x32xf32>
    %206 = math.exp %205 : vector<8x32xf32>
    %cst_100 = arith.constant 1.000000e+00 : f32
    %207 = vector.broadcast %cst_100 : f32 to vector<8x32xf32>
    %208 = arith.addf %207, %206 : vector<8x32xf32>
    %209 = arith.divf %207, %208 : vector<8x32xf32>
    %210 = vector.extract_strided_slice %203 {offsets = [0, 32], sizes = [8, 32], strides = [1, 1]} : vector<8x128xf32> to vector<8x32xf32>
    %211 = arith.negf %210 : vector<8x32xf32>
    %212 = math.exp %211 : vector<8x32xf32>
    %cst_101 = arith.constant 1.000000e+00 : f32
    %213 = vector.broadcast %cst_101 : f32 to vector<8x32xf32>
    %214 = arith.addf %213, %212 : vector<8x32xf32>
    %215 = arith.divf %213, %214 : vector<8x32xf32>
    %216 = vector.extract_strided_slice %203 {offsets = [0, 64], sizes = [8, 32], strides = [1, 1]} : vector<8x128xf32> to vector<8x32xf32>
    %217 = vector.extract_strided_slice %203 {offsets = [0, 96], sizes = [8, 32], strides = [1, 1]} : vector<8x128xf32> to vector<8x32xf32>
    %218 = arith.mulf %209, %217 : vector<8x32xf32>
    %219 = arith.addf %216, %218 : vector<8x32xf32>
    %220 = math.tanh %219 : vector<8x32xf32>
    %cst_102 = arith.constant 1.000000e+00 : f32
    %221 = vector.broadcast %cst_102 : f32 to vector<8x32xf32>
    %222 = arith.subf %221, %215 : vector<8x32xf32>
    %223 = arith.mulf %222, %220 : vector<8x32xf32>
    %224 = arith.mulf %215, %153 : vector<8x32xf32>
    %225 = arith.addf %223, %224 : vector<8x32xf32>
    %c8_i32_103 = arith.constant 8 : i32
    %226 = arith.muli %c2_i32, %c8_i32_103 : i32
    %227 = arith.index_cast %226 : i32 to index
    %c0_104 = arith.constant 0 : index
    %228 = vector.load %arg11[%227, %c0_104] : memref<64x32xf32, #tpu.memory_space<vmem>>, vector<8x32xf32>
    tpu.vector_store %arg11[%227, %c0_104], %225 {strides = array<i32>} : memref<64x32xf32, #tpu.memory_space<vmem>>, vector<8x32xf32>,
    %c3_i32 = arith.constant 3 : i32
    %c8_i32_105 = arith.constant 8 : i32
    %229 = arith.muli %c3_i32, %c8_i32_105 : i32
    %230 = arith.index_cast %229 : i32 to index
    %c0_106 = arith.constant 0 : index
    %231 = vector.load %arg10[%230, %c0_106] : memref<64x32xf32, #tpu.memory_space<vmem>>, vector<8x32xf32>
    %c0_107 = arith.constant 0 : index
    %c0_108 = arith.constant 0 : index
    %c0_109 = arith.constant 0 : index
    %232 = vector.load %arg2[%c0_107, %c0_108, %c0_109] : memref<2x32x128xf32, #tpu.memory_space<vmem>>, vector<1x32x128xf32>
    %233 = vector.shape_cast %232 : vector<1x32x128xf32> to vector<32x128xf32>
    %cst_110 = arith.constant dense<0.000000e+00> : vector<8x128xf32>
    %234 = tpu.matmul %231, %233, %cst_110 {dimension_numbers = #tpu.dot_dimension_numbers<[1], [0], [0], [1], [0, 0, 1, 1], [], []>} : vector<8x32xf32>, vector<32x128xf32>, vector<8x128xf32> -> vector<8x128xf32>
    %c0_111 = arith.constant 0 : index
    %c0_112 = arith.constant 0 : index
    %c0_113 = arith.constant 0 : index
    %235 = vector.load %arg3[%c0_111, %c0_112, %c0_113] : memref<2x32x128xf32, #tpu.memory_space<vmem>>, vector<1x32x128xf32>
    %236 = vector.shape_cast %235 : vector<1x32x128xf32> to vector<32x128xf32>
    %cst_114 = arith.constant dense<0.000000e+00> : vector<8x128xf32>
    %237 = tpu.matmul %192, %236, %cst_114 {dimension_numbers = #tpu.dot_dimension_numbers<[1], [0], [0], [1], [0, 0, 1, 1], [], []>} : vector<8x32xf32>, vector<32x128xf32>, vector<8x128xf32> -> vector<8x128xf32>
    %238 = arith.addf %234, %237 : vector<8x128xf32>
    %c0_115 = arith.constant 0 : index
    %c0_116 = arith.constant 0 : index
    %c0_117 = arith.constant 0 : index
    %239 = vector.load %arg4[%c0_115, %c0_116, %c0_117] : memref<2x1x128xf32, #tpu.memory_space<vmem>>, vector<1x1x128xf32>
    %240 = vector.shape_cast %239 : vector<1x1x128xf32> to vector<1x128xf32>
    %241 = vector.broadcast %240 : vector<1x128xf32> to vector<8x128xf32>
    %242 = arith.addf %238, %241 : vector<8x128xf32>
    %243 = vector.extract_strided_slice %242 {offsets = [0, 0], sizes = [8, 32], strides = [1, 1]} : vector<8x128xf32> to vector<8x32xf32>
    %244 = arith.negf %243 : vector<8x32xf32>
    %245 = math.exp %244 : vector<8x32xf32>
    %cst_118 = arith.constant 1.000000e+00 : f32
    %246 = vector.broadcast %cst_118 : f32 to vector<8x32xf32>
    %247 = arith.addf %246, %245 : vector<8x32xf32>
    %248 = arith.divf %246, %247 : vector<8x32xf32>
    %249 = vector.extract_strided_slice %242 {offsets = [0, 32], sizes = [8, 32], strides = [1, 1]} : vector<8x128xf32> to vector<8x32xf32>
    %250 = arith.negf %249 : vector<8x32xf32>
    %251 = math.exp %250 : vector<8x32xf32>
    %cst_119 = arith.constant 1.000000e+00 : f32
    %252 = vector.broadcast %cst_119 : f32 to vector<8x32xf32>
    %253 = arith.addf %252, %251 : vector<8x32xf32>
    %254 = arith.divf %252, %253 : vector<8x32xf32>
    %255 = vector.extract_strided_slice %242 {offsets = [0, 64], sizes = [8, 32], strides = [1, 1]} : vector<8x128xf32> to vector<8x32xf32>
    %256 = vector.extract_strided_slice %242 {offsets = [0, 96], sizes = [8, 32], strides = [1, 1]} : vector<8x128xf32> to vector<8x32xf32>
    %257 = arith.mulf %248, %256 : vector<8x32xf32>
    %258 = arith.addf %255, %257 : vector<8x32xf32>
    %259 = math.tanh %258 : vector<8x32xf32>
    %cst_120 = arith.constant 1.000000e+00 : f32
    %260 = vector.broadcast %cst_120 : f32 to vector<8x32xf32>
    %261 = arith.subf %260, %254 : vector<8x32xf32>
    %262 = arith.mulf %261, %259 : vector<8x32xf32>
    %263 = arith.mulf %254, %192 : vector<8x32xf32>
    %264 = arith.addf %262, %263 : vector<8x32xf32>
    %c1_121 = arith.constant 1 : index
    %c0_122 = arith.constant 0 : index
    %c0_123 = arith.constant 0 : index
    %265 = vector.load %arg2[%c1_121, %c0_122, %c0_123] : memref<2x32x128xf32, #tpu.memory_space<vmem>>, vector<1x32x128xf32>
    %266 = vector.shape_cast %265 : vector<1x32x128xf32> to vector<32x128xf32>
    %cst_124 = arith.constant dense<0.000000e+00> : vector<8x128xf32>
    %267 = tpu.matmul %264, %266, %cst_124 {dimension_numbers = #tpu.dot_dimension_numbers<[1], [0], [0], [1], [0, 0, 1, 1], [], []>} : vector<8x32xf32>, vector<32x128xf32>, vector<8x128xf32> -> vector<8x128xf32>
    %c1_125 = arith.constant 1 : index
    %c0_126 = arith.constant 0 : index
    %c0_127 = arith.constant 0 : index
    %268 = vector.load %arg3[%c1_125, %c0_126, %c0_127] : memref<2x32x128xf32, #tpu.memory_space<vmem>>, vector<1x32x128xf32>
    %269 = vector.shape_cast %268 : vector<1x32x128xf32> to vector<32x128xf32>
    %cst_128 = arith.constant dense<0.000000e+00> : vector<8x128xf32>
    %270 = tpu.matmul %225, %269, %cst_128 {dimension_numbers = #tpu.dot_dimension_numbers<[1], [0], [0], [1], [0, 0, 1, 1], [], []>} : vector<8x32xf32>, vector<32x128xf32>, vector<8x128xf32> -> vector<8x128xf32>
    %271 = arith.addf %267, %270 : vector<8x128xf32>
    %c1_129 = arith.constant 1 : index
    %c0_130 = arith.constant 0 : index
    %c0_131 = arith.constant 0 : index
    %272 = vector.load %arg4[%c1_129, %c0_130, %c0_131] : memref<2x1x128xf32, #tpu.memory_space<vmem>>, vector<1x1x128xf32>
    %273 = vector.shape_cast %272 : vector<1x1x128xf32> to vector<1x128xf32>
    %274 = vector.broadcast %273 : vector<1x128xf32> to vector<8x128xf32>
    %275 = arith.addf %271, %274 : vector<8x128xf32>
    %276 = vector.extract_strided_slice %275 {offsets = [0, 0], sizes = [8, 32], strides = [1, 1]} : vector<8x128xf32> to vector<8x32xf32>
    %277 = arith.negf %276 : vector<8x32xf32>
    %278 = math.exp %277 : vector<8x32xf32>
    %cst_132 = arith.constant 1.000000e+00 : f32
    %279 = vector.broadcast %cst_132 : f32 to vector<8x32xf32>
    %280 = arith.addf %279, %278 : vector<8x32xf32>
    %281 = arith.divf %279, %280 : vector<8x32xf32>
    %282 = vector.extract_strided_slice %275 {offsets = [0, 32], sizes = [8, 32], strides = [1, 1]} : vector<8x128xf32> to vector<8x32xf32>
    %283 = arith.negf %282 : vector<8x32xf32>
    %284 = math.exp %283 : vector<8x32xf32>
    %cst_133 = arith.constant 1.000000e+00 : f32
    %285 = vector.broadcast %cst_133 : f32 to vector<8x32xf32>
    %286 = arith.addf %285, %284 : vector<8x32xf32>
    %287 = arith.divf %285, %286 : vector<8x32xf32>
    %288 = vector.extract_strided_slice %275 {offsets = [0, 64], sizes = [8, 32], strides = [1, 1]} : vector<8x128xf32> to vector<8x32xf32>
    %289 = vector.extract_strided_slice %275 {offsets = [0, 96], sizes = [8, 32], strides = [1, 1]} : vector<8x128xf32> to vector<8x32xf32>
    %290 = arith.mulf %281, %289 : vector<8x32xf32>
    %291 = arith.addf %288, %290 : vector<8x32xf32>
    %292 = math.tanh %291 : vector<8x32xf32>
    %cst_134 = arith.constant 1.000000e+00 : f32
    %293 = vector.broadcast %cst_134 : f32 to vector<8x32xf32>
    %294 = arith.subf %293, %287 : vector<8x32xf32>
    %295 = arith.mulf %294, %292 : vector<8x32xf32>
    %296 = arith.mulf %287, %225 : vector<8x32xf32>
    %297 = arith.addf %295, %296 : vector<8x32xf32>
    %c8_i32_135 = arith.constant 8 : i32
    %298 = arith.muli %c3_i32, %c8_i32_135 : i32
    %299 = arith.index_cast %298 : i32 to index
    %c0_136 = arith.constant 0 : index
    %300 = vector.load %arg11[%299, %c0_136] : memref<64x32xf32, #tpu.memory_space<vmem>>, vector<8x32xf32>
    tpu.vector_store %arg11[%299, %c0_136], %297 {strides = array<i32>} : memref<64x32xf32, #tpu.memory_space<vmem>>, vector<8x32xf32>,
    %c4_i32 = arith.constant 4 : i32
    %c8_i32_137 = arith.constant 8 : i32
    %301 = arith.muli %c4_i32, %c8_i32_137 : i32
    %302 = arith.index_cast %301 : i32 to index
    %c0_138 = arith.constant 0 : index
    %303 = vector.load %arg10[%302, %c0_138] : memref<64x32xf32, #tpu.memory_space<vmem>>, vector<8x32xf32>
    %c0_139 = arith.constant 0 : index
    %c0_140 = arith.constant 0 : index
    %c0_141 = arith.constant 0 : index
    %304 = vector.load %arg2[%c0_139, %c0_140, %c0_141] : memref<2x32x128xf32, #tpu.memory_space<vmem>>, vector<1x32x128xf32>
    %305 = vector.shape_cast %304 : vector<1x32x128xf32> to vector<32x128xf32>
    %cst_142 = arith.constant dense<0.000000e+00> : vector<8x128xf32>
    %306 = tpu.matmul %303, %305, %cst_142 {dimension_numbers = #tpu.dot_dimension_numbers<[1], [0], [0], [1], [0, 0, 1, 1], [], []>} : vector<8x32xf32>, vector<32x128xf32>, vector<8x128xf32> -> vector<8x128xf32>
    %c0_143 = arith.constant 0 : index
    %c0_144 = arith.constant 0 : index
    %c0_145 = arith.constant 0 : index
    %307 = vector.load %arg3[%c0_143, %c0_144, %c0_145] : memref<2x32x128xf32, #tpu.memory_space<vmem>>, vector<1x32x128xf32>
    %308 = vector.shape_cast %307 : vector<1x32x128xf32> to vector<32x128xf32>
    %cst_146 = arith.constant dense<0.000000e+00> : vector<8x128xf32>
    %309 = tpu.matmul %264, %308, %cst_146 {dimension_numbers = #tpu.dot_dimension_numbers<[1], [0], [0], [1], [0, 0, 1, 1], [], []>} : vector<8x32xf32>, vector<32x128xf32>, vector<8x128xf32> -> vector<8x128xf32>
    %310 = arith.addf %306, %309 : vector<8x128xf32>
    %c0_147 = arith.constant 0 : index
    %c0_148 = arith.constant 0 : index
    %c0_149 = arith.constant 0 : index
    %311 = vector.load %arg4[%c0_147, %c0_148, %c0_149] : memref<2x1x128xf32, #tpu.memory_space<vmem>>, vector<1x1x128xf32>
    %312 = vector.shape_cast %311 : vector<1x1x128xf32> to vector<1x128xf32>
    %313 = vector.broadcast %312 : vector<1x128xf32> to vector<8x128xf32>
    %314 = arith.addf %310, %313 : vector<8x128xf32>
    %315 = vector.extract_strided_slice %314 {offsets = [0, 0], sizes = [8, 32], strides = [1, 1]} : vector<8x128xf32> to vector<8x32xf32>
    %316 = arith.negf %315 : vector<8x32xf32>
    %317 = math.exp %316 : vector<8x32xf32>
    %cst_150 = arith.constant 1.000000e+00 : f32
    %318 = vector.broadcast %cst_150 : f32 to vector<8x32xf32>
    %319 = arith.addf %318, %317 : vector<8x32xf32>
    %320 = arith.divf %318, %319 : vector<8x32xf32>
    %321 = vector.extract_strided_slice %314 {offsets = [0, 32], sizes = [8, 32], strides = [1, 1]} : vector<8x128xf32> to vector<8x32xf32>
    %322 = arith.negf %321 : vector<8x32xf32>
    %323 = math.exp %322 : vector<8x32xf32>
    %cst_151 = arith.constant 1.000000e+00 : f32
    %324 = vector.broadcast %cst_151 : f32 to vector<8x32xf32>
    %325 = arith.addf %324, %323 : vector<8x32xf32>
    %326 = arith.divf %324, %325 : vector<8x32xf32>
    %327 = vector.extract_strided_slice %314 {offsets = [0, 64], sizes = [8, 32], strides = [1, 1]} : vector<8x128xf32> to vector<8x32xf32>
    %328 = vector.extract_strided_slice %314 {offsets = [0, 96], sizes = [8, 32], strides = [1, 1]} : vector<8x128xf32> to vector<8x32xf32>
    %329 = arith.mulf %320, %328 : vector<8x32xf32>
    %330 = arith.addf %327, %329 : vector<8x32xf32>
    %331 = math.tanh %330 : vector<8x32xf32>
    %cst_152 = arith.constant 1.000000e+00 : f32
    %332 = vector.broadcast %cst_152 : f32 to vector<8x32xf32>
    %333 = arith.subf %332, %326 : vector<8x32xf32>
    %334 = arith.mulf %333, %331 : vector<8x32xf32>
    %335 = arith.mulf %326, %264 : vector<8x32xf32>
    %336 = arith.addf %334, %335 : vector<8x32xf32>
    %c1_153 = arith.constant 1 : index
    %c0_154 = arith.constant 0 : index
    %c0_155 = arith.constant 0 : index
    %337 = vector.load %arg2[%c1_153, %c0_154, %c0_155] : memref<2x32x128xf32, #tpu.memory_space<vmem>>, vector<1x32x128xf32>
    %338 = vector.shape_cast %337 : vector<1x32x128xf32> to vector<32x128xf32>
    %cst_156 = arith.constant dense<0.000000e+00> : vector<8x128xf32>
    %339 = tpu.matmul %336, %338, %cst_156 {dimension_numbers = #tpu.dot_dimension_numbers<[1], [0], [0], [1], [0, 0, 1, 1], [], []>} : vector<8x32xf32>, vector<32x128xf32>, vector<8x128xf32> -> vector<8x128xf32>
    %c1_157 = arith.constant 1 : index
    %c0_158 = arith.constant 0 : index
    %c0_159 = arith.constant 0 : index
    %340 = vector.load %arg3[%c1_157, %c0_158, %c0_159] : memref<2x32x128xf32, #tpu.memory_space<vmem>>, vector<1x32x128xf32>
    %341 = vector.shape_cast %340 : vector<1x32x128xf32> to vector<32x128xf32>
    %cst_160 = arith.constant dense<0.000000e+00> : vector<8x128xf32>
    %342 = tpu.matmul %297, %341, %cst_160 {dimension_numbers = #tpu.dot_dimension_numbers<[1], [0], [0], [1], [0, 0, 1, 1], [], []>} : vector<8x32xf32>, vector<32x128xf32>, vector<8x128xf32> -> vector<8x128xf32>
    %343 = arith.addf %339, %342 : vector<8x128xf32>
    %c1_161 = arith.constant 1 : index
    %c0_162 = arith.constant 0 : index
    %c0_163 = arith.constant 0 : index
    %344 = vector.load %arg4[%c1_161, %c0_162, %c0_163] : memref<2x1x128xf32, #tpu.memory_space<vmem>>, vector<1x1x128xf32>
    %345 = vector.shape_cast %344 : vector<1x1x128xf32> to vector<1x128xf32>
    %346 = vector.broadcast %345 : vector<1x128xf32> to vector<8x128xf32>
    %347 = arith.addf %343, %346 : vector<8x128xf32>
    %348 = vector.extract_strided_slice %347 {offsets = [0, 0], sizes = [8, 32], strides = [1, 1]} : vector<8x128xf32> to vector<8x32xf32>
    %349 = arith.negf %348 : vector<8x32xf32>
    %350 = math.exp %349 : vector<8x32xf32>
    %cst_164 = arith.constant 1.000000e+00 : f32
    %351 = vector.broadcast %cst_164 : f32 to vector<8x32xf32>
    %352 = arith.addf %351, %350 : vector<8x32xf32>
    %353 = arith.divf %351, %352 : vector<8x32xf32>
    %354 = vector.extract_strided_slice %347 {offsets = [0, 32], sizes = [8, 32], strides = [1, 1]} : vector<8x128xf32> to vector<8x32xf32>
    %355 = arith.negf %354 : vector<8x32xf32>
    %356 = math.exp %355 : vector<8x32xf32>
    %cst_165 = arith.constant 1.000000e+00 : f32
    %357 = vector.broadcast %cst_165 : f32 to vector<8x32xf32>
    %358 = arith.addf %357, %356 : vector<8x32xf32>
    %359 = arith.divf %357, %358 : vector<8x32xf32>
    %360 = vector.extract_strided_slice %347 {offsets = [0, 64], sizes = [8, 32], strides = [1, 1]} : vector<8x128xf32> to vector<8x32xf32>
    %361 = vector.extract_strided_slice %347 {offsets = [0, 96], sizes = [8, 32], strides = [1, 1]} : vector<8x128xf32> to vector<8x32xf32>
    %362 = arith.mulf %353, %361 : vector<8x32xf32>
    %363 = arith.addf %360, %362 : vector<8x32xf32>
    %364 = math.tanh %363 : vector<8x32xf32>
    %cst_166 = arith.constant 1.000000e+00 : f32
    %365 = vector.broadcast %cst_166 : f32 to vector<8x32xf32>
    %366 = arith.subf %365, %359 : vector<8x32xf32>
    %367 = arith.mulf %366, %364 : vector<8x32xf32>
    %368 = arith.mulf %359, %297 : vector<8x32xf32>
    %369 = arith.addf %367, %368 : vector<8x32xf32>
    %c8_i32_167 = arith.constant 8 : i32
    %370 = arith.muli %c4_i32, %c8_i32_167 : i32
    %371 = arith.index_cast %370 : i32 to index
    %c0_168 = arith.constant 0 : index
    %372 = vector.load %arg11[%371, %c0_168] : memref<64x32xf32, #tpu.memory_space<vmem>>, vector<8x32xf32>
    tpu.vector_store %arg11[%371, %c0_168], %369 {strides = array<i32>} : memref<64x32xf32, #tpu.memory_space<vmem>>, vector<8x32xf32>,
    %c5_i32 = arith.constant 5 : i32
    %c8_i32_169 = arith.constant 8 : i32
    %373 = arith.muli %c5_i32, %c8_i32_169 : i32
    %374 = arith.index_cast %373 : i32 to index
    %c0_170 = arith.constant 0 : index
    %375 = vector.load %arg10[%374, %c0_170] : memref<64x32xf32, #tpu.memory_space<vmem>>, vector<8x32xf32>
    %c0_171 = arith.constant 0 : index
    %c0_172 = arith.constant 0 : index
    %c0_173 = arith.constant 0 : index
    %376 = vector.load %arg2[%c0_171, %c0_172, %c0_173] : memref<2x32x128xf32, #tpu.memory_space<vmem>>, vector<1x32x128xf32>
    %377 = vector.shape_cast %376 : vector<1x32x128xf32> to vector<32x128xf32>
    %cst_174 = arith.constant dense<0.000000e+00> : vector<8x128xf32>
    %378 = tpu.matmul %375, %377, %cst_174 {dimension_numbers = #tpu.dot_dimension_numbers<[1], [0], [0], [1], [0, 0, 1, 1], [], []>} : vector<8x32xf32>, vector<32x128xf32>, vector<8x128xf32> -> vector<8x128xf32>
    %c0_175 = arith.constant 0 : index
    %c0_176 = arith.constant 0 : index
    %c0_177 = arith.constant 0 : index
    %379 = vector.load %arg3[%c0_175, %c0_176, %c0_177] : memref<2x32x128xf32, #tpu.memory_space<vmem>>, vector<1x32x128xf32>
    %380 = vector.shape_cast %379 : vector<1x32x128xf32> to vector<32x128xf32>
    %cst_178 = arith.constant dense<0.000000e+00> : vector<8x128xf32>
    %381 = tpu.matmul %336, %380, %cst_178 {dimension_numbers = #tpu.dot_dimension_numbers<[1], [0], [0], [1], [0, 0, 1, 1], [], []>} : vector<8x32xf32>, vector<32x128xf32>, vector<8x128xf32> -> vector<8x128xf32>
    %382 = arith.addf %378, %381 : vector<8x128xf32>
    %c0_179 = arith.constant 0 : index
    %c0_180 = arith.constant 0 : index
    %c0_181 = arith.constant 0 : index
    %383 = vector.load %arg4[%c0_179, %c0_180, %c0_181] : memref<2x1x128xf32, #tpu.memory_space<vmem>>, vector<1x1x128xf32>
    %384 = vector.shape_cast %383 : vector<1x1x128xf32> to vector<1x128xf32>
    %385 = vector.broadcast %384 : vector<1x128xf32> to vector<8x128xf32>
    %386 = arith.addf %382, %385 : vector<8x128xf32>
    %387 = vector.extract_strided_slice %386 {offsets = [0, 0], sizes = [8, 32], strides = [1, 1]} : vector<8x128xf32> to vector<8x32xf32>
    %388 = arith.negf %387 : vector<8x32xf32>
    %389 = math.exp %388 : vector<8x32xf32>
    %cst_182 = arith.constant 1.000000e+00 : f32
    %390 = vector.broadcast %cst_182 : f32 to vector<8x32xf32>
    %391 = arith.addf %390, %389 : vector<8x32xf32>
    %392 = arith.divf %390, %391 : vector<8x32xf32>
    %393 = vector.extract_strided_slice %386 {offsets = [0, 32], sizes = [8, 32], strides = [1, 1]} : vector<8x128xf32> to vector<8x32xf32>
    %394 = arith.negf %393 : vector<8x32xf32>
    %395 = math.exp %394 : vector<8x32xf32>
    %cst_183 = arith.constant 1.000000e+00 : f32
    %396 = vector.broadcast %cst_183 : f32 to vector<8x32xf32>
    %397 = arith.addf %396, %395 : vector<8x32xf32>
    %398 = arith.divf %396, %397 : vector<8x32xf32>
    %399 = vector.extract_strided_slice %386 {offsets = [0, 64], sizes = [8, 32], strides = [1, 1]} : vector<8x128xf32> to vector<8x32xf32>
    %400 = vector.extract_strided_slice %386 {offsets = [0, 96], sizes = [8, 32], strides = [1, 1]} : vector<8x128xf32> to vector<8x32xf32>
    %401 = arith.mulf %392, %400 : vector<8x32xf32>
    %402 = arith.addf %399, %401 : vector<8x32xf32>
    %403 = math.tanh %402 : vector<8x32xf32>
    %cst_184 = arith.constant 1.000000e+00 : f32
    %404 = vector.broadcast %cst_184 : f32 to vector<8x32xf32>
    %405 = arith.subf %404, %398 : vector<8x32xf32>
    %406 = arith.mulf %405, %403 : vector<8x32xf32>
    %407 = arith.mulf %398, %336 : vector<8x32xf32>
    %408 = arith.addf %406, %407 : vector<8x32xf32>
    %c1_185 = arith.constant 1 : index
    %c0_186 = arith.constant 0 : index
    %c0_187 = arith.constant 0 : index
    %409 = vector.load %arg2[%c1_185, %c0_186, %c0_187] : memref<2x32x128xf32, #tpu.memory_space<vmem>>, vector<1x32x128xf32>
    %410 = vector.shape_cast %409 : vector<1x32x128xf32> to vector<32x128xf32>
    %cst_188 = arith.constant dense<0.000000e+00> : vector<8x128xf32>
    %411 = tpu.matmul %408, %410, %cst_188 {dimension_numbers = #tpu.dot_dimension_numbers<[1], [0], [0], [1], [0, 0, 1, 1], [], []>} : vector<8x32xf32>, vector<32x128xf32>, vector<8x128xf32> -> vector<8x128xf32>
    %c1_189 = arith.constant 1 : index
    %c0_190 = arith.constant 0 : index
    %c0_191 = arith.constant 0 : index
    %412 = vector.load %arg3[%c1_189, %c0_190, %c0_191] : memref<2x32x128xf32, #tpu.memory_space<vmem>>, vector<1x32x128xf32>
    %413 = vector.shape_cast %412 : vector<1x32x128xf32> to vector<32x128xf32>
    %cst_192 = arith.constant dense<0.000000e+00> : vector<8x128xf32>
    %414 = tpu.matmul %369, %413, %cst_192 {dimension_numbers = #tpu.dot_dimension_numbers<[1], [0], [0], [1], [0, 0, 1, 1], [], []>} : vector<8x32xf32>, vector<32x128xf32>, vector<8x128xf32> -> vector<8x128xf32>
    %415 = arith.addf %411, %414 : vector<8x128xf32>
    %c1_193 = arith.constant 1 : index
    %c0_194 = arith.constant 0 : index
    %c0_195 = arith.constant 0 : index
    %416 = vector.load %arg4[%c1_193, %c0_194, %c0_195] : memref<2x1x128xf32, #tpu.memory_space<vmem>>, vector<1x1x128xf32>
    %417 = vector.shape_cast %416 : vector<1x1x128xf32> to vector<1x128xf32>
    %418 = vector.broadcast %417 : vector<1x128xf32> to vector<8x128xf32>
    %419 = arith.addf %415, %418 : vector<8x128xf32>
    %420 = vector.extract_strided_slice %419 {offsets = [0, 0], sizes = [8, 32], strides = [1, 1]} : vector<8x128xf32> to vector<8x32xf32>
    %421 = arith.negf %420 : vector<8x32xf32>
    %422 = math.exp %421 : vector<8x32xf32>
    %cst_196 = arith.constant 1.000000e+00 : f32
    %423 = vector.broadcast %cst_196 : f32 to vector<8x32xf32>
    %424 = arith.addf %423, %422 : vector<8x32xf32>
    %425 = arith.divf %423, %424 : vector<8x32xf32>
    %426 = vector.extract_strided_slice %419 {offsets = [0, 32], sizes = [8, 32], strides = [1, 1]} : vector<8x128xf32> to vector<8x32xf32>
    %427 = arith.negf %426 : vector<8x32xf32>
    %428 = math.exp %427 : vector<8x32xf32>
    %cst_197 = arith.constant 1.000000e+00 : f32
    %429 = vector.broadcast %cst_197 : f32 to vector<8x32xf32>
    %430 = arith.addf %429, %428 : vector<8x32xf32>
    %431 = arith.divf %429, %430 : vector<8x32xf32>
    %432 = vector.extract_strided_slice %419 {offsets = [0, 64], sizes = [8, 32], strides = [1, 1]} : vector<8x128xf32> to vector<8x32xf32>
    %433 = vector.extract_strided_slice %419 {offsets = [0, 96], sizes = [8, 32], strides = [1, 1]} : vector<8x128xf32> to vector<8x32xf32>
    %434 = arith.mulf %425, %433 : vector<8x32xf32>
    %435 = arith.addf %432, %434 : vector<8x32xf32>
    %436 = math.tanh %435 : vector<8x32xf32>
    %cst_198 = arith.constant 1.000000e+00 : f32
    %437 = vector.broadcast %cst_198 : f32 to vector<8x32xf32>
    %438 = arith.subf %437, %431 : vector<8x32xf32>
    %439 = arith.mulf %438, %436 : vector<8x32xf32>
    %440 = arith.mulf %431, %369 : vector<8x32xf32>
    %441 = arith.addf %439, %440 : vector<8x32xf32>
    %c8_i32_199 = arith.constant 8 : i32
    %442 = arith.muli %c5_i32, %c8_i32_199 : i32
    %443 = arith.index_cast %442 : i32 to index
    %c0_200 = arith.constant 0 : index
    %444 = vector.load %arg11[%443, %c0_200] : memref<64x32xf32, #tpu.memory_space<vmem>>, vector<8x32xf32>
    tpu.vector_store %arg11[%443, %c0_200], %441 {strides = array<i32>} : memref<64x32xf32, #tpu.memory_space<vmem>>, vector<8x32xf32>,
    %c6_i32 = arith.constant 6 : i32
    %c8_i32_201 = arith.constant 8 : i32
    %445 = arith.muli %c6_i32, %c8_i32_201 : i32
    %446 = arith.index_cast %445 : i32 to index
    %c0_202 = arith.constant 0 : index
    %447 = vector.load %arg10[%446, %c0_202] : memref<64x32xf32, #tpu.memory_space<vmem>>, vector<8x32xf32>
    %c0_203 = arith.constant 0 : index
    %c0_204 = arith.constant 0 : index
    %c0_205 = arith.constant 0 : index
    %448 = vector.load %arg2[%c0_203, %c0_204, %c0_205] : memref<2x32x128xf32, #tpu.memory_space<vmem>>, vector<1x32x128xf32>
    %449 = vector.shape_cast %448 : vector<1x32x128xf32> to vector<32x128xf32>
    %cst_206 = arith.constant dense<0.000000e+00> : vector<8x128xf32>
    %450 = tpu.matmul %447, %449, %cst_206 {dimension_numbers = #tpu.dot_dimension_numbers<[1], [0], [0], [1], [0, 0, 1, 1], [], []>} : vector<8x32xf32>, vector<32x128xf32>, vector<8x128xf32> -> vector<8x128xf32>
    %c0_207 = arith.constant 0 : index
    %c0_208 = arith.constant 0 : index
    %c0_209 = arith.constant 0 : index
    %451 = vector.load %arg3[%c0_207, %c0_208, %c0_209] : memref<2x32x128xf32, #tpu.memory_space<vmem>>, vector<1x32x128xf32>
    %452 = vector.shape_cast %451 : vector<1x32x128xf32> to vector<32x128xf32>
    %cst_210 = arith.constant dense<0.000000e+00> : vector<8x128xf32>
    %453 = tpu.matmul %408, %452, %cst_210 {dimension_numbers = #tpu.dot_dimension_numbers<[1], [0], [0], [1], [0, 0, 1, 1], [], []>} : vector<8x32xf32>, vector<32x128xf32>, vector<8x128xf32> -> vector<8x128xf32>
    %454 = arith.addf %450, %453 : vector<8x128xf32>
    %c0_211 = arith.constant 0 : index
    %c0_212 = arith.constant 0 : index
    %c0_213 = arith.constant 0 : index
    %455 = vector.load %arg4[%c0_211, %c0_212, %c0_213] : memref<2x1x128xf32, #tpu.memory_space<vmem>>, vector<1x1x128xf32>
    %456 = vector.shape_cast %455 : vector<1x1x128xf32> to vector<1x128xf32>
    %457 = vector.broadcast %456 : vector<1x128xf32> to vector<8x128xf32>
    %458 = arith.addf %454, %457 : vector<8x128xf32>
    %459 = vector.extract_strided_slice %458 {offsets = [0, 0], sizes = [8, 32], strides = [1, 1]} : vector<8x128xf32> to vector<8x32xf32>
    %460 = arith.negf %459 : vector<8x32xf32>
    %461 = math.exp %460 : vector<8x32xf32>
    %cst_214 = arith.constant 1.000000e+00 : f32
    %462 = vector.broadcast %cst_214 : f32 to vector<8x32xf32>
    %463 = arith.addf %462, %461 : vector<8x32xf32>
    %464 = arith.divf %462, %463 : vector<8x32xf32>
    %465 = vector.extract_strided_slice %458 {offsets = [0, 32], sizes = [8, 32], strides = [1, 1]} : vector<8x128xf32> to vector<8x32xf32>
    %466 = arith.negf %465 : vector<8x32xf32>
    %467 = math.exp %466 : vector<8x32xf32>
    %cst_215 = arith.constant 1.000000e+00 : f32
    %468 = vector.broadcast %cst_215 : f32 to vector<8x32xf32>
    %469 = arith.addf %468, %467 : vector<8x32xf32>
    %470 = arith.divf %468, %469 : vector<8x32xf32>
    %471 = vector.extract_strided_slice %458 {offsets = [0, 64], sizes = [8, 32], strides = [1, 1]} : vector<8x128xf32> to vector<8x32xf32>
    %472 = vector.extract_strided_slice %458 {offsets = [0, 96], sizes = [8, 32], strides = [1, 1]} : vector<8x128xf32> to vector<8x32xf32>
    %473 = arith.mulf %464, %472 : vector<8x32xf32>
    %474 = arith.addf %471, %473 : vector<8x32xf32>
    %475 = math.tanh %474 : vector<8x32xf32>
    %cst_216 = arith.constant 1.000000e+00 : f32
    %476 = vector.broadcast %cst_216 : f32 to vector<8x32xf32>
    %477 = arith.subf %476, %470 : vector<8x32xf32>
    %478 = arith.mulf %477, %475 : vector<8x32xf32>
    %479 = arith.mulf %470, %408 : vector<8x32xf32>
    %480 = arith.addf %478, %479 : vector<8x32xf32>
    %c1_217 = arith.constant 1 : index
    %c0_218 = arith.constant 0 : index
    %c0_219 = arith.constant 0 : index
    %481 = vector.load %arg2[%c1_217, %c0_218, %c0_219] : memref<2x32x128xf32, #tpu.memory_space<vmem>>, vector<1x32x128xf32>
    %482 = vector.shape_cast %481 : vector<1x32x128xf32> to vector<32x128xf32>
    %cst_220 = arith.constant dense<0.000000e+00> : vector<8x128xf32>
    %483 = tpu.matmul %480, %482, %cst_220 {dimension_numbers = #tpu.dot_dimension_numbers<[1], [0], [0], [1], [0, 0, 1, 1], [], []>} : vector<8x32xf32>, vector<32x128xf32>, vector<8x128xf32> -> vector<8x128xf32>
    %c1_221 = arith.constant 1 : index
    %c0_222 = arith.constant 0 : index
    %c0_223 = arith.constant 0 : index
    %484 = vector.load %arg3[%c1_221, %c0_222, %c0_223] : memref<2x32x128xf32, #tpu.memory_space<vmem>>, vector<1x32x128xf32>
    %485 = vector.shape_cast %484 : vector<1x32x128xf32> to vector<32x128xf32>
    %cst_224 = arith.constant dense<0.000000e+00> : vector<8x128xf32>
    %486 = tpu.matmul %441, %485, %cst_224 {dimension_numbers = #tpu.dot_dimension_numbers<[1], [0], [0], [1], [0, 0, 1, 1], [], []>} : vector<8x32xf32>, vector<32x128xf32>, vector<8x128xf32> -> vector<8x128xf32>
    %487 = arith.addf %483, %486 : vector<8x128xf32>
    %c1_225 = arith.constant 1 : index
    %c0_226 = arith.constant 0 : index
    %c0_227 = arith.constant 0 : index
    %488 = vector.load %arg4[%c1_225, %c0_226, %c0_227] : memref<2x1x128xf32, #tpu.memory_space<vmem>>, vector<1x1x128xf32>
    %489 = vector.shape_cast %488 : vector<1x1x128xf32> to vector<1x128xf32>
    %490 = vector.broadcast %489 : vector<1x128xf32> to vector<8x128xf32>
    %491 = arith.addf %487, %490 : vector<8x128xf32>
    %492 = vector.extract_strided_slice %491 {offsets = [0, 0], sizes = [8, 32], strides = [1, 1]} : vector<8x128xf32> to vector<8x32xf32>
    %493 = arith.negf %492 : vector<8x32xf32>
    %494 = math.exp %493 : vector<8x32xf32>
    %cst_228 = arith.constant 1.000000e+00 : f32
    %495 = vector.broadcast %cst_228 : f32 to vector<8x32xf32>
    %496 = arith.addf %495, %494 : vector<8x32xf32>
    %497 = arith.divf %495, %496 : vector<8x32xf32>
    %498 = vector.extract_strided_slice %491 {offsets = [0, 32], sizes = [8, 32], strides = [1, 1]} : vector<8x128xf32> to vector<8x32xf32>
    %499 = arith.negf %498 : vector<8x32xf32>
    %500 = math.exp %499 : vector<8x32xf32>
    %cst_229 = arith.constant 1.000000e+00 : f32
    %501 = vector.broadcast %cst_229 : f32 to vector<8x32xf32>
    %502 = arith.addf %501, %500 : vector<8x32xf32>
    %503 = arith.divf %501, %502 : vector<8x32xf32>
    %504 = vector.extract_strided_slice %491 {offsets = [0, 64], sizes = [8, 32], strides = [1, 1]} : vector<8x128xf32> to vector<8x32xf32>
    %505 = vector.extract_strided_slice %491 {offsets = [0, 96], sizes = [8, 32], strides = [1, 1]} : vector<8x128xf32> to vector<8x32xf32>
    %506 = arith.mulf %497, %505 : vector<8x32xf32>
    %507 = arith.addf %504, %506 : vector<8x32xf32>
    %508 = math.tanh %507 : vector<8x32xf32>
    %cst_230 = arith.constant 1.000000e+00 : f32
    %509 = vector.broadcast %cst_230 : f32 to vector<8x32xf32>
    %510 = arith.subf %509, %503 : vector<8x32xf32>
    %511 = arith.mulf %510, %508 : vector<8x32xf32>
    %512 = arith.mulf %503, %441 : vector<8x32xf32>
    %513 = arith.addf %511, %512 : vector<8x32xf32>
    %c8_i32_231 = arith.constant 8 : i32
    %514 = arith.muli %c6_i32, %c8_i32_231 : i32
    %515 = arith.index_cast %514 : i32 to index
    %c0_232 = arith.constant 0 : index
    %516 = vector.load %arg11[%515, %c0_232] : memref<64x32xf32, #tpu.memory_space<vmem>>, vector<8x32xf32>
    tpu.vector_store %arg11[%515, %c0_232], %513 {strides = array<i32>} : memref<64x32xf32, #tpu.memory_space<vmem>>, vector<8x32xf32>,
    %c7_i32 = arith.constant 7 : i32
    %c8_i32_233 = arith.constant 8 : i32
    %517 = arith.muli %c7_i32, %c8_i32_233 : i32
    %518 = arith.index_cast %517 : i32 to index
    %c0_234 = arith.constant 0 : index
    %519 = vector.load %arg10[%518, %c0_234] : memref<64x32xf32, #tpu.memory_space<vmem>>, vector<8x32xf32>
    %c0_235 = arith.constant 0 : index
    %c0_236 = arith.constant 0 : index
    %c0_237 = arith.constant 0 : index
    %520 = vector.load %arg2[%c0_235, %c0_236, %c0_237] : memref<2x32x128xf32, #tpu.memory_space<vmem>>, vector<1x32x128xf32>
    %521 = vector.shape_cast %520 : vector<1x32x128xf32> to vector<32x128xf32>
    %cst_238 = arith.constant dense<0.000000e+00> : vector<8x128xf32>
    %522 = tpu.matmul %519, %521, %cst_238 {dimension_numbers = #tpu.dot_dimension_numbers<[1], [0], [0], [1], [0, 0, 1, 1], [], []>} : vector<8x32xf32>, vector<32x128xf32>, vector<8x128xf32> -> vector<8x128xf32>
    %c0_239 = arith.constant 0 : index
    %c0_240 = arith.constant 0 : index
    %c0_241 = arith.constant 0 : index
    %523 = vector.load %arg3[%c0_239, %c0_240, %c0_241] : memref<2x32x128xf32, #tpu.memory_space<vmem>>, vector<1x32x128xf32>
    %524 = vector.shape_cast %523 : vector<1x32x128xf32> to vector<32x128xf32>
    %cst_242 = arith.constant dense<0.000000e+00> : vector<8x128xf32>
    %525 = tpu.matmul %480, %524, %cst_242 {dimension_numbers = #tpu.dot_dimension_numbers<[1], [0], [0], [1], [0, 0, 1, 1], [], []>} : vector<8x32xf32>, vector<32x128xf32>, vector<8x128xf32> -> vector<8x128xf32>
    %526 = arith.addf %522, %525 : vector<8x128xf32>
    %c0_243 = arith.constant 0 : index
    %c0_244 = arith.constant 0 : index
    %c0_245 = arith.constant 0 : index
    %527 = vector.load %arg4[%c0_243, %c0_244, %c0_245] : memref<2x1x128xf32, #tpu.memory_space<vmem>>, vector<1x1x128xf32>
    %528 = vector.shape_cast %527 : vector<1x1x128xf32> to vector<1x128xf32>
    %529 = vector.broadcast %528 : vector<1x128xf32> to vector<8x128xf32>
    %530 = arith.addf %526, %529 : vector<8x128xf32>
    %531 = vector.extract_strided_slice %530 {offsets = [0, 0], sizes = [8, 32], strides = [1, 1]} : vector<8x128xf32> to vector<8x32xf32>
    %532 = arith.negf %531 : vector<8x32xf32>
    %533 = math.exp %532 : vector<8x32xf32>
    %cst_246 = arith.constant 1.000000e+00 : f32
    %534 = vector.broadcast %cst_246 : f32 to vector<8x32xf32>
    %535 = arith.addf %534, %533 : vector<8x32xf32>
    %536 = arith.divf %534, %535 : vector<8x32xf32>
    %537 = vector.extract_strided_slice %530 {offsets = [0, 32], sizes = [8, 32], strides = [1, 1]} : vector<8x128xf32> to vector<8x32xf32>
    %538 = arith.negf %537 : vector<8x32xf32>
    %539 = math.exp %538 : vector<8x32xf32>
    %cst_247 = arith.constant 1.000000e+00 : f32
    %540 = vector.broadcast %cst_247 : f32 to vector<8x32xf32>
    %541 = arith.addf %540, %539 : vector<8x32xf32>
    %542 = arith.divf %540, %541 : vector<8x32xf32>
    %543 = vector.extract_strided_slice %530 {offsets = [0, 64], sizes = [8, 32], strides = [1, 1]} : vector<8x128xf32> to vector<8x32xf32>
    %544 = vector.extract_strided_slice %530 {offsets = [0, 96], sizes = [8, 32], strides = [1, 1]} : vector<8x128xf32> to vector<8x32xf32>
    %545 = arith.mulf %536, %544 : vector<8x32xf32>
    %546 = arith.addf %543, %545 : vector<8x32xf32>
    %547 = math.tanh %546 : vector<8x32xf32>
    %cst_248 = arith.constant 1.000000e+00 : f32
    %548 = vector.broadcast %cst_248 : f32 to vector<8x32xf32>
    %549 = arith.subf %548, %542 : vector<8x32xf32>
    %550 = arith.mulf %549, %547 : vector<8x32xf32>
    %551 = arith.mulf %542, %480 : vector<8x32xf32>
    %552 = arith.addf %550, %551 : vector<8x32xf32>
    %c1_249 = arith.constant 1 : index
    %c0_250 = arith.constant 0 : index
    %c0_251 = arith.constant 0 : index
    %553 = vector.load %arg2[%c1_249, %c0_250, %c0_251] : memref<2x32x128xf32, #tpu.memory_space<vmem>>, vector<1x32x128xf32>
    %554 = vector.shape_cast %553 : vector<1x32x128xf32> to vector<32x128xf32>
    %cst_252 = arith.constant dense<0.000000e+00> : vector<8x128xf32>
    %555 = tpu.matmul %552, %554, %cst_252 {dimension_numbers = #tpu.dot_dimension_numbers<[1], [0], [0], [1], [0, 0, 1, 1], [], []>} : vector<8x32xf32>, vector<32x128xf32>, vector<8x128xf32> -> vector<8x128xf32>
    %c1_253 = arith.constant 1 : index
    %c0_254 = arith.constant 0 : index
    %c0_255 = arith.constant 0 : index
    %556 = vector.load %arg3[%c1_253, %c0_254, %c0_255] : memref<2x32x128xf32, #tpu.memory_space<vmem>>, vector<1x32x128xf32>
    %557 = vector.shape_cast %556 : vector<1x32x128xf32> to vector<32x128xf32>
    %cst_256 = arith.constant dense<0.000000e+00> : vector<8x128xf32>
    %558 = tpu.matmul %513, %557, %cst_256 {dimension_numbers = #tpu.dot_dimension_numbers<[1], [0], [0], [1], [0, 0, 1, 1], [], []>} : vector<8x32xf32>, vector<32x128xf32>, vector<8x128xf32> -> vector<8x128xf32>
    %559 = arith.addf %555, %558 : vector<8x128xf32>
    %c1_257 = arith.constant 1 : index
    %c0_258 = arith.constant 0 : index
    %c0_259 = arith.constant 0 : index
    %560 = vector.load %arg4[%c1_257, %c0_258, %c0_259] : memref<2x1x128xf32, #tpu.memory_space<vmem>>, vector<1x1x128xf32>
    %561 = vector.shape_cast %560 : vector<1x1x128xf32> to vector<1x128xf32>
    %562 = vector.broadcast %561 : vector<1x128xf32> to vector<8x128xf32>
    %563 = arith.addf %559, %562 : vector<8x128xf32>
    %564 = vector.extract_strided_slice %563 {offsets = [0, 0], sizes = [8, 32], strides = [1, 1]} : vector<8x128xf32> to vector<8x32xf32>
    %565 = arith.negf %564 : vector<8x32xf32>
    %566 = math.exp %565 : vector<8x32xf32>
    %cst_260 = arith.constant 1.000000e+00 : f32
    %567 = vector.broadcast %cst_260 : f32 to vector<8x32xf32>
    %568 = arith.addf %567, %566 : vector<8x32xf32>
    %569 = arith.divf %567, %568 : vector<8x32xf32>
    %570 = vector.extract_strided_slice %563 {offsets = [0, 32], sizes = [8, 32], strides = [1, 1]} : vector<8x128xf32> to vector<8x32xf32>
    %571 = arith.negf %570 : vector<8x32xf32>
    %572 = math.exp %571 : vector<8x32xf32>
    %cst_261 = arith.constant 1.000000e+00 : f32
    %573 = vector.broadcast %cst_261 : f32 to vector<8x32xf32>
    %574 = arith.addf %573, %572 : vector<8x32xf32>
    %575 = arith.divf %573, %574 : vector<8x32xf32>
    %576 = vector.extract_strided_slice %563 {offsets = [0, 64], sizes = [8, 32], strides = [1, 1]} : vector<8x128xf32> to vector<8x32xf32>
    %577 = vector.extract_strided_slice %563 {offsets = [0, 96], sizes = [8, 32], strides = [1, 1]} : vector<8x128xf32> to vector<8x32xf32>
    %578 = arith.mulf %569, %577 : vector<8x32xf32>
    %579 = arith.addf %576, %578 : vector<8x32xf32>
    %580 = math.tanh %579 : vector<8x32xf32>
    %cst_262 = arith.constant 1.000000e+00 : f32
    %581 = vector.broadcast %cst_262 : f32 to vector<8x32xf32>
    %582 = arith.subf %581, %575 : vector<8x32xf32>
    %583 = arith.mulf %582, %580 : vector<8x32xf32>
    %584 = arith.mulf %575, %513 : vector<8x32xf32>
    %585 = arith.addf %583, %584 : vector<8x32xf32>
    %c8_i32_263 = arith.constant 8 : i32
    %586 = arith.muli %c7_i32, %c8_i32_263 : i32
    %587 = arith.index_cast %586 : i32 to index
    %c0_264 = arith.constant 0 : index
    %588 = vector.load %arg11[%587, %c0_264] : memref<64x32xf32, #tpu.memory_space<vmem>>, vector<8x32xf32>
    tpu.vector_store %arg11[%587, %c0_264], %585 {strides = array<i32>} : memref<64x32xf32, #tpu.memory_space<vmem>>, vector<8x32xf32>,
    %c8_i32_265 = arith.constant 8 : i32
    %c0_266 = arith.constant 0 : index
    %c0_267 = arith.constant 0 : index
    %c0_268 = arith.constant 0 : index
    %589 = vector.load %arg9[%c0_266, %c0_267, %c0_268] : memref<2x8x32xf32, #tpu.memory_space<vmem>>, vector<1x8x32xf32>
    %590 = vector.shape_cast %589 : vector<1x8x32xf32> to vector<8x32xf32>
    %591 = vector.shape_cast %552 : vector<8x32xf32> to vector<1x8x32xf32>
    tpu.vector_store %arg9[%c0_266, %c0_267, %c0_268], %591 {strides = array<i32>} : memref<2x8x32xf32, #tpu.memory_space<vmem>>, vector<1x8x32xf32>,
    %c1_269 = arith.constant 1 : index
    %c0_270 = arith.constant 0 : index
    %c0_271 = arith.constant 0 : index
    %592 = vector.load %arg9[%c1_269, %c0_270, %c0_271] : memref<2x8x32xf32, #tpu.memory_space<vmem>>, vector<1x8x32xf32>
    %593 = vector.shape_cast %592 : vector<1x8x32xf32> to vector<8x32xf32>
    %594 = vector.shape_cast %585 : vector<8x32xf32> to vector<1x8x32xf32>
    tpu.vector_store %arg9[%c1_269, %c0_270, %c0_271], %594 {strides = array<i32>} : memref<2x8x32xf32, #tpu.memory_space<vmem>>, vector<1x8x32xf32>,
    %c0_272 = arith.constant 0 : index
    %c0_273 = arith.constant 0 : index
    %595 = vector.load %arg11[%c0_272, %c0_273] : memref<64x32xf32, #tpu.memory_space<vmem>>, vector<64x32xf32>
    %c0_274 = arith.constant 0 : index
    %c0_275 = arith.constant 0 : index
    %596 = vector.load %arg5[%c0_274, %c0_275] : memref<32x128xf32, #tpu.memory_space<vmem>>, vector<32x128xf32>
    %cst_276 = arith.constant dense<0.000000e+00> : vector<64x128xf32>
    %597 = tpu.matmul %595, %596, %cst_276 {dimension_numbers = #tpu.dot_dimension_numbers<[1], [0], [0], [1], [0, 0, 1, 1], [], []>} : vector<64x32xf32>, vector<32x128xf32>, vector<64x128xf32> -> vector<64x128xf32>
    %c0_277 = arith.constant 0 : index
    %c0_278 = arith.constant 0 : index
    %598 = vector.load %arg6[%c0_277, %c0_278] : memref<1x128xf32, #tpu.memory_space<vmem>>, vector<1x128xf32>
    %599 = vector.broadcast %598 : vector<1x128xf32> to vector<64x128xf32>
    %600 = arith.addf %597, %599 : vector<64x128xf32>
    %cst_279 = arith.constant dense<0xFF800000> : vector<64xf32>
    %601 = vector.multi_reduction <maximumf>, %600, %cst_279 [1] : vector<64x128xf32> to vector<64xf32>
    %602 = vector.shape_cast %601 : vector<64xf32> to vector<64x1xf32>
    %603 = vector.broadcast %602 : vector<64x1xf32> to vector<64x128xf32>
    %604 = arith.subf %600, %603 : vector<64x128xf32>
    %605 = math.exp %604 : vector<64x128xf32>
    %cst_280 = arith.constant dense<0.000000e+00> : vector<64xf32>
    %606 = vector.multi_reduction <add>, %605, %cst_280 [1] : vector<64x128xf32> to vector<64xf32>
    %607 = vector.shape_cast %606 : vector<64xf32> to vector<64x1xf32>
    %608 = math.log %607 : vector<64x1xf32>
    %609 = vector.broadcast %608 : vector<64x1xf32> to vector<64x128xf32>
    %610 = arith.subf %604, %609 : vector<64x128xf32>
    %611 = vector.shape_cast %610 : vector<64x128xf32> to vector<8x8x128xf32>
    %c0_281 = arith.constant 0 : index
    %c0_282 = arith.constant 0 : index
    %c0_283 = arith.constant 0 : index
    %612 = vector.load %arg8[%c0_281, %c0_282, %c0_283] : memref<8x8x128xf32, #tpu.memory_space<vmem>>, vector<8x8x128xf32>
    tpu.vector_store %arg8[%c0_281, %c0_282, %c0_283], %611 {strides = array<i32>} : memref<8x8x128xf32, #tpu.memory_space<vmem>>, vector<8x8x128xf32>,
    return
  }
}

</mosaic_0001>

<llo_original>
// kernel: decoder_decode.1
$region0: #{decoder_decode.1}
  #allocation0 [shape = 'u32[]', space=smem, size = 0x4, offset = 0x4, fixed_abs, tag = 'smem constant byte address 0x4 - core index']
  #allocation1 [shape = 'u32[144,128]{1,0:T(1,128)}', space=vmem, size = 0x12000, scoped, tag = 'internal scratch']
  #allocation2 [shape = 'f32[64,32]{1,0:T(8,128)}', space=vmem, size = 0x8000, scoped, tag = 'scratch operand']
  #allocation3 [shape = 'f32[64,32]{1,0:T(8,128)}', space=vmem, size = 0x8000, scoped, tag = 'scratch operand']
  %s0 = inlined_call_operand.vmem [shape: s32[64,1], index: 0, kind: input, shape index: {}]
  %s1 = inlined_call_operand.vmem [shape: f32[128,32], index: 1, kind: input, shape index: {}]
  %s2 = inlined_call_operand.vmem [shape: f32[2,32,128], index: 2, kind: input, shape index: {}]
  %s3 = inlined_call_operand.vmem [shape: f32[2,32,128], index: 3, kind: input, shape index: {}]
  %s4 = inlined_call_operand.vmem [shape: f32[2,1,128], index: 4, kind: input, shape index: {}]
  %s5 = inlined_call_operand.vmem [shape: f32[32,128], index: 5, kind: input, shape index: {}]
  %s6 = inlined_call_operand.vmem [shape: f32[1,128], index: 6, kind: input, shape index: {}]
  %s7 = inlined_call_operand.hbm [shape: f32[2,8,32], index: 7, kind: input, shape index: {}, may-alias: {7,9}]
  %s8 = inlined_call_operand.hbm [shape: f32[8,8,128], index: 8, kind: output, shape index: {0}]
  %s9 = inlined_call_operand.hbm [shape: f32[2,8,32], index: 9, kind: output, shape index: {1}, may-alias: {7,9}]
  %10 = xla_tuple %s8, %s9
  %s11 = sld [smem:[#allocation0]]
  $region54: #{decoder_decode.1} parent=0
    _
  %s13 = ssub.s32 1, %s11
  %s14 = scalar_select 0, %s13, %s11
  $region1: #{decoder_decode.1} parent=0
    #allocation4 [shape = 'u8[8192]{0}', space=vmem, size = 0x2000, scoped, tag = 'input window, operand 7, single buffered']
    #allocation5 [shape = 's32[1]{0}', space=sflag, size = 0x4, scoped, tag = 'scoped memory for decoder_decode.1']
    #allocation6 [shape = 's32[1]{0}', space=sflag, size = 0x4, scoped, tag = 'scoped memory for decoder_decode.1']
    #allocation7 [shape = 'u8[32768]{0}', space=vmem, size = 0x8000, scoped, tag = 'output window, operand 0, single buffered']
    #allocation8 [shape = 'u8[8192]{0}', space=vmem, size = 0x2000, scoped, tag = 'output window, operand 1, single buffered']
    #allocation9 [shape = 's32[1]{0}', space=sflag, size = 0x4, scoped, tag = 'scoped memory for decoder_decode.1']
    %15 = vsyncpa [#allocation5], 0
    %16 = vsyncpa [#allocation6], 0
    %17 = vsyncpa [#allocation9], 0
    // Predicated region
    $region2: #{decoder_decode.1} parent=1 // pred_check
      _
    $region3: #{decoder_decode.1} parent=1 // pred_check_branch
      %19 = sbr.rel (0) target = $region5
    $region4: #{decoder_decode.1} parent=1 // pred_region
      _
    $region5: #{decoder_decode.1} parent=1 // pred_fallthru
      _
    // Predicated region
    $region6: #{decoder_decode.1} parent=1 // pred_check
      _
    $region7: #{decoder_decode.1} parent=1 // pred_check_branch
      %21 = sbr.rel (0) target = $region9
    $region8: #{decoder_decode.1} parent=1 // pred_region
      _
    $region9: #{decoder_decode.1} parent=1 // pred_fallthru
      _
    // Predicated region
    $region10: #{decoder_decode.1} parent=1 // pred_check
      _
    $region11: #{decoder_decode.1} parent=1 // pred_check_branch
      %23 = sbr.rel (0) target = $region13
    $region12: #{decoder_decode.1} parent=1 // pred_region
      _
    $region13: #{decoder_decode.1} parent=1 // pred_fallthru
      _
    // Predicated region
    $region14: #{decoder_decode.1} parent=1 // pred_check
      _
    $region15: #{decoder_decode.1} parent=1 // pred_check_branch
      %25 = sbr.rel (0) target = $region17
    $region16: #{decoder_decode.1} parent=1 // pred_region
      _
    $region17: #{decoder_decode.1} parent=1 // pred_fallthru
      _
    // Predicated region
    $region18: #{decoder_decode.1} parent=1 // pred_check
      _
    $region19: #{decoder_decode.1} parent=1 // pred_check_branch
      %27 = sbr.rel (0) target = $region21
    $region20: #{decoder_decode.1} parent=1 // pred_region
      _
    $region21: #{decoder_decode.1} parent=1 // pred_fallthru
      _
    // Predicated region
    $region22: #{decoder_decode.1} parent=1 // pred_check
      _
    $region23: #{decoder_decode.1} parent=1 // pred_check_branch
      %29 = sbr.rel (0) target = $region25
    $region24: #{decoder_decode.1} parent=1 // pred_region
      _
    $region25: #{decoder_decode.1} parent=1 // pred_fallthru
      _
    // Predicated region
    $region26: #{decoder_decode.1} parent=1 // pred_check
      _
    $region27: #{decoder_decode.1} parent=1 // pred_check_branch
      %31 = sbr.rel (0) target = $region29
    $region28: #{decoder_decode.1} parent=1 // pred_region
      _
    $region29: #{decoder_decode.1} parent=1 // pred_fallthru
      _
    // Predicated region
    $region30: #{decoder_decode.1} parent=1 // pred_check
      _
    $region31: #{decoder_decode.1} parent=1 // pred_check_branch
      %33 = sbr.rel (0) target = $region33
    $region32: #{decoder_decode.1} parent=1 // pred_region
      %s35 = ssub.s32 256, 256
      %36 = vsyncadd [#allocation5], %s35
      %s37 = sshll.u32 [#allocation4], 4
      %s38 = int_to_ptr.vmem [resolvable:$true] %s37
      %43 = dma.hbm_to_vmem [thread:$0]  %s7, 256, %s38, [#allocation5], 128, 128, 8
    $region33: #{decoder_decode.1} parent=1 // pred_fallthru
      _
    // Predicated region
    $region34: #{decoder_decode.1} parent=1 // pred_check
      _
    $region35: #{decoder_decode.1} parent=1 // pred_check_branch
      %45 = sbr.rel (0) target = $region37
    $region36: #{decoder_decode.1} parent=1 // pred_region
      %46 = dma.done [#allocation5], 256
    $region37: #{decoder_decode.1} parent=1 // pred_fallthru
      _
    %v47 = vld [vmem:[%s0] sm:$0xff]
    %v48 = vld [vmem:[%s0 + $0x8] sm:$0xff]
    %v49 = vld [vmem:[%s0 + $0x10] sm:$0xff]
    %v50 = vld [vmem:[%s0 + $0x18] sm:$0xff]
    %v51 = vld [vmem:[%s0 + $0x20] sm:$0xff]
    %v52 = vld [vmem:[%s0 + $0x28] sm:$0xff]
    %v53 = vld [vmem:[%s0 + $0x30] sm:$0xff]
    %v54 = vld [vmem:[%s0 + $0x38] sm:$0xff]
    %v55 = vlaneseq
    %v56 = vand.u32 %v55, 127
    %57 = vset.pattern.permute.xlu0 0
    %58 = vperm.xlu0 %57, %v47
    %v59 = vpop.permute.xlu0 %58
    %60 = vset.pattern.permute.xlu0 0
    %61 = vperm.xlu0 %60, %v48
    %v62 = vpop.permute.xlu0 %61
    %63 = vset.pattern.permute.xlu0 0
    %64 = vperm.xlu0 %63, %v49
    %v65 = vpop.permute.xlu0 %64
    %66 = vset.pattern.permute.xlu0 0
    %67 = vperm.xlu0 %66, %v50
    %v68 = vpop.permute.xlu0 %67
    %69 = vset.pattern.permute.xlu0 0
    %70 = vperm.xlu0 %69, %v51
    %v71 = vpop.permute.xlu0 %70
    %72 = vset.pattern.permute.xlu0 0
    %73 = vperm.xlu0 %72, %v52
    %v74 = vpop.permute.xlu0 %73
    %75 = vset.pattern.permute.xlu0 0
    %76 = vperm.xlu0 %75, %v53
    %v77 = vpop.permute.xlu0 %76
    %78 = vset.pattern.permute.xlu0 0
    %79 = vperm.xlu0 %78, %v54
    %v80 = vpop.permute.xlu0 %79
    %vm81 = vcmp.eq.s32.totalorder %v56, %v59
    %vm82 = vcmp.eq.s32.totalorder %v56, %v62
    %vm83 = vcmp.eq.s32.totalorder %v56, %v65
    %vm84 = vcmp.eq.s32.totalorder %v56, %v68
    %vm85 = vcmp.eq.s32.totalorder %v56, %v71
    %vm86 = vcmp.eq.s32.totalorder %v56, %v74
    %vm87 = vcmp.eq.s32.totalorder %v56, %v77
    %vm88 = vcmp.eq.s32.totalorder %v56, %v80
    %v89 = vsel %vm81, 1, 0
    %v90 = vsel %vm82, 1, 0
    %v91 = vsel %vm83, 1, 0
    %v92 = vsel %vm84, 1, 0
    %v93 = vsel %vm85, 1, 0
    %v94 = vsel %vm86, 1, 0
    %v95 = vsel %vm87, 1, 0
    %v96 = vsel %vm88, 1, 0
    %v97 = vcvt.s32.f32 %v89
    %v98 = vcvt.s32.f32 %v90
    %v99 = vcvt.s32.f32 %v91
    %v100 = vcvt.s32.f32 %v92
    %v101 = vcvt.s32.f32 %v93
    %v102 = vcvt.s32.f32 %v94
    %v103 = vcvt.s32.f32 %v95
    %v104 = vcvt.s32.f32 %v96
    %v105 = vld [vmem:[%s1] sm:$0xff]
    %v106 = vld [vmem:[%s1 + $0x8] sm:$0xff]
    %v107 = vld [vmem:[%s1 + $0x10] sm:$0xff]
    %v108 = vld [vmem:[%s1 + $0x18] sm:$0xff]
    %v109 = vld [vmem:[%s1 + $0x20] sm:$0xff]
    %v110 = vld [vmem:[%s1 + $0x28] sm:$0xff]
    %v111 = vld [vmem:[%s1 + $0x30] sm:$0xff]
    %v112 = vld [vmem:[%s1 + $0x38] sm:$0xff]
    %v113 = vld [vmem:[%s1 + $0x40] sm:$0xff]
    %v114 = vld [vmem:[%s1 + $0x48] sm:$0xff]
    %v115 = vld [vmem:[%s1 + $0x50] sm:$0xff]
    %v116 = vld [vmem:[%s1 + $0x58] sm:$0xff]
    %v117 = vld [vmem:[%s1 + $0x60] sm:$0xff]
    %v118 = vld [vmem:[%s1 + $0x68] sm:$0xff]
    %v119 = vld [vmem:[%s1 + $0x70] sm:$0xff]
    %v120 = vld [vmem:[%s1 + $0x78] sm:$0xff]
    %121 = vmatprep.subr.mxu0 0.0
    %122 = vmatpush1.msra.mxu0 %v120
    %123 = vmatprep.subr.mxu0 0.0
    %124 = vmatpush1.msra.mxu0 %v119
    %125 = vmatprep.subr.mxu0 0.0
    %126 = vmatpush1.msra.mxu0 %v118
    %127 = vmatprep.subr.mxu0 0.0
    %128 = vmatpush1.msra.mxu0 %v117
    %129 = vmatprep.subr.mxu0 0.0
    %130 = vmatpush1.msra.mxu0 %v116
    %131 = vmatprep.subr.mxu0 0.0
    %132 = vmatpush1.msra.mxu0 %v115
    %133 = vmatprep.subr.mxu0 0.0
    %134 = vmatpush1.msra.mxu0 %v114
    %135 = vmatprep.subr.mxu0 0.0
    %136 = vmatpush1.msra.mxu0 %v113
    %137 = vmatprep.subr.mxu0 0.0
    %138 = vmatpush1.msra.mxu0 %v112
    %139 = vmatprep.subr.mxu0 0.0
    %140 = vmatpush1.msra.mxu0 %v111
    %141 = vmatprep.subr.mxu0 0.0
    %142 = vmatpush1.msra.mxu0 %v110
    %143 = vmatprep.subr.mxu0 0.0
    %144 = vmatpush1.msra.mxu0 %v109
    %145 = vmatprep.subr.mxu0 0.0
    %146 = vmatpush1.msra.mxu0 %v108
    %147 = vmatprep.subr.mxu0 0.0
    %148 = vmatpush1.msra.mxu0 %v107
    %149 = vmatprep.subr.mxu0 0.0
    %150 = vmatpush1.msra.mxu0 %v106
    %151 = vmatprep.subr.mxu0 0.0
    %152 = vmatpush1.msra.mxu0 %v105
    %153 = vmatprep.subr.mxu0 0.0
    %154 = vmatpush2.msra.mxu0 0.0
    %155 = vmatprep.subr.mxu0 0.0
    %156 = vmatpush2.msra.mxu0 0.0
    %157 = vmatprep.subr.mxu0 0.0
    %158 = vmatpush2.msra.mxu0 0.0
    %159 = vmatprep.subr.mxu0 0.0
    %160 = vmatpush2.msra.mxu0 0.0
    %161 = vmatprep.subr.mxu0 0.0
    %162 = vmatpush2.msra.mxu0 0.0
    %163 = vmatprep.subr.mxu0 0.0
    %164 = vmatpush2.msra.mxu0 0.0
    %165 = vmatprep.subr.mxu0 0.0
    %166 = vmatpush2.msra.mxu0 0.0
    %167 = vmatprep.subr.mxu0 0.0
    %168 = vmatpush2.msra.mxu0 0.0
    %169 = vmatprep.subr.mxu0 0.0
    %170 = vmatpush2.msra.mxu0 0.0
    %171 = vmatprep.subr.mxu0 0.0
    %172 = vmatpush2.msra.mxu0 0.0
    %173 = vmatprep.subr.mxu0 0.0
    %174 = vmatpush2.msra.mxu0 0.0
    %175 = vmatprep.subr.mxu0 0.0
    %176 = vmatpush2.msra.mxu0 0.0
    %177 = vmatprep.subr.mxu0 0.0
    %178 = vmatpush2.msra.mxu0 0.0
    %179 = vmatprep.subr.mxu0 0.0
    %180 = vmatpush2.msra.mxu0 0.0
    %181 = vmatprep.subr.mxu0 0.0
    %182 = vmatpush2.msra.mxu0 0.0
    %183 = vmatprep.subr.mxu0 0.0
    %184 = vmatpush2.msra.mxu0 0.0
    %185 = vmatprep.mubr.f32.mxu0 0.0
    %186 = vmatmul.mubr.f32.gmra.mxu0 %v97
    %v187 = vpop.f32.mrf.mxu0
    %v188 = vadd.f32 0.0, %v187
    %v189 = vpop.f32.mrf.mxu0
    %190 = vmatprep.mubr.f32.mxu0 0.0
    %191 = vmatmul.mubr.f32.gmra.mxu0 %v98
    %v192 = vpop.f32.mrf.mxu0
    %v193 = vadd.f32 0.0, %v192
    %v194 = vpop.f32.mrf.mxu0
    %195 = vmatprep.mubr.f32.mxu0 0.0
    %196 = vmatmul.mubr.f32.gmra.mxu0 %v99
    %v197 = vpop.f32.mrf.mxu0
    %v198 = vadd.f32 0.0, %v197
    %v199 = vpop.f32.mrf.mxu0
    %200 = vmatprep.mubr.f32.mxu0 0.0
    %201 = vmatmul.mubr.f32.gmra.mxu0 %v100
    %v202 = vpop.f32.mrf.mxu0
    %v203 = vadd.f32 0.0, %v202
    %v204 = vpop.f32.mrf.mxu0
    %205 = vmatprep.mubr.f32.mxu0 0.0
    %206 = vmatmul.mubr.f32.gmra.mxu0 %v101
    %v207 = vpop.f32.mrf.mxu0
    %v208 = vadd.f32 0.0, %v207
    %v209 = vpop.f32.mrf.mxu0
    %210 = vmatprep.mubr.f32.mxu0 0.0
    %211 = vmatmul.mubr.f32.gmra.mxu0 %v102
    %v212 = vpop.f32.mrf.mxu0
    %v213 = vadd.f32 0.0, %v212
    %v214 = vpop.f32.mrf.mxu0
    %215 = vmatprep.mubr.f32.mxu0 0.0
    %216 = vmatmul.mubr.f32.gmra.mxu0 %v103
    %v217 = vpop.f32.mrf.mxu0
    %v218 = vadd.f32 0.0, %v217
    %v219 = vpop.f32.mrf.mxu0
    %220 = vmatprep.mubr.f32.mxu0 0.0
    %221 = vmatmul.mubr.f32.gmra.mxu0 %v104
    %v222 = vpop.f32.mrf.mxu0
    %v223 = vadd.f32 0.0, %v222
    %v224 = vpop.f32.mrf.mxu0
    %225 = vdwg.mxu0
    %vm226 = vcmask 261120
    %227 = vst.msk [vmem:[#allocation2] sm:$0xff] %vm226, %v188
    %228 = vst.msk [vmem:[#allocation2 + $0x8] sm:$0xff] %vm226, %v193
    %229 = vst.msk [vmem:[#allocation2 + $0x10] sm:$0xff] %vm226, %v198
    %230 = vst.msk [vmem:[#allocation2 + $0x18] sm:$0xff] %vm226, %v203
    %231 = vst.msk [vmem:[#allocation2 + $0x20] sm:$0xff] %vm226, %v208
    %232 = vst.msk [vmem:[#allocation2 + $0x28] sm:$0xff] %vm226, %v213
    %233 = vst.msk [vmem:[#allocation2 + $0x30] sm:$0xff] %vm226, %v218
    %234 = vst.msk [vmem:[#allocation2 + $0x38] sm:$0xff] %vm226, %v223
    %v235 = vld [vmem:[#allocation4] sm:$0xff]
    %s236 = scalar_lea.vmem [#allocation4], 8
    %v237 = vld [vmem:[%s236] sm:$0xff]
    %v238 = vld [vmem:[#allocation2] sm:$0xff]
    %v239 = vld [vmem:[%s2] sm:$0xff]
    %v240 = vld [vmem:[%s2 + $0x8] sm:$0xff]
    %v241 = vld [vmem:[%s2 + $0x10] sm:$0xff]
    %v242 = vld [vmem:[%s2 + $0x18] sm:$0xff]
    %v243 = vld [vmem:[%s3] sm:$0xff]
    %v244 = vld [vmem:[%s3 + $0x8] sm:$0xff]
    %v245 = vld [vmem:[%s3 + $0x10] sm:$0xff]
    %v246 = vld [vmem:[%s3 + $0x18] sm:$0xff]
    %v248 = vsel %vm226, %v235, 0
    %250 = vmatprep.subr.mxu0 0.0
    %251 = vmatpush1.msra.mxu0 0.0
    %252 = vmatprep.subr.mxu0 0.0
    %253 = vmatpush1.msra.mxu0 0.0
    %254 = vmatprep.subr.mxu0 0.0
    %255 = vmatpush1.msra.mxu0 0.0
    %256 = vmatprep.subr.mxu0 0.0
    %257 = vmatpush1.msra.mxu0 0.0
    %258 = vmatprep.subr.mxu0 0.0
    %259 = vmatpush1.msra.mxu0 0.0
    %260 = vmatprep.subr.mxu0 0.0
    %261 = vmatpush1.msra.mxu0 0.0
    %262 = vmatprep.subr.mxu0 0.0
    %263 = vmatpush1.msra.mxu0 0.0
    %264 = vmatprep.subr.mxu0 0.0
    %265 = vmatpush1.msra.mxu0 0.0
    %266 = vmatprep.subr.mxu0 0.0
    %267 = vmatpush1.msra.mxu0 0.0
    %268 = vmatprep.subr.mxu0 0.0
    %269 = vmatpush1.msra.mxu0 0.0
    %270 = vmatprep.subr.mxu0 0.0
    %271 = vmatpush1.msra.mxu0 0.0
    %272 = vmatprep.subr.mxu0 0.0
    %273 = vmatpush1.msra.mxu0 0.0
    %274 = vmatprep.subr.mxu0 0.0
    %275 = vmatpush1.msra.mxu0 %v246
    %276 = vmatprep.subr.mxu0 0.0
    %277 = vmatpush1.msra.mxu0 %v245
    %278 = vmatprep.subr.mxu0 0.0
    %279 = vmatpush1.msra.mxu0 %v244
    %280 = vmatprep.subr.mxu0 0.0
    %281 = vmatpush1.msra.mxu0 %v243
    %282 = vmatprep.subr.mxu0 0.0
    %283 = vmatpush2.msra.mxu0 0.0
    %284 = vmatprep.subr.mxu0 0.0
    %285 = vmatpush2.msra.mxu0 0.0
    %286 = vmatprep.subr.mxu0 0.0
    %287 = vmatpush2.msra.mxu0 0.0
    %288 = vmatprep.subr.mxu0 0.0
    %289 = vmatpush2.msra.mxu0 0.0
    %290 = vmatprep.subr.mxu0 0.0
    %291 = vmatpush2.msra.mxu0 0.0
    %292 = vmatprep.subr.mxu0 0.0
    %293 = vmatpush2.msra.mxu0 0.0
    %294 = vmatprep.subr.mxu0 0.0
    %295 = vmatpush2.msra.mxu0 0.0
    %296 = vmatprep.subr.mxu0 0.0
    %297 = vmatpush2.msra.mxu0 0.0
    %298 = vmatprep.subr.mxu0 0.0
    %299 = vmatpush2.msra.mxu0 0.0
    %300 = vmatprep.subr.mxu0 0.0
    %301 = vmatpush2.msra.mxu0 0.0
    %302 = vmatprep.subr.mxu0 0.0
    %303 = vmatpush2.msra.mxu0 0.0
    %304 = vmatprep.subr.mxu0 0.0
    %305 = vmatpush2.msra.mxu0 0.0
    %306 = vmatprep.subr.mxu0 0.0
    %307 = vmatpush2.msra.mxu0 0.0
    %308 = vmatprep.subr.mxu0 0.0
    %309 = vmatpush2.msra.mxu0 0.0
    %310 = vmatprep.subr.mxu0 0.0
    %311 = vmatpush2.msra.mxu0 0.0
    %312 = vmatprep.subr.mxu0 0.0
    %313 = vmatpush2.msra.mxu0 0.0
    %314 = vmatprep.mubr.f32.mxu0 0.0
    %315 = vmatmul.mubr.f32.gmra.mxu0 %v248
    %v316 = vpop.f32.mrf.mxu0
    %v317 = vadd.f32 0.0, %v316
    %v318 = vpop.f32.mrf.mxu0
    %319 = vdwg.mxu0
    %v321 = vsel %vm226, %v238, 0
    %323 = vmatprep.subr.mxu0 0.0
    %324 = vmatpush1.msra.mxu0 0.0
    %325 = vmatprep.subr.mxu0 0.0
    %326 = vmatpush1.msra.mxu0 0.0
    %327 = vmatprep.subr.mxu0 0.0
    %328 = vmatpush1.msra.mxu0 0.0
    %329 = vmatprep.subr.mxu0 0.0
    %330 = vmatpush1.msra.mxu0 0.0
    %331 = vmatprep.subr.mxu0 0.0
    %332 = vmatpush1.msra.mxu0 0.0
    %333 = vmatprep.subr.mxu0 0.0
    %334 = vmatpush1.msra.mxu0 0.0
    %335 = vmatprep.subr.mxu0 0.0
    %336 = vmatpush1.msra.mxu0 0.0
    %337 = vmatprep.subr.mxu0 0.0
    %338 = vmatpush1.msra.mxu0 0.0
    %339 = vmatprep.subr.mxu0 0.0
    %340 = vmatpush1.msra.mxu0 0.0
    %341 = vmatprep.subr.mxu0 0.0
    %342 = vmatpush1.msra.mxu0 0.0
    %343 = vmatprep.subr.mxu0 0.0
    %344 = vmatpush1.msra.mxu0 0.0
    %345 = vmatprep.subr.mxu0 0.0
    %346 = vmatpush1.msra.mxu0 0.0
    %347 = vmatprep.subr.mxu0 0.0
    %348 = vmatpush1.msra.mxu0 %v242
    %349 = vmatprep.subr.mxu0 0.0
    %350 = vmatpush1.msra.mxu0 %v241
    %351 = vmatprep.subr.mxu0 0.0
    %352 = vmatpush1.msra.mxu0 %v240
    %353 = vmatprep.subr.mxu0 0.0
    %354 = vmatpush1.msra.mxu0 %v239
    %355 = vmatprep.subr.mxu0 0.0
    %356 = vmatpush2.msra.mxu0 0.0
    %357 = vmatprep.subr.mxu0 0.0
    %358 = vmatpush2.msra.mxu0 0.0
    %359 = vmatprep.subr.mxu0 0.0
    %360 = vmatpush2.msra.mxu0 0.0
    %361 = vmatprep.subr.mxu0 0.0
    %362 = vmatpush2.msra.mxu0 0.0
    %363 = vmatprep.subr.mxu0 0.0
    %364 = vmatpush2.msra.mxu0 0.0
    %365 = vmatprep.subr.mxu0 0.0
    %366 = vmatpush2.msra.mxu0 0.0
    %367 = vmatprep.subr.mxu0 0.0
    %368 = vmatpush2.msra.mxu0 0.0
    %369 = vmatprep.subr.mxu0 0.0
    %370 = vmatpush2.msra.mxu0 0.0
    %371 = vmatprep.subr.mxu0 0.0
    %372 = vmatpush2.msra.mxu0 0.0
    %373 = vmatprep.subr.mxu0 0.0
    %374 = vmatpush2.msra.mxu0 0.0
    %375 = vmatprep.subr.mxu0 0.0
    %376 = vmatpush2.msra.mxu0 0.0
    %377 = vmatprep.subr.mxu0 0.0
    %378 = vmatpush2.msra.mxu0 0.0
    %379 = vmatprep.subr.mxu0 0.0
    %380 = vmatpush2.msra.mxu0 0.0
    %381 = vmatprep.subr.mxu0 0.0
    %382 = vmatpush2.msra.mxu0 0.0
    %383 = vmatprep.subr.mxu0 0.0
    %384 = vmatpush2.msra.mxu0 0.0
    %385 = vmatprep.subr.mxu0 0.0
    %386 = vmatpush2.msra.mxu0 0.0
    %387 = vmatprep.mubr.f32.mxu0 0.0
    %388 = vmatmul.mubr.f32.gmra.mxu0 %v321
    %v389 = vpop.f32.mrf.mxu0
    %v390 = vadd.f32 %v317, %v389
    %v391 = vpop.f32.mrf.mxu0
    %392 = vdwg.mxu0
    %v393 = vld [vmem:[%s4] sm:$0x1]
    %v395 = vlaneseq
    %v396 = vshrl.u32 %v395, 7
    %v397 = vsub.s32 0, %v396
    %v398 = vrot.slane %v393, %v397
    %v400 = vadd.f32 %v390, %v398
    %v401 = vxor.u32 %v400, 2147483648
    %v402 = vmul.f32 %v401, 1.442695
    %v403 = vpow.pop %v402
    %v404 = vadd.f32 %v403, 1.0
    %v405 = vrcp.pop %v404
    %v406 = vmul.f32 1.0, %v405
    %408 = vrot.lane.b32.xlu0 %v400, 32
    %v409 = vpop.permute.xlu0 %408
    %v411 = vmul.f32 %v406, %v409
    %413 = vrot.lane.b32.xlu0 %v411, 64
    %v414 = vpop.permute.xlu0 %413
    %v416 = vadd.f32 %v400, %v414
    %v417 = vtanh.pop %v416
    %v418 = vsub.f32 1.0, %v406
    %420 = vrot.lane.b32.xlu0 %v417, 96
    %v421 = vpop.permute.xlu0 %420
    %v423 = vmul.f32 %v418, %v421
    %424 = vrot.lane.b32.xlu0 %v235, 32
    %v425 = vpop.permute.xlu0 %424
    %v427 = vmul.f32 %v406, %v425
    %v428 = vadd.f32 %v423, %v427
    %s429 = scalar_lea.vmem %s2, 32
    %v430 = vld [vmem:[%s429] sm:$0xff]
    %v431 = vld [vmem:[%s429 + $0x8] sm:$0xff]
    %v432 = vld [vmem:[%s429 + $0x10] sm:$0xff]
    %v433 = vld [vmem:[%s429 + $0x18] sm:$0xff]
    %s434 = scalar_lea.vmem %s3, 32
    %v435 = vld [vmem:[%s434] sm:$0xff]
    %v436 = vld [vmem:[%s434 + $0x8] sm:$0xff]
    %v437 = vld [vmem:[%s434 + $0x10] sm:$0xff]
    %v438 = vld [vmem:[%s434 + $0x18] sm:$0xff]
    %v440 = vsel %vm226, %v237, 0
    %442 = vmatprep.subr.mxu0 0.0
    %443 = vmatpush1.msra.mxu0 0.0
    %444 = vmatprep.subr.mxu0 0.0
    %445 = vmatpush1.msra.mxu0 0.0
    %446 = vmatprep.subr.mxu0 0.0
    %447 = vmatpush1.msra.mxu0 0.0
    %448 = vmatprep.subr.mxu0 0.0
    %449 = vmatpush1.msra.mxu0 0.0
    %450 = vmatprep.subr.mxu0 0.0
    %451 = vmatpush1.msra.mxu0 0.0
    %452 = vmatprep.subr.mxu0 0.0
    %453 = vmatpush1.msra.mxu0 0.0
    %454 = vmatprep.subr.mxu0 0.0
    %455 = vmatpush1.msra.mxu0 0.0
    %456 = vmatprep.subr.mxu0 0.0
    %457 = vmatpush1.msra.mxu0 0.0
    %458 = vmatprep.subr.mxu0 0.0
    %459 = vmatpush1.msra.mxu0 0.0
    %460 = vmatprep.subr.mxu0 0.0
    %461 = vmatpush1.msra.mxu0 0.0
    %462 = vmatprep.subr.mxu0 0.0
    %463 = vmatpush1.msra.mxu0 0.0
    %464 = vmatprep.subr.mxu0 0.0
    %465 = vmatpush1.msra.mxu0 0.0
    %466 = vmatprep.subr.mxu0 0.0
    %467 = vmatpush1.msra.mxu0 %v438
    %468 = vmatprep.subr.mxu0 0.0
    %469 = vmatpush1.msra.mxu0 %v437
    %470 = vmatprep.subr.mxu0 0.0
    %471 = vmatpush1.msra.mxu0 %v436
    %472 = vmatprep.subr.mxu0 0.0
    %473 = vmatpush1.msra.mxu0 %v435
    %474 = vmatprep.subr.mxu0 0.0
    %475 = vmatpush2.msra.mxu0 0.0
    %476 = vmatprep.subr.mxu0 0.0
    %477 = vmatpush2.msra.mxu0 0.0
    %478 = vmatprep.subr.mxu0 0.0
    %479 = vmatpush2.msra.mxu0 0.0
    %480 = vmatprep.subr.mxu0 0.0
    %481 = vmatpush2.msra.mxu0 0.0
    %482 = vmatprep.subr.mxu0 0.0
    %483 = vmatpush2.msra.mxu0 0.0
    %484 = vmatprep.subr.mxu0 0.0
    %485 = vmatpush2.msra.mxu0 0.0
    %486 = vmatprep.subr.mxu0 0.0
    %487 = vmatpush2.msra.mxu0 0.0
    %488 = vmatprep.subr.mxu0 0.0
    %489 = vmatpush2.msra.mxu0 0.0
    %490 = vmatprep.subr.mxu0 0.0
    %491 = vmatpush2.msra.mxu0 0.0
    %492 = vmatprep.subr.mxu0 0.0
    %493 = vmatpush2.msra.mxu0 0.0
    %494 = vmatprep.subr.mxu0 0.0
    %495 = vmatpush2.msra.mxu0 0.0
    %496 = vmatprep.subr.mxu0 0.0
    %497 = vmatpush2.msra.mxu0 0.0
    %498 = vmatprep.subr.mxu0 0.0
    %499 = vmatpush2.msra.mxu0 0.0
    %500 = vmatprep.subr.mxu0 0.0
    %501 = vmatpush2.msra.mxu0 0.0
    %502 = vmatprep.subr.mxu0 0.0
    %503 = vmatpush2.msra.mxu0 0.0
    %504 = vmatprep.subr.mxu0 0.0
    %505 = vmatpush2.msra.mxu0 0.0
    %506 = vmatprep.mubr.f32.mxu0 0.0
    %507 = vmatmul.mubr.f32.gmra.mxu0 %v440
    %v508 = vpop.f32.mrf.mxu0
    %v509 = vadd.f32 0.0, %v508
    %v510 = vpop.f32.mrf.mxu0
    %511 = vdwg.mxu0
    %513 = vrot.lane.b32.xlu0 %v428, 96
    %v514 = vpop.permute.xlu0 %513
    %v515 = vsel %vm226, %v514, 0
    %517 = vmatprep.subr.mxu0 0.0
    %518 = vmatpush1.msra.mxu0 0.0
    %519 = vmatprep.subr.mxu0 0.0
    %520 = vmatpush1.msra.mxu0 0.0
    %521 = vmatprep.subr.mxu0 0.0
    %522 = vmatpush1.msra.mxu0 0.0
    %523 = vmatprep.subr.mxu0 0.0
    %524 = vmatpush1.msra.mxu0 0.0
    %525 = vmatprep.subr.mxu0 0.0
    %526 = vmatpush1.msra.mxu0 0.0
    %527 = vmatprep.subr.mxu0 0.0
    %528 = vmatpush1.msra.mxu0 0.0
    %529 = vmatprep.subr.mxu0 0.0
    %530 = vmatpush1.msra.mxu0 0.0
    %531 = vmatprep.subr.mxu0 0.0
    %532 = vmatpush1.msra.mxu0 0.0
    %533 = vmatprep.subr.mxu0 0.0
    %534 = vmatpush1.msra.mxu0 0.0
    %535 = vmatprep.subr.mxu0 0.0
    %536 = vmatpush1.msra.mxu0 0.0
    %537 = vmatprep.subr.mxu0 0.0
    %538 = vmatpush1.msra.mxu0 0.0
    %539 = vmatprep.subr.mxu0 0.0
    %540 = vmatpush1.msra.mxu0 0.0
    %541 = vmatprep.subr.mxu0 0.0
    %542 = vmatpush1.msra.mxu0 %v433
    %543 = vmatprep.subr.mxu0 0.0
    %544 = vmatpush1.msra.mxu0 %v432
    %545 = vmatprep.subr.mxu0 0.0
    %546 = vmatpush1.msra.mxu0 %v431
    %547 = vmatprep.subr.mxu0 0.0
    %548 = vmatpush1.msra.mxu0 %v430
    %549 = vmatprep.subr.mxu0 0.0
    %550 = vmatpush2.msra.mxu0 0.0
    %551 = vmatprep.subr.mxu0 0.0
    %552 = vmatpush2.msra.mxu0 0.0
    %553 = vmatprep.subr.mxu0 0.0
    %554 = vmatpush2.msra.mxu0 0.0
    %555 = vmatprep.subr.mxu0 0.0
    %556 = vmatpush2.msra.mxu0 0.0
    %557 = vmatprep.subr.mxu0 0.0
    %558 = vmatpush2.msra.mxu0 0.0
    %559 = vmatprep.subr.mxu0 0.0
    %560 = vmatpush2.msra.mxu0 0.0
    %561 = vmatprep.subr.mxu0 0.0
    %562 = vmatpush2.msra.mxu0 0.0
    %563 = vmatprep.subr.mxu0 0.0
    %564 = vmatpush2.msra.mxu0 0.0
    %565 = vmatprep.subr.mxu0 0.0
    %566 = vmatpush2.msra.mxu0 0.0
    %567 = vmatprep.subr.mxu0 0.0
    %568 = vmatpush2.msra.mxu0 0.0
    %569 = vmatprep.subr.mxu0 0.0
    %570 = vmatpush2.msra.mxu0 0.0
    %571 = vmatprep.subr.mxu0 0.0
    %572 = vmatpush2.msra.mxu0 0.0
    %573 = vmatprep.subr.mxu0 0.0
    %574 = vmatpush2.msra.mxu0 0.0
    %575 = vmatprep.subr.mxu0 0.0
    %576 = vmatpush2.msra.mxu0 0.0
    %577 = vmatprep.subr.mxu0 0.0
    %578 = vmatpush2.msra.mxu0 0.0
    %579 = vmatprep.subr.mxu0 0.0
    %580 = vmatpush2.msra.mxu0 0.0
    %581 = vmatprep.mubr.f32.mxu0 0.0
    %582 = vmatmul.mubr.f32.gmra.mxu0 %v515
    %v583 = vpop.f32.mrf.mxu0
    %v584 = vadd.f32 %v509, %v583
    %v585 = vpop.f32.mrf.mxu0
    %586 = vdwg.mxu0
    %s587 = scalar_lea.vmem %s4, 1
    %v588 = vld [vmem:[%s587] sm:$0x1]
    %v590 = vlaneseq
    %v591 = vshrl.u32 %v590, 7
    %v592 = vsub.s32 0, %v591
    %v593 = vrot.slane %v588, %v592
    %v595 = vadd.f32 %v584, %v593
    %v596 = vxor.u32 %v595, 2147483648
    %v597 = vmul.f32 %v596, 1.442695
    %v598 = vpow.pop %v597
    %v599 = vadd.f32 %v598, 1.0
    %v600 = vrcp.pop %v599
    %v601 = vmul.f32 1.0, %v600
    %603 = vrot.lane.b32.xlu0 %v595, 32
    %v604 = vpop.permute.xlu0 %603
    %v606 = vmul.f32 %v601, %v604
    %608 = vrot.lane.b32.xlu0 %v606, 64
    %v609 = vpop.permute.xlu0 %608
    %v611 = vadd.f32 %v595, %v609
    %v612 = vtanh.pop %v611
    %v613 = vsub.f32 1.0, %v601
    %615 = vrot.lane.b32.xlu0 %v612, 96
    %v616 = vpop.permute.xlu0 %615
    %v618 = vmul.f32 %v613, %v616
    %619 = vrot.lane.b32.xlu0 %v237, 32
    %v620 = vpop.permute.xlu0 %619
    %v622 = vmul.f32 %v601, %v620
    %v623 = vadd.f32 %v618, %v622
    %625 = vrot.lane.b32.xlu0 %v623, 96
    %v626 = vpop.permute.xlu0 %625
    %628 = vst.msk [vmem:[#allocation3] sm:$0xff] %vm226, %v626
    %v629 = vld [vmem:[#allocation2 + $0x8] sm:$0xff]
    %v630 = vld [vmem:[%s2] sm:$0xff]
    %v631 = vld [vmem:[%s2 + $0x8] sm:$0xff]
    %v632 = vld [vmem:[%s2 + $0x10] sm:$0xff]
    %v633 = vld [vmem:[%s2 + $0x18] sm:$0xff]
    %v634 = vld [vmem:[%s3] sm:$0xff]
    %v635 = vld [vmem:[%s3 + $0x8] sm:$0xff]
    %v636 = vld [vmem:[%s3 + $0x10] sm:$0xff]
    %v637 = vld [vmem:[%s3 + $0x18] sm:$0xff]
    %638 = vmatprep.subr.mxu0 0.0
    %639 = vmatpush1.msra.mxu0 0.0
    %640 = vmatprep.subr.mxu0 0.0
    %641 = vmatpush1.msra.mxu0 0.0
    %642 = vmatprep.subr.mxu0 0.0
    %643 = vmatpush1.msra.mxu0 0.0
    %644 = vmatprep.subr.mxu0 0.0
    %645 = vmatpush1.msra.mxu0 0.0
    %646 = vmatprep.subr.mxu0 0.0
    %647 = vmatpush1.msra.mxu0 0.0
    %648 = vmatprep.subr.mxu0 0.0
    %649 = vmatpush1.msra.mxu0 0.0
    %650 = vmatprep.subr.mxu0 0.0
    %651 = vmatpush1.msra.mxu0 0.0
    %652 = vmatprep.subr.mxu0 0.0
    %653 = vmatpush1.msra.mxu0 0.0
    %654 = vmatprep.subr.mxu0 0.0
    %655 = vmatpush1.msra.mxu0 0.0
    %656 = vmatprep.subr.mxu0 0.0
    %657 = vmatpush1.msra.mxu0 0.0
    %658 = vmatprep.subr.mxu0 0.0
    %659 = vmatpush1.msra.mxu0 0.0
    %660 = vmatprep.subr.mxu0 0.0
    %661 = vmatpush1.msra.mxu0 0.0
    %662 = vmatprep.subr.mxu0 0.0
    %663 = vmatpush1.msra.mxu0 %v637
    %664 = vmatprep.subr.mxu0 0.0
    %665 = vmatpush1.msra.mxu0 %v636
    %666 = vmatprep.subr.mxu0 0.0
    %667 = vmatpush1.msra.mxu0 %v635
    %668 = vmatprep.subr.mxu0 0.0
    %669 = vmatpush1.msra.mxu0 %v634
    %670 = vmatprep.subr.mxu0 0.0
    %671 = vmatpush2.msra.mxu0 0.0
    %672 = vmatprep.subr.mxu0 0.0
    %673 = vmatpush2.msra.mxu0 0.0
    %674 = vmatprep.subr.mxu0 0.0
    %675 = vmatpush2.msra.mxu0 0.0
    %676 = vmatprep.subr.mxu0 0.0
    %677 = vmatpush2.msra.mxu0 0.0
    %678 = vmatprep.subr.mxu0 0.0
    %679 = vmatpush2.msra.mxu0 0.0
    %680 = vmatprep.subr.mxu0 0.0
    %681 = vmatpush2.msra.mxu0 0.0
    %682 = vmatprep.subr.mxu0 0.0
    %683 = vmatpush2.msra.mxu0 0.0
    %684 = vmatprep.subr.mxu0 0.0
    %685 = vmatpush2.msra.mxu0 0.0
    %686 = vmatprep.subr.mxu0 0.0
    %687 = vmatpush2.msra.mxu0 0.0
    %688 = vmatprep.subr.mxu0 0.0
    %689 = vmatpush2.msra.mxu0 0.0
    %690 = vmatprep.subr.mxu0 0.0
    %691 = vmatpush2.msra.mxu0 0.0
    %692 = vmatprep.subr.mxu0 0.0
    %693 = vmatpush2.msra.mxu0 0.0
    %694 = vmatprep.subr.mxu0 0.0
    %695 = vmatpush2.msra.mxu0 0.0
    %696 = vmatprep.subr.mxu0 0.0
    %697 = vmatpush2.msra.mxu0 0.0
    %698 = vmatprep.subr.mxu0 0.0
    %699 = vmatpush2.msra.mxu0 0.0
    %700 = vmatprep.subr.mxu0 0.0
    %701 = vmatpush2.msra.mxu0 0.0
    %702 = vmatprep.mubr.f32.mxu0 0.0
    %703 = vmatmul.mubr.f32.gmra.mxu0 %v515
    %v704 = vpop.f32.mrf.mxu0
    %v705 = vadd.f32 0.0, %v704
    %v706 = vpop.f32.mrf.mxu0
    %707 = vdwg.mxu0
    %v709 = vsel %vm226, %v629, 0
    %711 = vmatprep.subr.mxu0 0.0
    %712 = vmatpush1.msra.mxu0 0.0
    %713 = vmatprep.subr.mxu0 0.0
    %714 = vmatpush1.msra.mxu0 0.0
    %715 = vmatprep.subr.mxu0 0.0
    %716 = vmatpush1.msra.mxu0 0.0
    %717 = vmatprep.subr.mxu0 0.0
    %718 = vmatpush1.msra.mxu0 0.0
    %719 = vmatprep.subr.mxu0 0.0
    %720 = vmatpush1.msra.mxu0 0.0
    %721 = vmatprep.subr.mxu0 0.0
    %722 = vmatpush1.msra.mxu0 0.0
    %723 = vmatprep.subr.mxu0 0.0
    %724 = vmatpush1.msra.mxu0 0.0
    %725 = vmatprep.subr.mxu0 0.0
    %726 = vmatpush1.msra.mxu0 0.0
    %727 = vmatprep.subr.mxu0 0.0
    %728 = vmatpush1.msra.mxu0 0.0
    %729 = vmatprep.subr.mxu0 0.0
    %730 = vmatpush1.msra.mxu0 0.0
    %731 = vmatprep.subr.mxu0 0.0
    %732 = vmatpush1.msra.mxu0 0.0
    %733 = vmatprep.subr.mxu0 0.0
    %734 = vmatpush1.msra.mxu0 0.0
    %735 = vmatprep.subr.mxu0 0.0
    %736 = vmatpush1.msra.mxu0 %v633
    %737 = vmatprep.subr.mxu0 0.0
    %738 = vmatpush1.msra.mxu0 %v632
    %739 = vmatprep.subr.mxu0 0.0
    %740 = vmatpush1.msra.mxu0 %v631
    %741 = vmatprep.subr.mxu0 0.0
    %742 = vmatpush1.msra.mxu0 %v630
    %743 = vmatprep.subr.mxu0 0.0
    %744 = vmatpush2.msra.mxu0 0.0
    %745 = vmatprep.subr.mxu0 0.0
    %746 = vmatpush2.msra.mxu0 0.0
    %747 = vmatprep.subr.mxu0 0.0
    %748 = vmatpush2.msra.mxu0 0.0
    %749 = vmatprep.subr.mxu0 0.0
    %750 = vmatpush2.msra.mxu0 0.0
    %751 = vmatprep.subr.mxu0 0.0
    %752 = vmatpush2.msra.mxu0 0.0
    %753 = vmatprep.subr.mxu0 0.0
    %754 = vmatpush2.msra.mxu0 0.0
    %755 = vmatprep.subr.mxu0 0.0
    %756 = vmatpush2.msra.mxu0 0.0
    %757 = vmatprep.subr.mxu0 0.0
    %758 = vmatpush2.msra.mxu0 0.0
    %759 = vmatprep.subr.mxu0 0.0
    %760 = vmatpush2.msra.mxu0 0.0
    %761 = vmatprep.subr.mxu0 0.0
    %762 = vmatpush2.msra.mxu0 0.0
    %763 = vmatprep.subr.mxu0 0.0
    %764 = vmatpush2.msra.mxu0 0.0
    %765 = vmatprep.subr.mxu0 0.0
    %766 = vmatpush2.msra.mxu0 0.0
    %767 = vmatprep.subr.mxu0 0.0
    %768 = vmatpush2.msra.mxu0 0.0
    %769 = vmatprep.subr.mxu0 0.0
    %770 = vmatpush2.msra.mxu0 0.0
    %771 = vmatprep.subr.mxu0 0.0
    %772 = vmatpush2.msra.mxu0 0.0
    %773 = vmatprep.subr.mxu0 0.0
    %774 = vmatpush2.msra.mxu0 0.0
    %775 = vmatprep.mubr.f32.mxu0 0.0
    %776 = vmatmul.mubr.f32.gmra.mxu0 %v709
    %v777 = vpop.f32.mrf.mxu0
    %v778 = vadd.f32 %v705, %v777
    %v779 = vpop.f32.mrf.mxu0
    %780 = vdwg.mxu0
    %v781 = vld [vmem:[%s4] sm:$0x1]
    %v783 = vlaneseq
    %v784 = vshrl.u32 %v783, 7
    %v785 = vsub.s32 0, %v784
    %v786 = vrot.slane %v781, %v785
    %v788 = vadd.f32 %v778, %v786
    %v789 = vxor.u32 %v788, 2147483648
    %v790 = vmul.f32 %v789, 1.442695
    %v791 = vpow.pop %v790
    %v792 = vadd.f32 %v791, 1.0
    %v793 = vrcp.pop %v792
    %v794 = vmul.f32 1.0, %v793
    %796 = vrot.lane.b32.xlu0 %v788, 32
    %v797 = vpop.permute.xlu0 %796
    %v799 = vmul.f32 %v794, %v797
    %801 = vrot.lane.b32.xlu0 %v799, 64
    %v802 = vpop.permute.xlu0 %801
    %v804 = vadd.f32 %v788, %v802
    %v805 = vtanh.pop %v804
    %v806 = vsub.f32 1.0, %v794
    %808 = vrot.lane.b32.xlu0 %v805, 96
    %v809 = vpop.permute.xlu0 %808
    %v811 = vmul.f32 %v806, %v809
    %v812 = vmul.f32 %v794, %v428
    %v813 = vadd.f32 %v811, %v812
    %v814 = vld [vmem:[%s429] sm:$0xff]
    %v815 = vld [vmem:[%s429 + $0x8] sm:$0xff]
    %v816 = vld [vmem:[%s429 + $0x10] sm:$0xff]
    %v817 = vld [vmem:[%s429 + $0x18] sm:$0xff]
    %v818 = vld [vmem:[%s434] sm:$0xff]
    %v819 = vld [vmem:[%s434 + $0x8] sm:$0xff]
    %v820 = vld [vmem:[%s434 + $0x10] sm:$0xff]
    %v821 = vld [vmem:[%s434 + $0x18] sm:$0xff]
    %v822 = vsel %vm226, %v626, 0
    %824 = vmatprep.subr.mxu0 0.0
    %825 = vmatpush1.msra.mxu0 0.0
    %826 = vmatprep.subr.mxu0 0.0
    %827 = vmatpush1.msra.mxu0 0.0
    %828 = vmatprep.subr.mxu0 0.0
    %829 = vmatpush1.msra.mxu0 0.0
    %830 = vmatprep.subr.mxu0 0.0
    %831 = vmatpush1.msra.mxu0 0.0
    %832 = vmatprep.subr.mxu0 0.0
    %833 = vmatpush1.msra.mxu0 0.0
    %834 = vmatprep.subr.mxu0 0.0
    %835 = vmatpush1.msra.mxu0 0.0
    %836 = vmatprep.subr.mxu0 0.0
    %837 = vmatpush1.msra.mxu0 0.0
    %838 = vmatprep.subr.mxu0 0.0
    %839 = vmatpush1.msra.mxu0 0.0
    %840 = vmatprep.subr.mxu0 0.0
    %841 = vmatpush1.msra.mxu0 0.0
    %842 = vmatprep.subr.mxu0 0.0
    %843 = vmatpush1.msra.mxu0 0.0
    %844 = vmatprep.subr.mxu0 0.0
    %845 = vmatpush1.msra.mxu0 0.0
    %846 = vmatprep.subr.mxu0 0.0
    %847 = vmatpush1.msra.mxu0 0.0
    %848 = vmatprep.subr.mxu0 0.0
    %849 = vmatpush1.msra.mxu0 %v821
    %850 = vmatprep.subr.mxu0 0.0
    %851 = vmatpush1.msra.mxu0 %v820
    %852 = vmatprep.subr.mxu0 0.0
    %853 = vmatpush1.msra.mxu0 %v819
    %854 = vmatprep.subr.mxu0 0.0
    %855 = vmatpush1.msra.mxu0 %v818
    %856 = vmatprep.subr.mxu0 0.0
    %857 = vmatpush2.msra.mxu0 0.0
    %858 = vmatprep.subr.mxu0 0.0
    %859 = vmatpush2.msra.mxu0 0.0
    %860 = vmatprep.subr.mxu0 0.0
    %861 = vmatpush2.msra.mxu0 0.0
    %862 = vmatprep.subr.mxu0 0.0
    %863 = vmatpush2.msra.mxu0 0.0
    %864 = vmatprep.subr.mxu0 0.0
    %865 = vmatpush2.msra.mxu0 0.0
    %866 = vmatprep.subr.mxu0 0.0
    %867 = vmatpush2.msra.mxu0 0.0
    %868 = vmatprep.subr.mxu0 0.0
    %869 = vmatpush2.msra.mxu0 0.0
    %870 = vmatprep.subr.mxu0 0.0
    %871 = vmatpush2.msra.mxu0 0.0
    %872 = vmatprep.subr.mxu0 0.0
    %873 = vmatpush2.msra.mxu0 0.0
    %874 = vmatprep.subr.mxu0 0.0
    %875 = vmatpush2.msra.mxu0 0.0
    %876 = vmatprep.subr.mxu0 0.0
    %877 = vmatpush2.msra.mxu0 0.0
    %878 = vmatprep.subr.mxu0 0.0
    %879 = vmatpush2.msra.mxu0 0.0
    %880 = vmatprep.subr.mxu0 0.0
    %881 = vmatpush2.msra.mxu0 0.0
    %882 = vmatprep.subr.mxu0 0.0
    %883 = vmatpush2.msra.mxu0 0.0
    %884 = vmatprep.subr.mxu0 0.0
    %885 = vmatpush2.msra.mxu0 0.0
    %886 = vmatprep.subr.mxu0 0.0
    %887 = vmatpush2.msra.mxu0 0.0
    %888 = vmatprep.mubr.f32.mxu0 0.0
    %889 = vmatmul.mubr.f32.gmra.mxu0 %v822
    %v890 = vpop.f32.mrf.mxu0
    %v891 = vadd.f32 0.0, %v890
    %v892 = vpop.f32.mrf.mxu0
    %893 = vdwg.mxu0
    %895 = vrot.lane.b32.xlu0 %v813, 96
    %v896 = vpop.permute.xlu0 %895
    %v897 = vsel %vm226, %v896, 0
    %899 = vmatprep.subr.mxu0 0.0
    %900 = vmatpush1.msra.mxu0 0.0
    %901 = vmatprep.subr.mxu0 0.0
    %902 = vmatpush1.msra.mxu0 0.0
    %903 = vmatprep.subr.mxu0 0.0
    %904 = vmatpush1.msra.mxu0 0.0
    %905 = vmatprep.subr.mxu0 0.0
    %906 = vmatpush1.msra.mxu0 0.0
    %907 = vmatprep.subr.mxu0 0.0
    %908 = vmatpush1.msra.mxu0 0.0
    %909 = vmatprep.subr.mxu0 0.0
    %910 = vmatpush1.msra.mxu0 0.0
    %911 = vmatprep.subr.mxu0 0.0
    %912 = vmatpush1.msra.mxu0 0.0
    %913 = vmatprep.subr.mxu0 0.0
    %914 = vmatpush1.msra.mxu0 0.0
    %915 = vmatprep.subr.mxu0 0.0
    %916 = vmatpush1.msra.mxu0 0.0
    %917 = vmatprep.subr.mxu0 0.0
    %918 = vmatpush1.msra.mxu0 0.0
    %919 = vmatprep.subr.mxu0 0.0
    %920 = vmatpush1.msra.mxu0 0.0
    %921 = vmatprep.subr.mxu0 0.0
    %922 = vmatpush1.msra.mxu0 0.0
    %923 = vmatprep.subr.mxu0 0.0
    %924 = vmatpush1.msra.mxu0 %v817
    %925 = vmatprep.subr.mxu0 0.0
    %926 = vmatpush1.msra.mxu0 %v816
    %927 = vmatprep.subr.mxu0 0.0
    %928 = vmatpush1.msra.mxu0 %v815
    %929 = vmatprep.subr.mxu0 0.0
    %930 = vmatpush1.msra.mxu0 %v814
    %931 = vmatprep.subr.mxu0 0.0
    %932 = vmatpush2.msra.mxu0 0.0
    %933 = vmatprep.subr.mxu0 0.0
    %934 = vmatpush2.msra.mxu0 0.0
    %935 = vmatprep.subr.mxu0 0.0
    %936 = vmatpush2.msra.mxu0 0.0
    %937 = vmatprep.subr.mxu0 0.0
    %938 = vmatpush2.msra.mxu0 0.0
    %939 = vmatprep.subr.mxu0 0.0
    %940 = vmatpush2.msra.mxu0 0.0
    %941 = vmatprep.subr.mxu0 0.0
    %942 = vmatpush2.msra.mxu0 0.0
    %943 = vmatprep.subr.mxu0 0.0
    %944 = vmatpush2.msra.mxu0 0.0
    %945 = vmatprep.subr.mxu0 0.0
    %946 = vmatpush2.msra.mxu0 0.0
    %947 = vmatprep.subr.mxu0 0.0
    %948 = vmatpush2.msra.mxu0 0.0
    %949 = vmatprep.subr.mxu0 0.0
    %950 = vmatpush2.msra.mxu0 0.0
    %951 = vmatprep.subr.mxu0 0.0
    %952 = vmatpush2.msra.mxu0 0.0
    %953 = vmatprep.subr.mxu0 0.0
    %954 = vmatpush2.msra.mxu0 0.0
    %955 = vmatprep.subr.mxu0 0.0
    %956 = vmatpush2.msra.mxu0 0.0
    %957 = vmatprep.subr.mxu0 0.0
    %958 = vmatpush2.msra.mxu0 0.0
    %959 = vmatprep.subr.mxu0 0.0
    %960 = vmatpush2.msra.mxu0 0.0
    %961 = vmatprep.subr.mxu0 0.0
    %962 = vmatpush2.msra.mxu0 0.0
    %963 = vmatprep.mubr.f32.mxu0 0.0
    %964 = vmatmul.mubr.f32.gmra.mxu0 %v897
    %v965 = vpop.f32.mrf.mxu0
    %v966 = vadd.f32 %v891, %v965
    %v967 = vpop.f32.mrf.mxu0
    %968 = vdwg.mxu0
    %v969 = vld [vmem:[%s587] sm:$0x1]
    %v971 = vlaneseq
    %v972 = vshrl.u32 %v971, 7
    %v973 = vsub.s32 0, %v972
    %v974 = vrot.slane %v969, %v973
    %v976 = vadd.f32 %v966, %v974
    %v977 = vxor.u32 %v976, 2147483648
    %v978 = vmul.f32 %v977, 1.442695
    %v979 = vpow.pop %v978
    %v980 = vadd.f32 %v979, 1.0
    %v981 = vrcp.pop %v980
    %v982 = vmul.f32 1.0, %v981
    %984 = vrot.lane.b32.xlu0 %v976, 32
    %v985 = vpop.permute.xlu0 %984
    %v987 = vmul.f32 %v982, %v985
    %989 = vrot.lane.b32.xlu0 %v987, 64
    %v990 = vpop.permute.xlu0 %989
    %v992 = vadd.f32 %v976, %v990
    %v993 = vtanh.pop %v992
    %v994 = vsub.f32 1.0, %v982
    %996 = vrot.lane.b32.xlu0 %v993, 96
    %v997 = vpop.permute.xlu0 %996
    %v999 = vmul.f32 %v994, %v997
    %v1000 = vmul.f32 %v982, %v623
    %v1001 = vadd.f32 %v999, %v1000
    %1003 = vrot.lane.b32.xlu0 %v1001, 96
    %v1004 = vpop.permute.xlu0 %1003
    %1006 = vst.msk [vmem:[#allocation3 + $0x8] sm:$0xff] %vm226, %v1004
    %v1007 = vld [vmem:[#allocation2 + $0x10] sm:$0xff]
    %v1008 = vld [vmem:[%s2] sm:$0xff]
    %v1009 = vld [vmem:[%s2 + $0x8] sm:$0xff]
    %v1010 = vld [vmem:[%s2 + $0x10] sm:$0xff]
    %v1011 = vld [vmem:[%s2 + $0x18] sm:$0xff]
    %v1012 = vld [vmem:[%s3] sm:$0xff]
    %v1013 = vld [vmem:[%s3 + $0x8] sm:$0xff]
    %v1014 = vld [vmem:[%s3 + $0x10] sm:$0xff]
    %v1015 = vld [vmem:[%s3 + $0x18] sm:$0xff]
    %1016 = vmatprep.subr.mxu0 0.0
    %1017 = vmatpush1.msra.mxu0 0.0
    %1018 = vmatprep.subr.mxu0 0.0
    %1019 = vmatpush1.msra.mxu0 0.0
    %1020 = vmatprep.subr.mxu0 0.0
    %1021 = vmatpush1.msra.mxu0 0.0
    %1022 = vmatprep.subr.mxu0 0.0
    %1023 = vmatpush1.msra.mxu0 0.0
    %1024 = vmatprep.subr.mxu0 0.0
    %1025 = vmatpush1.msra.mxu0 0.0
    %1026 = vmatprep.subr.mxu0 0.0
    %1027 = vmatpush1.msra.mxu0 0.0
    %1028 = vmatprep.subr.mxu0 0.0
    %1029 = vmatpush1.msra.mxu0 0.0
    %1030 = vmatprep.subr.mxu0 0.0
    %1031 = vmatpush1.msra.mxu0 0.0
    %1032 = vmatprep.subr.mxu0 0.0
    %1033 = vmatpush1.msra.mxu0 0.0
    %1034 = vmatprep.subr.mxu0 0.0
    %1035 = vmatpush1.msra.mxu0 0.0
    %1036 = vmatprep.subr.mxu0 0.0
    %1037 = vmatpush1.msra.mxu0 0.0
    %1038 = vmatprep.subr.mxu0 0.0
    %1039 = vmatpush1.msra.mxu0 0.0
    %1040 = vmatprep.subr.mxu0 0.0
    %1041 = vmatpush1.msra.mxu0 %v1015
    %1042 = vmatprep.subr.mxu0 0.0
    %1043 = vmatpush1.msra.mxu0 %v1014
    %1044 = vmatprep.subr.mxu0 0.0
    %1045 = vmatpush1.msra.mxu0 %v1013
    %1046 = vmatprep.subr.mxu0 0.0
    %1047 = vmatpush1.msra.mxu0 %v1012
    %1048 = vmatprep.subr.mxu0 0.0
    %1049 = vmatpush2.msra.mxu0 0.0
    %1050 = vmatprep.subr.mxu0 0.0
    %1051 = vmatpush2.msra.mxu0 0.0
    %1052 = vmatprep.subr.mxu0 0.0
    %1053 = vmatpush2.msra.mxu0 0.0
    %1054 = vmatprep.subr.mxu0 0.0
    %1055 = vmatpush2.msra.mxu0 0.0
    %1056 = vmatprep.subr.mxu0 0.0
    %1057 = vmatpush2.msra.mxu0 0.0
    %1058 = vmatprep.subr.mxu0 0.0
    %1059 = vmatpush2.msra.mxu0 0.0
    %1060 = vmatprep.subr.mxu0 0.0
    %1061 = vmatpush2.msra.mxu0 0.0
    %1062 = vmatprep.subr.mxu0 0.0
    %1063 = vmatpush2.msra.mxu0 0.0
    %1064 = vmatprep.subr.mxu0 0.0
    %1065 = vmatpush2.msra.mxu0 0.0
    %1066 = vmatprep.subr.mxu0 0.0
    %1067 = vmatpush2.msra.mxu0 0.0
    %1068 = vmatprep.subr.mxu0 0.0
    %1069 = vmatpush2.msra.mxu0 0.0
    %1070 = vmatprep.subr.mxu0 0.0
    %1071 = vmatpush2.msra.mxu0 0.0
    %1072 = vmatprep.subr.mxu0 0.0
    %1073 = vmatpush2.msra.mxu0 0.0
    %1074 = vmatprep.subr.mxu0 0.0
    %1075 = vmatpush2.msra.mxu0 0.0
    %1076 = vmatprep.subr.mxu0 0.0
    %1077 = vmatpush2.msra.mxu0 0.0
    %1078 = vmatprep.subr.mxu0 0.0
    %1079 = vmatpush2.msra.mxu0 0.0
    %1080 = vmatprep.mubr.f32.mxu0 0.0
    %1081 = vmatmul.mubr.f32.gmra.mxu0 %v897
    %v1082 = vpop.f32.mrf.mxu0
    %v1083 = vadd.f32 0.0, %v1082
    %v1084 = vpop.f32.mrf.mxu0
    %1085 = vdwg.mxu0
    %v1087 = vsel %vm226, %v1007, 0
    %1089 = vmatprep.subr.mxu0 0.0
    %1090 = vmatpush1.msra.mxu0 0.0
    %1091 = vmatprep.subr.mxu0 0.0
    %1092 = vmatpush1.msra.mxu0 0.0
    %1093 = vmatprep.subr.mxu0 0.0
    %1094 = vmatpush1.msra.mxu0 0.0
    %1095 = vmatprep.subr.mxu0 0.0
    %1096 = vmatpush1.msra.mxu0 0.0
    %1097 = vmatprep.subr.mxu0 0.0
    %1098 = vmatpush1.msra.mxu0 0.0
    %1099 = vmatprep.subr.mxu0 0.0
    %1100 = vmatpush1.msra.mxu0 0.0
    %1101 = vmatprep.subr.mxu0 0.0
    %1102 = vmatpush1.msra.mxu0 0.0
    %1103 = vmatprep.subr.mxu0 0.0
    %1104 = vmatpush1.msra.mxu0 0.0
    %1105 = vmatprep.subr.mxu0 0.0
    %1106 = vmatpush1.msra.mxu0 0.0
    %1107 = vmatprep.subr.mxu0 0.0
    %1108 = vmatpush1.msra.mxu0 0.0
    %1109 = vmatprep.subr.mxu0 0.0
    %1110 = vmatpush1.msra.mxu0 0.0
    %1111 = vmatprep.subr.mxu0 0.0
    %1112 = vmatpush1.msra.mxu0 0.0
    %1113 = vmatprep.subr.mxu0 0.0
    %1114 = vmatpush1.msra.mxu0 %v1011
    %1115 = vmatprep.subr.mxu0 0.0
    %1116 = vmatpush1.msra.mxu0 %v1010
    %1117 = vmatprep.subr.mxu0 0.0
    %1118 = vmatpush1.msra.mxu0 %v1009
    %1119 = vmatprep.subr.mxu0 0.0
    %1120 = vmatpush1.msra.mxu0 %v1008
    %1121 = vmatprep.subr.mxu0 0.0
    %1122 = vmatpush2.msra.mxu0 0.0
    %1123 = vmatprep.subr.mxu0 0.0
    %1124 = vmatpush2.msra.mxu0 0.0
    %1125 = vmatprep.subr.mxu0 0.0
    %1126 = vmatpush2.msra.mxu0 0.0
    %1127 = vmatprep.subr.mxu0 0.0
    %1128 = vmatpush2.msra.mxu0 0.0
    %1129 = vmatprep.subr.mxu0 0.0
    %1130 = vmatpush2.msra.mxu0 0.0
    %1131 = vmatprep.subr.mxu0 0.0
    %1132 = vmatpush2.msra.mxu0 0.0
    %1133 = vmatprep.subr.mxu0 0.0
    %1134 = vmatpush2.msra.mxu0 0.0
    %1135 = vmatprep.subr.mxu0 0.0
    %1136 = vmatpush2.msra.mxu0 0.0
    %1137 = vmatprep.subr.mxu0 0.0
    %1138 = vmatpush2.msra.mxu0 0.0
    %1139 = vmatprep.subr.mxu0 0.0
    %1140 = vmatpush2.msra.mxu0 0.0
    %1141 = vmatprep.subr.mxu0 0.0
    %1142 = vmatpush2.msra.mxu0 0.0
    %1143 = vmatprep.subr.mxu0 0.0
    %1144 = vmatpush2.msra.mxu0 0.0
    %1145 = vmatprep.subr.mxu0 0.0
    %1146 = vmatpush2.msra.mxu0 0.0
    %1147 = vmatprep.subr.mxu0 0.0
    %1148 = vmatpush2.msra.mxu0 0.0
    %1149 = vmatprep.subr.mxu0 0.0
    %1150 = vmatpush2.msra.mxu0 0.0
    %1151 = vmatprep.subr.mxu0 0.0
    %1152 = vmatpush2.msra.mxu0 0.0
    %1153 = vmatprep.mubr.f32.mxu0 0.0
    %1154 = vmatmul.mubr.f32.gmra.mxu0 %v1087
    %v1155 = vpop.f32.mrf.mxu0
    %v1156 = vadd.f32 %v1083, %v1155
    %v1157 = vpop.f32.mrf.mxu0
    %1158 = vdwg.mxu0
    %v1159 = vld [vmem:[%s4] sm:$0x1]
    %v1161 = vlaneseq
    %v1162 = vshrl.u32 %v1161, 7
    %v1163 = vsub.s32 0, %v1162
    %v1164 = vrot.slane %v1159, %v1163
    %v1166 = vadd.f32 %v1156, %v1164
    %v1167 = vxor.u32 %v1166, 2147483648
    %v1168 = vmul.f32 %v1167, 1.442695
    %v1169 = vpow.pop %v1168
    %v1170 = vadd.f32 %v1169, 1.0
    %v1171 = vrcp.pop %v1170
    %v1172 = vmul.f32 1.0, %v1171
    %1174 = vrot.lane.b32.xlu0 %v1166, 32
    %v1175 = vpop.permute.xlu0 %1174
    %v1177 = vmul.f32 %v1172, %v1175
    %1179 = vrot.lane.b32.xlu0 %v1177, 64
    %v1180 = vpop.permute.xlu0 %1179
    %v1182 = vadd.f32 %v1166, %v1180
    %v1183 = vtanh.pop %v1182
    %v1184 = vsub.f32 1.0, %v1172
    %1186 = vrot.lane.b32.xlu0 %v1183, 96
    %v1187 = vpop.permute.xlu0 %1186
    %v1189 = vmul.f32 %v1184, %v1187
    %v1190 = vmul.f32 %v1172, %v813
    %v1191 = vadd.f32 %v1189, %v1190
    %v1192 = vld [vmem:[%s429] sm:$0xff]
    %v1193 = vld [vmem:[%s429 + $0x8] sm:$0xff]
    %v1194 = vld [vmem:[%s429 + $0x10] sm:$0xff]
    %v1195 = vld [vmem:[%s429 + $0x18] sm:$0xff]
    %v1196 = vld [vmem:[%s434] sm:$0xff]
    %v1197 = vld [vmem:[%s434 + $0x8] sm:$0xff]
    %v1198 = vld [vmem:[%s434 + $0x10] sm:$0xff]
    %v1199 = vld [vmem:[%s434 + $0x18] sm:$0xff]
    %v1200 = vsel %vm226, %v1004, 0
    %1202 = vmatprep.subr.mxu0 0.0
    %1203 = vmatpush1.msra.mxu0 0.0
    %1204 = vmatprep.subr.mxu0 0.0
    %1205 = vmatpush1.msra.mxu0 0.0
    %1206 = vmatprep.subr.mxu0 0.0
    %1207 = vmatpush1.msra.mxu0 0.0
    %1208 = vmatprep.subr.mxu0 0.0
    %1209 = vmatpush1.msra.mxu0 0.0
    %1210 = vmatprep.subr.mxu0 0.0
    %1211 = vmatpush1.msra.mxu0 0.0
    %1212 = vmatprep.subr.mxu0 0.0
    %1213 = vmatpush1.msra.mxu0 0.0
    %1214 = vmatprep.subr.mxu0 0.0
    %1215 = vmatpush1.msra.mxu0 0.0
    %1216 = vmatprep.subr.mxu0 0.0
    %1217 = vmatpush1.msra.mxu0 0.0
    %1218 = vmatprep.subr.mxu0 0.0
    %1219 = vmatpush1.msra.mxu0 0.0
    %1220 = vmatprep.subr.mxu0 0.0
    %1221 = vmatpush1.msra.mxu0 0.0
    %1222 = vmatprep.subr.mxu0 0.0
    %1223 = vmatpush1.msra.mxu0 0.0
    %1224 = vmatprep.subr.mxu0 0.0
    %1225 = vmatpush1.msra.mxu0 0.0
    %1226 = vmatprep.subr.mxu0 0.0
    %1227 = vmatpush1.msra.mxu0 %v1199
    %1228 = vmatprep.subr.mxu0 0.0
    %1229 = vmatpush1.msra.mxu0 %v1198
    %1230 = vmatprep.subr.mxu0 0.0
    %1231 = vmatpush1.msra.mxu0 %v1197
    %1232 = vmatprep.subr.mxu0 0.0
    %1233 = vmatpush1.msra.mxu0 %v1196
    %1234 = vmatprep.subr.mxu0 0.0
    %1235 = vmatpush2.msra.mxu0 0.0
    %1236 = vmatprep.subr.mxu0 0.0
    %1237 = vmatpush2.msra.mxu0 0.0
    %1238 = vmatprep.subr.mxu0 0.0
    %1239 = vmatpush2.msra.mxu0 0.0
    %1240 = vmatprep.subr.mxu0 0.0
    %1241 = vmatpush2.msra.mxu0 0.0
    %1242 = vmatprep.subr.mxu0 0.0
    %1243 = vmatpush2.msra.mxu0 0.0
    %1244 = vmatprep.subr.mxu0 0.0
    %1245 = vmatpush2.msra.mxu0 0.0
    %1246 = vmatprep.subr.mxu0 0.0
    %1247 = vmatpush2.msra.mxu0 0.0
    %1248 = vmatprep.subr.mxu0 0.0
    %1249 = vmatpush2.msra.mxu0 0.0
    %1250 = vmatprep.subr.mxu0 0.0
    %1251 = vmatpush2.msra.mxu0 0.0
    %1252 = vmatprep.subr.mxu0 0.0
    %1253 = vmatpush2.msra.mxu0 0.0
    %1254 = vmatprep.subr.mxu0 0.0
    %1255 = vmatpush2.msra.mxu0 0.0
    %1256 = vmatprep.subr.mxu0 0.0
    %1257 = vmatpush2.msra.mxu0 0.0
    %1258 = vmatprep.subr.mxu0 0.0
    %1259 = vmatpush2.msra.mxu0 0.0
    %1260 = vmatprep.subr.mxu0 0.0
    %1261 = vmatpush2.msra.mxu0 0.0
    %1262 = vmatprep.subr.mxu0 0.0
    %1263 = vmatpush2.msra.mxu0 0.0
    %1264 = vmatprep.subr.mxu0 0.0
    %1265 = vmatpush2.msra.mxu0 0.0
    %1266 = vmatprep.mubr.f32.mxu0 0.0
    %1267 = vmatmul.mubr.f32.gmra.mxu0 %v1200
    %v1268 = vpop.f32.mrf.mxu0
    %v1269 = vadd.f32 0.0, %v1268
    %v1270 = vpop.f32.mrf.mxu0
    %1271 = vdwg.mxu0
    %1273 = vrot.lane.b32.xlu0 %v1191, 96
    %v1274 = vpop.permute.xlu0 %1273
    %v1275 = vsel %vm226, %v1274, 0
    %1277 = vmatprep.subr.mxu0 0.0
    %1278 = vmatpush1.msra.mxu0 0.0
    %1279 = vmatprep.subr.mxu0 0.0
    %1280 = vmatpush1.msra.mxu0 0.0
    %1281 = vmatprep.subr.mxu0 0.0
    %1282 = vmatpush1.msra.mxu0 0.0
    %1283 = vmatprep.subr.mxu0 0.0
    %1284 = vmatpush1.msra.mxu0 0.0
    %1285 = vmatprep.subr.mxu0 0.0
    %1286 = vmatpush1.msra.mxu0 0.0
    %1287 = vmatprep.subr.mxu0 0.0
    %1288 = vmatpush1.msra.mxu0 0.0
    %1289 = vmatprep.subr.mxu0 0.0
    %1290 = vmatpush1.msra.mxu0 0.0
    %1291 = vmatprep.subr.mxu0 0.0
    %1292 = vmatpush1.msra.mxu0 0.0
    %1293 = vmatprep.subr.mxu0 0.0
    %1294 = vmatpush1.msra.mxu0 0.0
    %1295 = vmatprep.subr.mxu0 0.0
    %1296 = vmatpush1.msra.mxu0 0.0
    %1297 = vmatprep.subr.mxu0 0.0
    %1298 = vmatpush1.msra.mxu0 0.0
    %1299 = vmatprep.subr.mxu0 0.0
    %1300 = vmatpush1.msra.mxu0 0.0
    %1301 = vmatprep.subr.mxu0 0.0
    %1302 = vmatpush1.msra.mxu0 %v1195
    %1303 = vmatprep.subr.mxu0 0.0
    %1304 = vmatpush1.msra.mxu0 %v1194
    %1305 = vmatprep.subr.mxu0 0.0
    %1306 = vmatpush1.msra.mxu0 %v1193
    %1307 = vmatprep.subr.mxu0 0.0
    %1308 = vmatpush1.msra.mxu0 %v1192
    %1309 = vmatprep.subr.mxu0 0.0
    %1310 = vmatpush2.msra.mxu0 0.0
    %1311 = vmatprep.subr.mxu0 0.0
    %1312 = vmatpush2.msra.mxu0 0.0
    %1313 = vmatprep.subr.mxu0 0.0
    %1314 = vmatpush2.msra.mxu0 0.0
    %1315 = vmatprep.subr.mxu0 0.0
    %1316 = vmatpush2.msra.mxu0 0.0
    %1317 = vmatprep.subr.mxu0 0.0
    %1318 = vmatpush2.msra.mxu0 0.0
    %1319 = vmatprep.subr.mxu0 0.0
    %1320 = vmatpush2.msra.mxu0 0.0
    %1321 = vmatprep.subr.mxu0 0.0
    %1322 = vmatpush2.msra.mxu0 0.0
    %1323 = vmatprep.subr.mxu0 0.0
    %1324 = vmatpush2.msra.mxu0 0.0
    %1325 = vmatprep.subr.mxu0 0.0
    %1326 = vmatpush2.msra.mxu0 0.0
    %1327 = vmatprep.subr.mxu0 0.0
    %1328 = vmatpush2.msra.mxu0 0.0
    %1329 = vmatprep.subr.mxu0 0.0
    %1330 = vmatpush2.msra.mxu0 0.0
    %1331 = vmatprep.subr.mxu0 0.0
    %1332 = vmatpush2.msra.mxu0 0.0
    %1333 = vmatprep.subr.mxu0 0.0
    %1334 = vmatpush2.msra.mxu0 0.0
    %1335 = vmatprep.subr.mxu0 0.0
    %1336 = vmatpush2.msra.mxu0 0.0
    %1337 = vmatprep.subr.mxu0 0.0
    %1338 = vmatpush2.msra.mxu0 0.0
    %1339 = vmatprep.subr.mxu0 0.0
    %1340 = vmatpush2.msra.mxu0 0.0
    %1341 = vmatprep.mubr.f32.mxu0 0.0
    %1342 = vmatmul.mubr.f32.gmra.mxu0 %v1275
    %v1343 = vpop.f32.mrf.mxu0
    %v1344 = vadd.f32 %v1269, %v1343
    %v1345 = vpop.f32.mrf.mxu0
    %1346 = vdwg.mxu0
    %v1347 = vld [vmem:[%s587] sm:$0x1]
    %v1349 = vlaneseq
    %v1350 = vshrl.u32 %v1349, 7
    %v1351 = vsub.s32 0, %v1350
    %v1352 = vrot.slane %v1347, %v1351
    %v1354 = vadd.f32 %v1344, %v1352
    %v1355 = vxor.u32 %v1354, 2147483648
    %v1356 = vmul.f32 %v1355, 1.442695
    %v1357 = vpow.pop %v1356
    %v1358 = vadd.f32 %v1357, 1.0
    %v1359 = vrcp.pop %v1358
    %v1360 = vmul.f32 1.0, %v1359
    %1362 = vrot.lane.b32.xlu0 %v1354, 32
    %v1363 = vpop.permute.xlu0 %1362
    %v1365 = vmul.f32 %v1360, %v1363
    %1367 = vrot.lane.b32.xlu0 %v1365, 64
    %v1368 = vpop.permute.xlu0 %1367
    %v1370 = vadd.f32 %v1354, %v1368
    %v1371 = vtanh.pop %v1370
    %v1372 = vsub.f32 1.0, %v1360
    %1374 = vrot.lane.b32.xlu0 %v1371, 96
    %v1375 = vpop.permute.xlu0 %1374
    %v1377 = vmul.f32 %v1372, %v1375
    %v1378 = vmul.f32 %v1360, %v1001
    %v1379 = vadd.f32 %v1377, %v1378
    %1381 = vrot.lane.b32.xlu0 %v1379, 96
    %v1382 = vpop.permute.xlu0 %1381
    %1384 = vst.msk [vmem:[#allocation3 + $0x10] sm:$0xff] %vm226, %v1382
    %v1385 = vld [vmem:[#allocation2 + $0x18] sm:$0xff]
    %v1386 = vld [vmem:[%s2] sm:$0xff]
    %v1387 = vld [vmem:[%s2 + $0x8] sm:$0xff]
    %v1388 = vld [vmem:[%s2 + $0x10] sm:$0xff]
    %v1389 = vld [vmem:[%s2 + $0x18] sm:$0xff]
    %v1390 = vld [vmem:[%s3] sm:$0xff]
    %v1391 = vld [vmem:[%s3 + $0x8] sm:$0xff]
    %v1392 = vld [vmem:[%s3 + $0x10] sm:$0xff]
    %v1393 = vld [vmem:[%s3 + $0x18] sm:$0xff]
    %1394 = vmatprep.subr.mxu0 0.0
    %1395 = vmatpush1.msra.mxu0 0.0
    %1396 = vmatprep.subr.mxu0 0.0
    %1397 = vmatpush1.msra.mxu0 0.0
    %1398 = vmatprep.subr.mxu0 0.0
    %1399 = vmatpush1.msra.mxu0 0.0
    %1400 = vmatprep.subr.mxu0 0.0
    %1401 = vmatpush1.msra.mxu0 0.0
    %1402 = vmatprep.subr.mxu0 0.0
    %1403 = vmatpush1.msra.mxu0 0.0
    %1404 = vmatprep.subr.mxu0 0.0
    %1405 = vmatpush1.msra.mxu0 0.0
    %1406 = vmatprep.subr.mxu0 0.0
    %1407 = vmatpush1.msra.mxu0 0.0
    %1408 = vmatprep.subr.mxu0 0.0
    %1409 = vmatpush1.msra.mxu0 0.0
    %1410 = vmatprep.subr.mxu0 0.0
    %1411 = vmatpush1.msra.mxu0 0.0
    %1412 = vmatprep.subr.mxu0 0.0
    %1413 = vmatpush1.msra.mxu0 0.0
    %1414 = vmatprep.subr.mxu0 0.0
    %1415 = vmatpush1.msra.mxu0 0.0
    %1416 = vmatprep.subr.mxu0 0.0
    %1417 = vmatpush1.msra.mxu0 0.0
    %1418 = vmatprep.subr.mxu0 0.0
    %1419 = vmatpush1.msra.mxu0 %v1393
    %1420 = vmatprep.subr.mxu0 0.0
    %1421 = vmatpush1.msra.mxu0 %v1392
    %1422 = vmatprep.subr.mxu0 0.0
    %1423 = vmatpush1.msra.mxu0 %v1391
    %1424 = vmatprep.subr.mxu0 0.0
    %1425 = vmatpush1.msra.mxu0 %v1390
    %1426 = vmatprep.subr.mxu0 0.0
    %1427 = vmatpush2.msra.mxu0 0.0
    %1428 = vmatprep.subr.mxu0 0.0
    %1429 = vmatpush2.msra.mxu0 0.0
    %1430 = vmatprep.subr.mxu0 0.0
    %1431 = vmatpush2.msra.mxu0 0.0
    %1432 = vmatprep.subr.mxu0 0.0
    %1433 = vmatpush2.msra.mxu0 0.0
    %1434 = vmatprep.subr.mxu0 0.0
    %1435 = vmatpush2.msra.mxu0 0.0
    %1436 = vmatprep.subr.mxu0 0.0
    %1437 = vmatpush2.msra.mxu0 0.0
    %1438 = vmatprep.subr.mxu0 0.0
    %1439 = vmatpush2.msra.mxu0 0.0
    %1440 = vmatprep.subr.mxu0 0.0
    %1441 = vmatpush2.msra.mxu0 0.0
    %1442 = vmatprep.subr.mxu0 0.0
    %1443 = vmatpush2.msra.mxu0 0.0
    %1444 = vmatprep.subr.mxu0 0.0
    %1445 = vmatpush2.msra.mxu0 0.0
    %1446 = vmatprep.subr.mxu0 0.0
    %1447 = vmatpush2.msra.mxu0 0.0
    %1448 = vmatprep.subr.mxu0 0.0
    %1449 = vmatpush2.msra.mxu0 0.0
    %1450 = vmatprep.subr.mxu0 0.0
    %1451 = vmatpush2.msra.mxu0 0.0
    %1452 = vmatprep.subr.mxu0 0.0
    %1453 = vmatpush2.msra.mxu0 0.0
    %1454 = vmatprep.subr.mxu0 0.0
    %1455 = vmatpush2.msra.mxu0 0.0
    %1456 = vmatprep.subr.mxu0 0.0
    %1457 = vmatpush2.msra.mxu0 0.0
    %1458 = vmatprep.mubr.f32.mxu0 0.0
    %1459 = vmatmul.mubr.f32.gmra.mxu0 %v1275
    %v1460 = vpop.f32.mrf.mxu0
    %v1461 = vadd.f32 0.0, %v1460
    %v1462 = vpop.f32.mrf.mxu0
    %1463 = vdwg.mxu0
    %v1465 = vsel %vm226, %v1385, 0
    %1467 = vmatprep.subr.mxu0 0.0
    %1468 = vmatpush1.msra.mxu0 0.0
    %1469 = vmatprep.subr.mxu0 0.0
    %1470 = vmatpush1.msra.mxu0 0.0
    %1471 = vmatprep.subr.mxu0 0.0
    %1472 = vmatpush1.msra.mxu0 0.0
    %1473 = vmatprep.subr.mxu0 0.0
    %1474 = vmatpush1.msra.mxu0 0.0
    %1475 = vmatprep.subr.mxu0 0.0
    %1476 = vmatpush1.msra.mxu0 0.0
    %1477 = vmatprep.subr.mxu0 0.0
    %1478 = vmatpush1.msra.mxu0 0.0
    %1479 = vmatprep.subr.mxu0 0.0
    %1480 = vmatpush1.msra.mxu0 0.0
    %1481 = vmatprep.subr.mxu0 0.0
    %1482 = vmatpush1.msra.mxu0 0.0
    %1483 = vmatprep.subr.mxu0 0.0
    %1484 = vmatpush1.msra.mxu0 0.0
    %1485 = vmatprep.subr.mxu0 0.0
    %1486 = vmatpush1.msra.mxu0 0.0
    %1487 = vmatprep.subr.mxu0 0.0
    %1488 = vmatpush1.msra.mxu0 0.0
    %1489 = vmatprep.subr.mxu0 0.0
    %1490 = vmatpush1.msra.mxu0 0.0
    %1491 = vmatprep.subr.mxu0 0.0
    %1492 = vmatpush1.msra.mxu0 %v1389
    %1493 = vmatprep.subr.mxu0 0.0
    %1494 = vmatpush1.msra.mxu0 %v1388
    %1495 = vmatprep.subr.mxu0 0.0
    %1496 = vmatpush1.msra.mxu0 %v1387
    %1497 = vmatprep.subr.mxu0 0.0
    %1498 = vmatpush1.msra.mxu0 %v1386
    %1499 = vmatprep.subr.mxu0 0.0
    %1500 = vmatpush2.msra.mxu0 0.0
    %1501 = vmatprep.subr.mxu0 0.0
    %1502 = vmatpush2.msra.mxu0 0.0
    %1503 = vmatprep.subr.mxu0 0.0
    %1504 = vmatpush2.msra.mxu0 0.0
    %1505 = vmatprep.subr.mxu0 0.0
    %1506 = vmatpush2.msra.mxu0 0.0
    %1507 = vmatprep.subr.mxu0 0.0
    %1508 = vmatpush2.msra.mxu0 0.0
    %1509 = vmatprep.subr.mxu0 0.0
    %1510 = vmatpush2.msra.mxu0 0.0
    %1511 = vmatprep.subr.mxu0 0.0
    %1512 = vmatpush2.msra.mxu0 0.0
    %1513 = vmatprep.subr.mxu0 0.0
    %1514 = vmatpush2.msra.mxu0 0.0
    %1515 = vmatprep.subr.mxu0 0.0
    %1516 = vmatpush2.msra.mxu0 0.0
    %1517 = vmatprep.subr.mxu0 0.0
    %1518 = vmatpush2.msra.mxu0 0.0
    %1519 = vmatprep.subr.mxu0 0.0
    %1520 = vmatpush2.msra.mxu0 0.0
    %1521 = vmatprep.subr.mxu0 0.0
    %1522 = vmatpush2.msra.mxu0 0.0
    %1523 = vmatprep.subr.mxu0 0.0
    %1524 = vmatpush2.msra.mxu0 0.0
    %1525 = vmatprep.subr.mxu0 0.0
    %1526 = vmatpush2.msra.mxu0 0.0
    %1527 = vmatprep.subr.mxu0 0.0
    %1528 = vmatpush2.msra.mxu0 0.0
    %1529 = vmatprep.subr.mxu0 0.0
    %1530 = vmatpush2.msra.mxu0 0.0
    %1531 = vmatprep.mubr.f32.mxu0 0.0
    %1532 = vmatmul.mubr.f32.gmra.mxu0 %v1465
    %v1533 = vpop.f32.mrf.mxu0
    %v1534 = vadd.f32 %v1461, %v1533
    %v1535 = vpop.f32.mrf.mxu0
    %1536 = vdwg.mxu0
    %v1537 = vld [vmem:[%s4] sm:$0x1]
    %v1539 = vlaneseq
    %v1540 = vshrl.u32 %v1539, 7
    %v1541 = vsub.s32 0, %v1540
    %v1542 = vrot.slane %v1537, %v1541
    %v1544 = vadd.f32 %v1534, %v1542
    %v1545 = vxor.u32 %v1544, 2147483648
    %v1546 = vmul.f32 %v1545, 1.442695
    %v1547 = vpow.pop %v1546
    %v1548 = vadd.f32 %v1547, 1.0
    %v1549 = vrcp.pop %v1548
    %v1550 = vmul.f32 1.0, %v1549
    %1552 = vrot.lane.b32.xlu0 %v1544, 32
    %v1553 = vpop.permute.xlu0 %1552
    %v1555 = vmul.f32 %v1550, %v1553
    %1557 = vrot.lane.b32.xlu0 %v1555, 64
    %v1558 = vpop.permute.xlu0 %1557
    %v1560 = vadd.f32 %v1544, %v1558
    %v1561 = vtanh.pop %v1560
    %v1562 = vsub.f32 1.0, %v1550
    %1564 = vrot.lane.b32.xlu0 %v1561, 96
    %v1565 = vpop.permute.xlu0 %1564
    %v1567 = vmul.f32 %v1562, %v1565
    %v1568 = vmul.f32 %v1550, %v1191
    %v1569 = vadd.f32 %v1567, %v1568
    %v1570 = vld [vmem:[%s429] sm:$0xff]
    %v1571 = vld [vmem:[%s429 + $0x8] sm:$0xff]
    %v1572 = vld [vmem:[%s429 + $0x10] sm:$0xff]
    %v1573 = vld [vmem:[%s429 + $0x18] sm:$0xff]
    %v1574 = vld [vmem:[%s434] sm:$0xff]
    %v1575 = vld [vmem:[%s434 + $0x8] sm:$0xff]
    %v1576 = vld [vmem:[%s434 + $0x10] sm:$0xff]
    %v1577 = vld [vmem:[%s434 + $0x18] sm:$0xff]
    %v1578 = vsel %vm226, %v1382, 0
    %1580 = vmatprep.subr.mxu0 0.0
    %1581 = vmatpush1.msra.mxu0 0.0
    %1582 = vmatprep.subr.mxu0 0.0
    %1583 = vmatpush1.msra.mxu0 0.0
    %1584 = vmatprep.subr.mxu0 0.0
    %1585 = vmatpush1.msra.mxu0 0.0
    %1586 = vmatprep.subr.mxu0 0.0
    %1587 = vmatpush1.msra.mxu0 0.0
    %1588 = vmatprep.subr.mxu0 0.0
    %1589 = vmatpush1.msra.mxu0 0.0
    %1590 = vmatprep.subr.mxu0 0.0
    %1591 = vmatpush1.msra.mxu0 0.0
    %1592 = vmatprep.subr.mxu0 0.0
    %1593 = vmatpush1.msra.mxu0 0.0
    %1594 = vmatprep.subr.mxu0 0.0
    %1595 = vmatpush1.msra.mxu0 0.0
    %1596 = vmatprep.subr.mxu0 0.0
    %1597 = vmatpush1.msra.mxu0 0.0
    %1598 = vmatprep.subr.mxu0 0.0
    %1599 = vmatpush1.msra.mxu0 0.0
    %1600 = vmatprep.subr.mxu0 0.0
    %1601 = vmatpush1.msra.mxu0 0.0
    %1602 = vmatprep.subr.mxu0 0.0
    %1603 = vmatpush1.msra.mxu0 0.0
    %1604 = vmatprep.subr.mxu0 0.0
    %1605 = vmatpush1.msra.mxu0 %v1577
    %1606 = vmatprep.subr.mxu0 0.0
    %1607 = vmatpush1.msra.mxu0 %v1576
    %1608 = vmatprep.subr.mxu0 0.0
    %1609 = vmatpush1.msra.mxu0 %v1575
    %1610 = vmatprep.subr.mxu0 0.0
    %1611 = vmatpush1.msra.mxu0 %v1574
    %1612 = vmatprep.subr.mxu0 0.0
    %1613 = vmatpush2.msra.mxu0 0.0
    %1614 = vmatprep.subr.mxu0 0.0
    %1615 = vmatpush2.msra.mxu0 0.0
    %1616 = vmatprep.subr.mxu0 0.0
    %1617 = vmatpush2.msra.mxu0 0.0
    %1618 = vmatprep.subr.mxu0 0.0
    %1619 = vmatpush2.msra.mxu0 0.0
    %1620 = vmatprep.subr.mxu0 0.0
    %1621 = vmatpush2.msra.mxu0 0.0
    %1622 = vmatprep.subr.mxu0 0.0
    %1623 = vmatpush2.msra.mxu0 0.0
    %1624 = vmatprep.subr.mxu0 0.0
    %1625 = vmatpush2.msra.mxu0 0.0
    %1626 = vmatprep.subr.mxu0 0.0
    %1627 = vmatpush2.msra.mxu0 0.0
    %1628 = vmatprep.subr.mxu0 0.0
    %1629 = vmatpush2.msra.mxu0 0.0
    %1630 = vmatprep.subr.mxu0 0.0
    %1631 = vmatpush2.msra.mxu0 0.0
    %1632 = vmatprep.subr.mxu0 0.0
    %1633 = vmatpush2.msra.mxu0 0.0
    %1634 = vmatprep.subr.mxu0 0.0
    %1635 = vmatpush2.msra.mxu0 0.0
    %1636 = vmatprep.subr.mxu0 0.0
    %1637 = vmatpush2.msra.mxu0 0.0
    %1638 = vmatprep.subr.mxu0 0.0
    %1639 = vmatpush2.msra.mxu0 0.0
    %1640 = vmatprep.subr.mxu0 0.0
    %1641 = vmatpush2.msra.mxu0 0.0
    %1642 = vmatprep.subr.mxu0 0.0
    %1643 = vmatpush2.msra.mxu0 0.0
    %1644 = vmatprep.mubr.f32.mxu0 0.0
    %1645 = vmatmul.mubr.f32.gmra.mxu0 %v1578
    %v1646 = vpop.f32.mrf.mxu0
    %v1647 = vadd.f32 0.0, %v1646
    %v1648 = vpop.f32.mrf.mxu0
    %1649 = vdwg.mxu0
    %1651 = vrot.lane.b32.xlu0 %v1569, 96
    %v1652 = vpop.permute.xlu0 %1651
    %v1653 = vsel %vm226, %v1652, 0
    %1655 = vmatprep.subr.mxu0 0.0
    %1656 = vmatpush1.msra.mxu0 0.0
    %1657 = vmatprep.subr.mxu0 0.0
    %1658 = vmatpush1.msra.mxu0 0.0
    %1659 = vmatprep.subr.mxu0 0.0
    %1660 = vmatpush1.msra.mxu0 0.0
    %1661 = vmatprep.subr.mxu0 0.0
    %1662 = vmatpush1.msra.mxu0 0.0
    %1663 = vmatprep.subr.mxu0 0.0
    %1664 = vmatpush1.msra.mxu0 0.0
    %1665 = vmatprep.subr.mxu0 0.0
    %1666 = vmatpush1.msra.mxu0 0.0
    %1667 = vmatprep.subr.mxu0 0.0
    %1668 = vmatpush1.msra.mxu0 0.0
    %1669 = vmatprep.subr.mxu0 0.0
    %1670 = vmatpush1.msra.mxu0 0.0
    %1671 = vmatprep.subr.mxu0 0.0
    %1672 = vmatpush1.msra.mxu0 0.0
    %1673 = vmatprep.subr.mxu0 0.0
    %1674 = vmatpush1.msra.mxu0 0.0
    %1675 = vmatprep.subr.mxu0 0.0
    %1676 = vmatpush1.msra.mxu0 0.0
    %1677 = vmatprep.subr.mxu0 0.0
    %1678 = vmatpush1.msra.mxu0 0.0
    %1679 = vmatprep.subr.mxu0 0.0
    %1680 = vmatpush1.msra.mxu0 %v1573
    %1681 = vmatprep.subr.mxu0 0.0
    %1682 = vmatpush1.msra.mxu0 %v1572
    %1683 = vmatprep.subr.mxu0 0.0
    %1684 = vmatpush1.msra.mxu0 %v1571
    %1685 = vmatprep.subr.mxu0 0.0
    %1686 = vmatpush1.msra.mxu0 %v1570
    %1687 = vmatprep.subr.mxu0 0.0
    %1688 = vmatpush2.msra.mxu0 0.0
    %1689 = vmatprep.subr.mxu0 0.0
    %1690 = vmatpush2.msra.mxu0 0.0
    %1691 = vmatprep.subr.mxu0 0.0
    %1692 = vmatpush2.msra.mxu0 0.0
    %1693 = vmatprep.subr.mxu0 0.0
    %1694 = vmatpush2.msra.mxu0 0.0
    %1695 = vmatprep.subr.mxu0 0.0
    %1696 = vmatpush2.msra.mxu0 0.0
    %1697 = vmatprep.subr.mxu0 0.0
    %1698 = vmatpush2.msra.mxu0 0.0
    %1699 = vmatprep.subr.mxu0 0.0
    %1700 = vmatpush2.msra.mxu0 0.0
    %1701 = vmatprep.subr.mxu0 0.0
    %1702 = vmatpush2.msra.mxu0 0.0
    %1703 = vmatprep.subr.mxu0 0.0
    %1704 = vmatpush2.msra.mxu0 0.0
    %1705 = vmatprep.subr.mxu0 0.0
    %1706 = vmatpush2.msra.mxu0 0.0
    %1707 = vmatprep.subr.mxu0 0.0
    %1708 = vmatpush2.msra.mxu0 0.0
    %1709 = vmatprep.subr.mxu0 0.0
    %1710 = vmatpush2.msra.mxu0 0.0
    %1711 = vmatprep.subr.mxu0 0.0
    %1712 = vmatpush2.msra.mxu0 0.0
    %1713 = vmatprep.subr.mxu0 0.0
    %1714 = vmatpush2.msra.mxu0 0.0
    %1715 = vmatprep.subr.mxu0 0.0
    %1716 = vmatpush2.msra.mxu0 0.0
    %1717 = vmatprep.subr.mxu0 0.0
    %1718 = vmatpush2.msra.mxu0 0.0
    %1719 = vmatprep.mubr.f32.mxu0 0.0
    %1720 = vmatmul.mubr.f32.gmra.mxu0 %v1653
    %v1721 = vpop.f32.mrf.mxu0
    %v1722 = vadd.f32 %v1647, %v1721
    %v1723 = vpop.f32.mrf.mxu0
    %1724 = vdwg.mxu0
    %v1725 = vld [vmem:[%s587] sm:$0x1]
    %v1727 = vlaneseq
    %v1728 = vshrl.u32 %v1727, 7
    %v1729 = vsub.s32 0, %v1728
    %v1730 = vrot.slane %v1725, %v1729
    %v1732 = vadd.f32 %v1722, %v1730
    %v1733 = vxor.u32 %v1732, 2147483648
    %v1734 = vmul.f32 %v1733, 1.442695
    %v1735 = vpow.pop %v1734
    %v1736 = vadd.f32 %v1735, 1.0
    %v1737 = vrcp.pop %v1736
    %v1738 = vmul.f32 1.0, %v1737
    %1740 = vrot.lane.b32.xlu0 %v1732, 32
    %v1741 = vpop.permute.xlu0 %1740
    %v1743 = vmul.f32 %v1738, %v1741
    %1745 = vrot.lane.b32.xlu0 %v1743, 64
    %v1746 = vpop.permute.xlu0 %1745
    %v1748 = vadd.f32 %v1732, %v1746
    %v1749 = vtanh.pop %v1748
    %v1750 = vsub.f32 1.0, %v1738
    %1752 = vrot.lane.b32.xlu0 %v1749, 96
    %v1753 = vpop.permute.xlu0 %1752
    %v1755 = vmul.f32 %v1750, %v1753
    %v1756 = vmul.f32 %v1738, %v1379
    %v1757 = vadd.f32 %v1755, %v1756
    %1759 = vrot.lane.b32.xlu0 %v1757, 96
    %v1760 = vpop.permute.xlu0 %1759
    %1762 = vst.msk [vmem:[#allocation3 + $0x18] sm:$0xff] %vm226, %v1760
    %v1763 = vld [vmem:[#allocation2 + $0x20] sm:$0xff]
    %v1764 = vld [vmem:[%s2] sm:$0xff]
    %v1765 = vld [vmem:[%s2 + $0x8] sm:$0xff]
    %v1766 = vld [vmem:[%s2 + $0x10] sm:$0xff]
    %v1767 = vld [vmem:[%s2 + $0x18] sm:$0xff]
    %v1768 = vld [vmem:[%s3] sm:$0xff]
    %v1769 = vld [vmem:[%s3 + $0x8] sm:$0xff]
    %v1770 = vld [vmem:[%s3 + $0x10] sm:$0xff]
    %v1771 = vld [vmem:[%s3 + $0x18] sm:$0xff]
    %1772 = vmatprep.subr.mxu0 0.0
    %1773 = vmatpush1.msra.mxu0 0.0
    %1774 = vmatprep.subr.mxu0 0.0
    %1775 = vmatpush1.msra.mxu0 0.0
    %1776 = vmatprep.subr.mxu0 0.0
    %1777 = vmatpush1.msra.mxu0 0.0
    %1778 = vmatprep.subr.mxu0 0.0
    %1779 = vmatpush1.msra.mxu0 0.0
    %1780 = vmatprep.subr.mxu0 0.0
    %1781 = vmatpush1.msra.mxu0 0.0
    %1782 = vmatprep.subr.mxu0 0.0
    %1783 = vmatpush1.msra.mxu0 0.0
    %1784 = vmatprep.subr.mxu0 0.0
    %1785 = vmatpush1.msra.mxu0 0.0
    %1786 = vmatprep.subr.mxu0 0.0
    %1787 = vmatpush1.msra.mxu0 0.0
    %1788 = vmatprep.subr.mxu0 0.0
    %1789 = vmatpush1.msra.mxu0 0.0
    %1790 = vmatprep.subr.mxu0 0.0
    %1791 = vmatpush1.msra.mxu0 0.0
    %1792 = vmatprep.subr.mxu0 0.0
    %1793 = vmatpush1.msra.mxu0 0.0
    %1794 = vmatprep.subr.mxu0 0.0
    %1795 = vmatpush1.msra.mxu0 0.0
    %1796 = vmatprep.subr.mxu0 0.0
    %1797 = vmatpush1.msra.mxu0 %v1771
    %1798 = vmatprep.subr.mxu0 0.0
    %1799 = vmatpush1.msra.mxu0 %v1770
    %1800 = vmatprep.subr.mxu0 0.0
    %1801 = vmatpush1.msra.mxu0 %v1769
    %1802 = vmatprep.subr.mxu0 0.0
    %1803 = vmatpush1.msra.mxu0 %v1768
    %1804 = vmatprep.subr.mxu0 0.0
    %1805 = vmatpush2.msra.mxu0 0.0
    %1806 = vmatprep.subr.mxu0 0.0
    %1807 = vmatpush2.msra.mxu0 0.0
    %1808 = vmatprep.subr.mxu0 0.0
    %1809 = vmatpush2.msra.mxu0 0.0
    %1810 = vmatprep.subr.mxu0 0.0
    %1811 = vmatpush2.msra.mxu0 0.0
    %1812 = vmatprep.subr.mxu0 0.0
    %1813 = vmatpush2.msra.mxu0 0.0
    %1814 = vmatprep.subr.mxu0 0.0
    %1815 = vmatpush2.msra.mxu0 0.0
    %1816 = vmatprep.subr.mxu0 0.0
    %1817 = vmatpush2.msra.mxu0 0.0
    %1818 = vmatprep.subr.mxu0 0.0
    %1819 = vmatpush2.msra.mxu0 0.0
    %1820 = vmatprep.subr.mxu0 0.0
    %1821 = vmatpush2.msra.mxu0 0.0
    %1822 = vmatprep.subr.mxu0 0.0
    %1823 = vmatpush2.msra.mxu0 0.0
    %1824 = vmatprep.subr.mxu0 0.0
    %1825 = vmatpush2.msra.mxu0 0.0
    %1826 = vmatprep.subr.mxu0 0.0
    %1827 = vmatpush2.msra.mxu0 0.0
    %1828 = vmatprep.subr.mxu0 0.0
    %1829 = vmatpush2.msra.mxu0 0.0
    %1830 = vmatprep.subr.mxu0 0.0
    %1831 = vmatpush2.msra.mxu0 0.0
    %1832 = vmatprep.subr.mxu0 0.0
    %1833 = vmatpush2.msra.mxu0 0.0
    %1834 = vmatprep.subr.mxu0 0.0
    %1835 = vmatpush2.msra.mxu0 0.0
    %1836 = vmatprep.mubr.f32.mxu0 0.0
    %1837 = vmatmul.mubr.f32.gmra.mxu0 %v1653
    %v1838 = vpop.f32.mrf.mxu0
    %v1839 = vadd.f32 0.0, %v1838
    %v1840 = vpop.f32.mrf.mxu0
    %1841 = vdwg.mxu0
    %v1843 = vsel %vm226, %v1763, 0
    %1845 = vmatprep.subr.mxu0 0.0
    %1846 = vmatpush1.msra.mxu0 0.0
    %1847 = vmatprep.subr.mxu0 0.0
    %1848 = vmatpush1.msra.mxu0 0.0
    %1849 = vmatprep.subr.mxu0 0.0
    %1850 = vmatpush1.msra.mxu0 0.0
    %1851 = vmatprep.subr.mxu0 0.0
    %1852 = vmatpush1.msra.mxu0 0.0
    %1853 = vmatprep.subr.mxu0 0.0
    %1854 = vmatpush1.msra.mxu0 0.0
    %1855 = vmatprep.subr.mxu0 0.0
    %1856 = vmatpush1.msra.mxu0 0.0
    %1857 = vmatprep.subr.mxu0 0.0
    %1858 = vmatpush1.msra.mxu0 0.0
    %1859 = vmatprep.subr.mxu0 0.0
    %1860 = vmatpush1.msra.mxu0 0.0
    %1861 = vmatprep.subr.mxu0 0.0
    %1862 = vmatpush1.msra.mxu0 0.0
    %1863 = vmatprep.subr.mxu0 0.0
    %1864 = vmatpush1.msra.mxu0 0.0
    %1865 = vmatprep.subr.mxu0 0.0
    %1866 = vmatpush1.msra.mxu0 0.0
    %1867 = vmatprep.subr.mxu0 0.0
    %1868 = vmatpush1.msra.mxu0 0.0
    %1869 = vmatprep.subr.mxu0 0.0
    %1870 = vmatpush1.msra.mxu0 %v1767
    %1871 = vmatprep.subr.mxu0 0.0
    %1872 = vmatpush1.msra.mxu0 %v1766
    %1873 = vmatprep.subr.mxu0 0.0
    %1874 = vmatpush1.msra.mxu0 %v1765
    %1875 = vmatprep.subr.mxu0 0.0
    %1876 = vmatpush1.msra.mxu0 %v1764
    %1877 = vmatprep.subr.mxu0 0.0
    %1878 = vmatpush2.msra.mxu0 0.0
    %1879 = vmatprep.subr.mxu0 0.0
    %1880 = vmatpush2.msra.mxu0 0.0
    %1881 = vmatprep.subr.mxu0 0.0
    %1882 = vmatpush2.msra.mxu0 0.0
    %1883 = vmatprep.subr.mxu0 0.0
    %1884 = vmatpush2.msra.mxu0 0.0
    %1885 = vmatprep.subr.mxu0 0.0
    %1886 = vmatpush2.msra.mxu0 0.0
    %1887 = vmatprep.subr.mxu0 0.0
    %1888 = vmatpush2.msra.mxu0 0.0
    %1889 = vmatprep.subr.mxu0 0.0
    %1890 = vmatpush2.msra.mxu0 0.0
    %1891 = vmatprep.subr.mxu0 0.0
    %1892 = vmatpush2.msra.mxu0 0.0
    %1893 = vmatprep.subr.mxu0 0.0
    %1894 = vmatpush2.msra.mxu0 0.0
    %1895 = vmatprep.subr.mxu0 0.0
    %1896 = vmatpush2.msra.mxu0 0.0
    %1897 = vmatprep.subr.mxu0 0.0
    %1898 = vmatpush2.msra.mxu0 0.0
    %1899 = vmatprep.subr.mxu0 0.0
    %1900 = vmatpush2.msra.mxu0 0.0
    %1901 = vmatprep.subr.mxu0 0.0
    %1902 = vmatpush2.msra.mxu0 0.0
    %1903 = vmatprep.subr.mxu0 0.0
    %1904 = vmatpush2.msra.mxu0 0.0
    %1905 = vmatprep.subr.mxu0 0.0
    %1906 = vmatpush2.msra.mxu0 0.0
    %1907 = vmatprep.subr.mxu0 0.0
    %1908 = vmatpush2.msra.mxu0 0.0
    %1909 = vmatprep.mubr.f32.mxu0 0.0
    %1910 = vmatmul.mubr.f32.gmra.mxu0 %v1843
    %v1911 = vpop.f32.mrf.mxu0
    %v1912 = vadd.f32 %v1839, %v1911
    %v1913 = vpop.f32.mrf.mxu0
    %1914 = vdwg.mxu0
    %v1915 = vld [vmem:[%s4] sm:$0x1]
    %v1917 = vlaneseq
    %v1918 = vshrl.u32 %v1917, 7
    %v1919 = vsub.s32 0, %v1918
    %v1920 = vrot.slane %v1915, %v1919
    %v1922 = vadd.f32 %v1912, %v1920
    %v1923 = vxor.u32 %v1922, 2147483648
    %v1924 = vmul.f32 %v1923, 1.442695
    %v1925 = vpow.pop %v1924
    %v1926 = vadd.f32 %v1925, 1.0
    %v1927 = vrcp.pop %v1926
    %v1928 = vmul.f32 1.0, %v1927
    %1930 = vrot.lane.b32.xlu0 %v1922, 32
    %v1931 = vpop.permute.xlu0 %1930
    %v1933 = vmul.f32 %v1928, %v1931
    %1935 = vrot.lane.b32.xlu0 %v1933, 64
    %v1936 = vpop.permute.xlu0 %1935
    %v1938 = vadd.f32 %v1922, %v1936
    %v1939 = vtanh.pop %v1938
    %v1940 = vsub.f32 1.0, %v1928
    %1942 = vrot.lane.b32.xlu0 %v1939, 96
    %v1943 = vpop.permute.xlu0 %1942
    %v1945 = vmul.f32 %v1940, %v1943
    %v1946 = vmul.f32 %v1928, %v1569
    %v1947 = vadd.f32 %v1945, %v1946
    %v1948 = vld [vmem:[%s429] sm:$0xff]
    %v1949 = vld [vmem:[%s429 + $0x8] sm:$0xff]
    %v1950 = vld [vmem:[%s429 + $0x10] sm:$0xff]
    %v1951 = vld [vmem:[%s429 + $0x18] sm:$0xff]
    %v1952 = vld [vmem:[%s434] sm:$0xff]
    %v1953 = vld [vmem:[%s434 + $0x8] sm:$0xff]
    %v1954 = vld [vmem:[%s434 + $0x10] sm:$0xff]
    %v1955 = vld [vmem:[%s434 + $0x18] sm:$0xff]
    %v1956 = vsel %vm226, %v1760, 0
    %1958 = vmatprep.subr.mxu0 0.0
    %1959 = vmatpush1.msra.mxu0 0.0
    %1960 = vmatprep.subr.mxu0 0.0
    %1961 = vmatpush1.msra.mxu0 0.0
    %1962 = vmatprep.subr.mxu0 0.0
    %1963 = vmatpush1.msra.mxu0 0.0
    %1964 = vmatprep.subr.mxu0 0.0
    %1965 = vmatpush1.msra.mxu0 0.0
    %1966 = vmatprep.subr.mxu0 0.0
    %1967 = vmatpush1.msra.mxu0 0.0
    %1968 = vmatprep.subr.mxu0 0.0
    %1969 = vmatpush1.msra.mxu0 0.0
    %1970 = vmatprep.subr.mxu0 0.0
    %1971 = vmatpush1.msra.mxu0 0.0
    %1972 = vmatprep.subr.mxu0 0.0
    %1973 = vmatpush1.msra.mxu0 0.0
    %1974 = vmatprep.subr.mxu0 0.0
    %1975 = vmatpush1.msra.mxu0 0.0
    %1976 = vmatprep.subr.mxu0 0.0
    %1977 = vmatpush1.msra.mxu0 0.0
    %1978 = vmatprep.subr.mxu0 0.0
    %1979 = vmatpush1.msra.mxu0 0.0
    %1980 = vmatprep.subr.mxu0 0.0
    %1981 = vmatpush1.msra.mxu0 0.0
    %1982 = vmatprep.subr.mxu0 0.0
    %1983 = vmatpush1.msra.mxu0 %v1955
    %1984 = vmatprep.subr.mxu0 0.0
    %1985 = vmatpush1.msra.mxu0 %v1954
    %1986 = vmatprep.subr.mxu0 0.0
    %1987 = vmatpush1.msra.mxu0 %v1953
    %1988 = vmatprep.subr.mxu0 0.0
    %1989 = vmatpush1.msra.mxu0 %v1952
    %1990 = vmatprep.subr.mxu0 0.0
    %1991 = vmatpush2.msra.mxu0 0.0
    %1992 = vmatprep.subr.mxu0 0.0
    %1993 = vmatpush2.msra.mxu0 0.0
    %1994 = vmatprep.subr.mxu0 0.0
    %1995 = vmatpush2.msra.mxu0 0.0
    %1996 = vmatprep.subr.mxu0 0.0
    %1997 = vmatpush2.msra.mxu0 0.0
    %1998 = vmatprep.subr.mxu0 0.0
    %1999 = vmatpush2.msra.mxu0 0.0
    %2000 = vmatprep.subr.mxu0 0.0
    %2001 = vmatpush2.msra.mxu0 0.0
    %2002 = vmatprep.subr.mxu0 0.0
    %2003 = vmatpush2.msra.mxu0 0.0
    %2004 = vmatprep.subr.mxu0 0.0
    %2005 = vmatpush2.msra.mxu0 0.0
    %2006 = vmatprep.subr.mxu0 0.0
    %2007 = vmatpush2.msra.mxu0 0.0
    %2008 = vmatprep.subr.mxu0 0.0
    %2009 = vmatpush2.msra.mxu0 0.0
    %2010 = vmatprep.subr.mxu0 0.0
    %2011 = vmatpush2.msra.mxu0 0.0
    %2012 = vmatprep.subr.mxu0 0.0
    %2013 = vmatpush2.msra.mxu0 0.0
    %2014 = vmatprep.subr.mxu0 0.0
    %2015 = vmatpush2.msra.mxu0 0.0
    %2016 = vmatprep.subr.mxu0 0.0
    %2017 = vmatpush2.msra.mxu0 0.0
    %2018 = vmatprep.subr.mxu0 0.0
    %2019 = vmatpush2.msra.mxu0 0.0
    %2020 = vmatprep.subr.mxu0 0.0
    %2021 = vmatpush2.msra.mxu0 0.0
    %2022 = vmatprep.mubr.f32.mxu0 0.0
    %2023 = vmatmul.mubr.f32.gmra.mxu0 %v1956
    %v2024 = vpop.f32.mrf.mxu0
    %v2025 = vadd.f32 0.0, %v2024
    %v2026 = vpop.f32.mrf.mxu0
    %2027 = vdwg.mxu0
    %2029 = vrot.lane.b32.xlu0 %v1947, 96
    %v2030 = vpop.permute.xlu0 %2029
    %v2031 = vsel %vm226, %v2030, 0
    %2033 = vmatprep.subr.mxu0 0.0
    %2034 = vmatpush1.msra.mxu0 0.0
    %2035 = vmatprep.subr.mxu0 0.0
    %2036 = vmatpush1.msra.mxu0 0.0
    %2037 = vmatprep.subr.mxu0 0.0
    %2038 = vmatpush1.msra.mxu0 0.0
    %2039 = vmatprep.subr.mxu0 0.0
    %2040 = vmatpush1.msra.mxu0 0.0
    %2041 = vmatprep.subr.mxu0 0.0
    %2042 = vmatpush1.msra.mxu0 0.0
    %2043 = vmatprep.subr.mxu0 0.0
    %2044 = vmatpush1.msra.mxu0 0.0
    %2045 = vmatprep.subr.mxu0 0.0
    %2046 = vmatpush1.msra.mxu0 0.0
    %2047 = vmatprep.subr.mxu0 0.0
    %2048 = vmatpush1.msra.mxu0 0.0
    %2049 = vmatprep.subr.mxu0 0.0
    %2050 = vmatpush1.msra.mxu0 0.0
    %2051 = vmatprep.subr.mxu0 0.0
    %2052 = vmatpush1.msra.mxu0 0.0
    %2053 = vmatprep.subr.mxu0 0.0
    %2054 = vmatpush1.msra.mxu0 0.0
    %2055 = vmatprep.subr.mxu0 0.0
    %2056 = vmatpush1.msra.mxu0 0.0
    %2057 = vmatprep.subr.mxu0 0.0
    %2058 = vmatpush1.msra.mxu0 %v1951
    %2059 = vmatprep.subr.mxu0 0.0
    %2060 = vmatpush1.msra.mxu0 %v1950
    %2061 = vmatprep.subr.mxu0 0.0
    %2062 = vmatpush1.msra.mxu0 %v1949
    %2063 = vmatprep.subr.mxu0 0.0
    %2064 = vmatpush1.msra.mxu0 %v1948
    %2065 = vmatprep.subr.mxu0 0.0
    %2066 = vmatpush2.msra.mxu0 0.0
    %2067 = vmatprep.subr.mxu0 0.0
    %2068 = vmatpush2.msra.mxu0 0.0
    %2069 = vmatprep.subr.mxu0 0.0
    %2070 = vmatpush2.msra.mxu0 0.0
    %2071 = vmatprep.subr.mxu0 0.0
    %2072 = vmatpush2.msra.mxu0 0.0
    %2073 = vmatprep.subr.mxu0 0.0
    %2074 = vmatpush2.msra.mxu0 0.0
    %2075 = vmatprep.subr.mxu0 0.0
    %2076 = vmatpush2.msra.mxu0 0.0
    %2077 = vmatprep.subr.mxu0 0.0
    %2078 = vmatpush2.msra.mxu0 0.0
    %2079 = vmatprep.subr.mxu0 0.0
    %2080 = vmatpush2.msra.mxu0 0.0
    %2081 = vmatprep.subr.mxu0 0.0
    %2082 = vmatpush2.msra.mxu0 0.0
    %2083 = vmatprep.subr.mxu0 0.0
    %2084 = vmatpush2.msra.mxu0 0.0
    %2085 = vmatprep.subr.mxu0 0.0
    %2086 = vmatpush2.msra.mxu0 0.0
    %2087 = vmatprep.subr.mxu0 0.0
    %2088 = vmatpush2.msra.mxu0 0.0
    %2089 = vmatprep.subr.mxu0 0.0
    %2090 = vmatpush2.msra.mxu0 0.0
    %2091 = vmatprep.subr.mxu0 0.0
    %2092 = vmatpush2.msra.mxu0 0.0
    %2093 = vmatprep.subr.mxu0 0.0
    %2094 = vmatpush2.msra.mxu0 0.0
    %2095 = vmatprep.subr.mxu0 0.0
    %2096 = vmatpush2.msra.mxu0 0.0
    %2097 = vmatprep.mubr.f32.mxu0 0.0
    %2098 = vmatmul.mubr.f32.gmra.mxu0 %v2031
    %v2099 = vpop.f32.mrf.mxu0
    %v2100 = vadd.f32 %v2025, %v2099
    %v2101 = vpop.f32.mrf.mxu0
    %2102 = vdwg.mxu0
    %v2103 = vld [vmem:[%s587] sm:$0x1]
    %v2105 = vlaneseq
    %v2106 = vshrl.u32 %v2105, 7
    %v2107 = vsub.s32 0, %v2106
    %v2108 = vrot.slane %v2103, %v2107
    %v2110 = vadd.f32 %v2100, %v2108
    %v2111 = vxor.u32 %v2110, 2147483648
    %v2112 = vmul.f32 %v2111, 1.442695
    %v2113 = vpow.pop %v2112
    %v2114 = vadd.f32 %v2113, 1.0
    %v2115 = vrcp.pop %v2114
    %v2116 = vmul.f32 1.0, %v2115
    %2118 = vrot.lane.b32.xlu0 %v2110, 32
    %v2119 = vpop.permute.xlu0 %2118
    %v2121 = vmul.f32 %v2116, %v2119
    %2123 = vrot.lane.b32.xlu0 %v2121, 64
    %v2124 = vpop.permute.xlu0 %2123
    %v2126 = vadd.f32 %v2110, %v2124
    %v2127 = vtanh.pop %v2126
    %v2128 = vsub.f32 1.0, %v2116
    %2130 = vrot.lane.b32.xlu0 %v2127, 96
    %v2131 = vpop.permute.xlu0 %2130
    %v2133 = vmul.f32 %v2128, %v2131
    %v2134 = vmul.f32 %v2116, %v1757
    %v2135 = vadd.f32 %v2133, %v2134
    %2137 = vrot.lane.b32.xlu0 %v2135, 96
    %v2138 = vpop.permute.xlu0 %2137
    %2140 = vst.msk [vmem:[#allocation3 + $0x20] sm:$0xff] %vm226, %v2138
    %v2141 = vld [vmem:[#allocation2 + $0x28] sm:$0xff]
    %v2142 = vld [vmem:[%s2] sm:$0xff]
    %v2143 = vld [vmem:[%s2 + $0x8] sm:$0xff]
    %v2144 = vld [vmem:[%s2 + $0x10] sm:$0xff]
    %v2145 = vld [vmem:[%s2 + $0x18] sm:$0xff]
    %v2146 = vld [vmem:[%s3] sm:$0xff]
    %v2147 = vld [vmem:[%s3 + $0x8] sm:$0xff]
    %v2148 = vld [vmem:[%s3 + $0x10] sm:$0xff]
    %v2149 = vld [vmem:[%s3 + $0x18] sm:$0xff]
    %2150 = vmatprep.subr.mxu0 0.0
    %2151 = vmatpush1.msra.mxu0 0.0
    %2152 = vmatprep.subr.mxu0 0.0
    %2153 = vmatpush1.msra.mxu0 0.0
    %2154 = vmatprep.subr.mxu0 0.0
    %2155 = vmatpush1.msra.mxu0 0.0
    %2156 = vmatprep.subr.mxu0 0.0
    %2157 = vmatpush1.msra.mxu0 0.0
    %2158 = vmatprep.subr.mxu0 0.0
    %2159 = vmatpush1.msra.mxu0 0.0
    %2160 = vmatprep.subr.mxu0 0.0
    %2161 = vmatpush1.msra.mxu0 0.0
    %2162 = vmatprep.subr.mxu0 0.0
    %2163 = vmatpush1.msra.mxu0 0.0
    %2164 = vmatprep.subr.mxu0 0.0
    %2165 = vmatpush1.msra.mxu0 0.0
    %2166 = vmatprep.subr.mxu0 0.0
    %2167 = vmatpush1.msra.mxu0 0.0
    %2168 = vmatprep.subr.mxu0 0.0
    %2169 = vmatpush1.msra.mxu0 0.0
    %2170 = vmatprep.subr.mxu0 0.0
    %2171 = vmatpush1.msra.mxu0 0.0
    %2172 = vmatprep.subr.mxu0 0.0
    %2173 = vmatpush1.msra.mxu0 0.0
    %2174 = vmatprep.subr.mxu0 0.0
    %2175 = vmatpush1.msra.mxu0 %v2149
    %2176 = vmatprep.subr.mxu0 0.0
    %2177 = vmatpush1.msra.mxu0 %v2148
    %2178 = vmatprep.subr.mxu0 0.0
    %2179 = vmatpush1.msra.mxu0 %v2147
    %2180 = vmatprep.subr.mxu0 0.0
    %2181 = vmatpush1.msra.mxu0 %v2146
    %2182 = vmatprep.subr.mxu0 0.0
    %2183 = vmatpush2.msra.mxu0 0.0
    %2184 = vmatprep.subr.mxu0 0.0
    %2185 = vmatpush2.msra.mxu0 0.0
    %2186 = vmatprep.subr.mxu0 0.0
    %2187 = vmatpush2.msra.mxu0 0.0
    %2188 = vmatprep.subr.mxu0 0.0
    %2189 = vmatpush2.msra.mxu0 0.0
    %2190 = vmatprep.subr.mxu0 0.0
    %2191 = vmatpush2.msra.mxu0 0.0
    %2192 = vmatprep.subr.mxu0 0.0
    %2193 = vmatpush2.msra.mxu0 0.0
    %2194 = vmatprep.subr.mxu0 0.0
    %2195 = vmatpush2.msra.mxu0 0.0
    %2196 = vmatprep.subr.mxu0 0.0
    %2197 = vmatpush2.msra.mxu0 0.0
    %2198 = vmatprep.subr.mxu0 0.0
    %2199 = vmatpush2.msra.mxu0 0.0
    %2200 = vmatprep.subr.mxu0 0.0
    %2201 = vmatpush2.msra.mxu0 0.0
    %2202 = vmatprep.subr.mxu0 0.0
    %2203 = vmatpush2.msra.mxu0 0.0
    %2204 = vmatprep.subr.mxu0 0.0
    %2205 = vmatpush2.msra.mxu0 0.0
    %2206 = vmatprep.subr.mxu0 0.0
    %2207 = vmatpush2.msra.mxu0 0.0
    %2208 = vmatprep.subr.mxu0 0.0
    %2209 = vmatpush2.msra.mxu0 0.0
    %2210 = vmatprep.subr.mxu0 0.0
    %2211 = vmatpush2.msra.mxu0 0.0
    %2212 = vmatprep.subr.mxu0 0.0
    %2213 = vmatpush2.msra.mxu0 0.0
    %2214 = vmatprep.mubr.f32.mxu0 0.0
    %2215 = vmatmul.mubr.f32.gmra.mxu0 %v2031
    %v2216 = vpop.f32.mrf.mxu0
    %v2217 = vadd.f32 0.0, %v2216
    %v2218 = vpop.f32.mrf.mxu0
    %2219 = vdwg.mxu0
    %v2221 = vsel %vm226, %v2141, 0
    %2223 = vmatprep.subr.mxu0 0.0
    %2224 = vmatpush1.msra.mxu0 0.0
    %2225 = vmatprep.subr.mxu0 0.0
    %2226 = vmatpush1.msra.mxu0 0.0
    %2227 = vmatprep.subr.mxu0 0.0
    %2228 = vmatpush1.msra.mxu0 0.0
    %2229 = vmatprep.subr.mxu0 0.0
    %2230 = vmatpush1.msra.mxu0 0.0
    %2231 = vmatprep.subr.mxu0 0.0
    %2232 = vmatpush1.msra.mxu0 0.0
    %2233 = vmatprep.subr.mxu0 0.0
    %2234 = vmatpush1.msra.mxu0 0.0
    %2235 = vmatprep.subr.mxu0 0.0
    %2236 = vmatpush1.msra.mxu0 0.0
    %2237 = vmatprep.subr.mxu0 0.0
    %2238 = vmatpush1.msra.mxu0 0.0
    %2239 = vmatprep.subr.mxu0 0.0
    %2240 = vmatpush1.msra.mxu0 0.0
    %2241 = vmatprep.subr.mxu0 0.0
    %2242 = vmatpush1.msra.mxu0 0.0
    %2243 = vmatprep.subr.mxu0 0.0
    %2244 = vmatpush1.msra.mxu0 0.0
    %2245 = vmatprep.subr.mxu0 0.0
    %2246 = vmatpush1.msra.mxu0 0.0
    %2247 = vmatprep.subr.mxu0 0.0
    %2248 = vmatpush1.msra.mxu0 %v2145
    %2249 = vmatprep.subr.mxu0 0.0
    %2250 = vmatpush1.msra.mxu0 %v2144
    %2251 = vmatprep.subr.mxu0 0.0
    %2252 = vmatpush1.msra.mxu0 %v2143
    %2253 = vmatprep.subr.mxu0 0.0
    %2254 = vmatpush1.msra.mxu0 %v2142
    %2255 = vmatprep.subr.mxu0 0.0
    %2256 = vmatpush2.msra.mxu0 0.0
    %2257 = vmatprep.subr.mxu0 0.0
    %2258 = vmatpush2.msra.mxu0 0.0
    %2259 = vmatprep.subr.mxu0 0.0
    %2260 = vmatpush2.msra.mxu0 0.0
    %2261 = vmatprep.subr.mxu0 0.0
    %2262 = vmatpush2.msra.mxu0 0.0
    %2263 = vmatprep.subr.mxu0 0.0
    %2264 = vmatpush2.msra.mxu0 0.0
    %2265 = vmatprep.subr.mxu0 0.0
    %2266 = vmatpush2.msra.mxu0 0.0
    %2267 = vmatprep.subr.mxu0 0.0
    %2268 = vmatpush2.msra.mxu0 0.0
    %2269 = vmatprep.subr.mxu0 0.0
    %2270 = vmatpush2.msra.mxu0 0.0
    %2271 = vmatprep.subr.mxu0 0.0
    %2272 = vmatpush2.msra.mxu0 0.0
    %2273 = vmatprep.subr.mxu0 0.0
    %2274 = vmatpush2.msra.mxu0 0.0
    %2275 = vmatprep.subr.mxu0 0.0
    %2276 = vmatpush2.msra.mxu0 0.0
    %2277 = vmatprep.subr.mxu0 0.0
    %2278 = vmatpush2.msra.mxu0 0.0
    %2279 = vmatprep.subr.mxu0 0.0
    %2280 = vmatpush2.msra.mxu0 0.0
    %2281 = vmatprep.subr.mxu0 0.0
    %2282 = vmatpush2.msra.mxu0 0.0
    %2283 = vmatprep.subr.mxu0 0.0
    %2284 = vmatpush2.msra.mxu0 0.0
    %2285 = vmatprep.subr.mxu0 0.0
    %2286 = vmatpush2.msra.mxu0 0.0
    %2287 = vmatprep.mubr.f32.mxu0 0.0
    %2288 = vmatmul.mubr.f32.gmra.mxu0 %v2221
    %v2289 = vpop.f32.mrf.mxu0
    %v2290 = vadd.f32 %v2217, %v2289
    %v2291 = vpop.f32.mrf.mxu0
    %2292 = vdwg.mxu0
    %v2293 = vld [vmem:[%s4] sm:$0x1]
    %v2295 = vlaneseq
    %v2296 = vshrl.u32 %v2295, 7
    %v2297 = vsub.s32 0, %v2296
    %v2298 = vrot.slane %v2293, %v2297
    %v2300 = vadd.f32 %v2290, %v2298
    %v2301 = vxor.u32 %v2300, 2147483648
    %v2302 = vmul.f32 %v2301, 1.442695
    %v2303 = vpow.pop %v2302
    %v2304 = vadd.f32 %v2303, 1.0
    %v2305 = vrcp.pop %v2304
    %v2306 = vmul.f32 1.0, %v2305
    %2308 = vrot.lane.b32.xlu0 %v2300, 32
    %v2309 = vpop.permute.xlu0 %2308
    %v2311 = vmul.f32 %v2306, %v2309
    %2313 = vrot.lane.b32.xlu0 %v2311, 64
    %v2314 = vpop.permute.xlu0 %2313
    %v2316 = vadd.f32 %v2300, %v2314
    %v2317 = vtanh.pop %v2316
    %v2318 = vsub.f32 1.0, %v2306
    %2320 = vrot.lane.b32.xlu0 %v2317, 96
    %v2321 = vpop.permute.xlu0 %2320
    %v2323 = vmul.f32 %v2318, %v2321
    %v2324 = vmul.f32 %v2306, %v1947
    %v2325 = vadd.f32 %v2323, %v2324
    %v2326 = vld [vmem:[%s429] sm:$0xff]
    %v2327 = vld [vmem:[%s429 + $0x8] sm:$0xff]
    %v2328 = vld [vmem:[%s429 + $0x10] sm:$0xff]
    %v2329 = vld [vmem:[%s429 + $0x18] sm:$0xff]
    %v2330 = vld [vmem:[%s434] sm:$0xff]
    %v2331 = vld [vmem:[%s434 + $0x8] sm:$0xff]
    %v2332 = vld [vmem:[%s434 + $0x10] sm:$0xff]
    %v2333 = vld [vmem:[%s434 + $0x18] sm:$0xff]
    %v2334 = vsel %vm226, %v2138, 0
    %2336 = vmatprep.subr.mxu0 0.0
    %2337 = vmatpush1.msra.mxu0 0.0
    %2338 = vmatprep.subr.mxu0 0.0
    %2339 = vmatpush1.msra.mxu0 0.0
    %2340 = vmatprep.subr.mxu0 0.0
    %2341 = vmatpush1.msra.mxu0 0.0
    %2342 = vmatprep.subr.mxu0 0.0
    %2343 = vmatpush1.msra.mxu0 0.0
    %2344 = vmatprep.subr.mxu0 0.0
    %2345 = vmatpush1.msra.mxu0 0.0
    %2346 = vmatprep.subr.mxu0 0.0
    %2347 = vmatpush1.msra.mxu0 0.0
    %2348 = vmatprep.subr.mxu0 0.0
    %2349 = vmatpush1.msra.mxu0 0.0
    %2350 = vmatprep.subr.mxu0 0.0
    %2351 = vmatpush1.msra.mxu0 0.0
    %2352 = vmatprep.subr.mxu0 0.0
    %2353 = vmatpush1.msra.mxu0 0.0
    %2354 = vmatprep.subr.mxu0 0.0
    %2355 = vmatpush1.msra.mxu0 0.0
    %2356 = vmatprep.subr.mxu0 0.0
    %2357 = vmatpush1.msra.mxu0 0.0
    %2358 = vmatprep.subr.mxu0 0.0
    %2359 = vmatpush1.msra.mxu0 0.0
    %2360 = vmatprep.subr.mxu0 0.0
    %2361 = vmatpush1.msra.mxu0 %v2333
    %2362 = vmatprep.subr.mxu0 0.0
    %2363 = vmatpush1.msra.mxu0 %v2332
    %2364 = vmatprep.subr.mxu0 0.0
    %2365 = vmatpush1.msra.mxu0 %v2331
    %2366 = vmatprep.subr.mxu0 0.0
    %2367 = vmatpush1.msra.mxu0 %v2330
    %2368 = vmatprep.subr.mxu0 0.0
    %2369 = vmatpush2.msra.mxu0 0.0
    %2370 = vmatprep.subr.mxu0 0.0
    %2371 = vmatpush2.msra.mxu0 0.0
    %2372 = vmatprep.subr.mxu0 0.0
    %2373 = vmatpush2.msra.mxu0 0.0
    %2374 = vmatprep.subr.mxu0 0.0
    %2375 = vmatpush2.msra.mxu0 0.0
    %2376 = vmatprep.subr.mxu0 0.0
    %2377 = vmatpush2.msra.mxu0 0.0
    %2378 = vmatprep.subr.mxu0 0.0
    %2379 = vmatpush2.msra.mxu0 0.0
    %2380 = vmatprep.subr.mxu0 0.0
    %2381 = vmatpush2.msra.mxu0 0.0
    %2382 = vmatprep.subr.mxu0 0.0
    %2383 = vmatpush2.msra.mxu0 0.0
    %2384 = vmatprep.subr.mxu0 0.0
    %2385 = vmatpush2.msra.mxu0 0.0
    %2386 = vmatprep.subr.mxu0 0.0
    %2387 = vmatpush2.msra.mxu0 0.0
    %2388 = vmatprep.subr.mxu0 0.0
    %2389 = vmatpush2.msra.mxu0 0.0
    %2390 = vmatprep.subr.mxu0 0.0
    %2391 = vmatpush2.msra.mxu0 0.0
    %2392 = vmatprep.subr.mxu0 0.0
    %2393 = vmatpush2.msra.mxu0 0.0
    %2394 = vmatprep.subr.mxu0 0.0
    %2395 = vmatpush2.msra.mxu0 0.0
    %2396 = vmatprep.subr.mxu0 0.0
    %2397 = vmatpush2.msra.mxu0 0.0
    %2398 = vmatprep.subr.mxu0 0.0
    %2399 = vmatpush2.msra.mxu0 0.0
    %2400 = vmatprep.mubr.f32.mxu0 0.0
    %2401 = vmatmul.mubr.f32.gmra.mxu0 %v2334
    %v2402 = vpop.f32.mrf.mxu0
    %v2403 = vadd.f32 0.0, %v2402
    %v2404 = vpop.f32.mrf.mxu0
    %2405 = vdwg.mxu0
    %2407 = vrot.lane.b32.xlu0 %v2325, 96
    %v2408 = vpop.permute.xlu0 %2407
    %v2409 = vsel %vm226, %v2408, 0
    %2411 = vmatprep.subr.mxu0 0.0
    %2412 = vmatpush1.msra.mxu0 0.0
    %2413 = vmatprep.subr.mxu0 0.0
    %2414 = vmatpush1.msra.mxu0 0.0
    %2415 = vmatprep.subr.mxu0 0.0
    %2416 = vmatpush1.msra.mxu0 0.0
    %2417 = vmatprep.subr.mxu0 0.0
    %2418 = vmatpush1.msra.mxu0 0.0
    %2419 = vmatprep.subr.mxu0 0.0
    %2420 = vmatpush1.msra.mxu0 0.0
    %2421 = vmatprep.subr.mxu0 0.0
    %2422 = vmatpush1.msra.mxu0 0.0
    %2423 = vmatprep.subr.mxu0 0.0
    %2424 = vmatpush1.msra.mxu0 0.0
    %2425 = vmatprep.subr.mxu0 0.0
    %2426 = vmatpush1.msra.mxu0 0.0
    %2427 = vmatprep.subr.mxu0 0.0
    %2428 = vmatpush1.msra.mxu0 0.0
    %2429 = vmatprep.subr.mxu0 0.0
    %2430 = vmatpush1.msra.mxu0 0.0
    %2431 = vmatprep.subr.mxu0 0.0
    %2432 = vmatpush1.msra.mxu0 0.0
    %2433 = vmatprep.subr.mxu0 0.0
    %2434 = vmatpush1.msra.mxu0 0.0
    %2435 = vmatprep.subr.mxu0 0.0
    %2436 = vmatpush1.msra.mxu0 %v2329
    %2437 = vmatprep.subr.mxu0 0.0
    %2438 = vmatpush1.msra.mxu0 %v2328
    %2439 = vmatprep.subr.mxu0 0.0
    %2440 = vmatpush1.msra.mxu0 %v2327
    %2441 = vmatprep.subr.mxu0 0.0
    %2442 = vmatpush1.msra.mxu0 %v2326
    %2443 = vmatprep.subr.mxu0 0.0
    %2444 = vmatpush2.msra.mxu0 0.0
    %2445 = vmatprep.subr.mxu0 0.0
    %2446 = vmatpush2.msra.mxu0 0.0
    %2447 = vmatprep.subr.mxu0 0.0
    %2448 = vmatpush2.msra.mxu0 0.0
    %2449 = vmatprep.subr.mxu0 0.0
    %2450 = vmatpush2.msra.mxu0 0.0
    %2451 = vmatprep.subr.mxu0 0.0
    %2452 = vmatpush2.msra.mxu0 0.0
    %2453 = vmatprep.subr.mxu0 0.0
    %2454 = vmatpush2.msra.mxu0 0.0
    %2455 = vmatprep.subr.mxu0 0.0
    %2456 = vmatpush2.msra.mxu0 0.0
    %2457 = vmatprep.subr.mxu0 0.0
    %2458 = vmatpush2.msra.mxu0 0.0
    %2459 = vmatprep.subr.mxu0 0.0
    %2460 = vmatpush2.msra.mxu0 0.0
    %2461 = vmatprep.subr.mxu0 0.0
    %2462 = vmatpush2.msra.mxu0 0.0
    %2463 = vmatprep.subr.mxu0 0.0
    %2464 = vmatpush2.msra.mxu0 0.0
    %2465 = vmatprep.subr.mxu0 0.0
    %2466 = vmatpush2.msra.mxu0 0.0
    %2467 = vmatprep.subr.mxu0 0.0
    %2468 = vmatpush2.msra.mxu0 0.0
    %2469 = vmatprep.subr.mxu0 0.0
    %2470 = vmatpush2.msra.mxu0 0.0
    %2471 = vmatprep.subr.mxu0 0.0
    %2472 = vmatpush2.msra.mxu0 0.0
    %2473 = vmatprep.subr.mxu0 0.0
    %2474 = vmatpush2.msra.mxu0 0.0
    %2475 = vmatprep.mubr.f32.mxu0 0.0
    %2476 = vmatmul.mubr.f32.gmra.mxu0 %v2409
    %v2477 = vpop.f32.mrf.mxu0
    %v2478 = vadd.f32 %v2403, %v2477
    %v2479 = vpop.f32.mrf.mxu0
    %2480 = vdwg.mxu0
    %v2481 = vld [vmem:[%s587] sm:$0x1]
    %v2483 = vlaneseq
    %v2484 = vshrl.u32 %v2483, 7
    %v2485 = vsub.s32 0, %v2484
    %v2486 = vrot.slane %v2481, %v2485
    %v2488 = vadd.f32 %v2478, %v2486
    %v2489 = vxor.u32 %v2488, 2147483648
    %v2490 = vmul.f32 %v2489, 1.442695
    %v2491 = vpow.pop %v2490
    %v2492 = vadd.f32 %v2491, 1.0
    %v2493 = vrcp.pop %v2492
    %v2494 = vmul.f32 1.0, %v2493
    %2496 = vrot.lane.b32.xlu0 %v2488, 32
    %v2497 = vpop.permute.xlu0 %2496
    %v2499 = vmul.f32 %v2494, %v2497
    %2501 = vrot.lane.b32.xlu0 %v2499, 64
    %v2502 = vpop.permute.xlu0 %2501
    %v2504 = vadd.f32 %v2488, %v2502
    %v2505 = vtanh.pop %v2504
    %v2506 = vsub.f32 1.0, %v2494
    %2508 = vrot.lane.b32.xlu0 %v2505, 96
    %v2509 = vpop.permute.xlu0 %2508
    %v2511 = vmul.f32 %v2506, %v2509
    %v2512 = vmul.f32 %v2494, %v2135
    %v2513 = vadd.f32 %v2511, %v2512
    %2515 = vrot.lane.b32.xlu0 %v2513, 96
    %v2516 = vpop.permute.xlu0 %2515
    %2518 = vst.msk [vmem:[#allocation3 + $0x28] sm:$0xff] %vm226, %v2516
    %v2519 = vld [vmem:[#allocation2 + $0x30] sm:$0xff]
    %v2520 = vld [vmem:[%s2] sm:$0xff]
    %v2521 = vld [vmem:[%s2 + $0x8] sm:$0xff]
    %v2522 = vld [vmem:[%s2 + $0x10] sm:$0xff]
    %v2523 = vld [vmem:[%s2 + $0x18] sm:$0xff]
    %v2524 = vld [vmem:[%s3] sm:$0xff]
    %v2525 = vld [vmem:[%s3 + $0x8] sm:$0xff]
    %v2526 = vld [vmem:[%s3 + $0x10] sm:$0xff]
    %v2527 = vld [vmem:[%s3 + $0x18] sm:$0xff]
    %2528 = vmatprep.subr.mxu0 0.0
    %2529 = vmatpush1.msra.mxu0 0.0
    %2530 = vmatprep.subr.mxu0 0.0
    %2531 = vmatpush1.msra.mxu0 0.0
    %2532 = vmatprep.subr.mxu0 0.0
    %2533 = vmatpush1.msra.mxu0 0.0
    %2534 = vmatprep.subr.mxu0 0.0
    %2535 = vmatpush1.msra.mxu0 0.0
    %2536 = vmatprep.subr.mxu0 0.0
    %2537 = vmatpush1.msra.mxu0 0.0
    %2538 = vmatprep.subr.mxu0 0.0
    %2539 = vmatpush1.msra.mxu0 0.0
    %2540 = vmatprep.subr.mxu0 0.0
    %2541 = vmatpush1.msra.mxu0 0.0
    %2542 = vmatprep.subr.mxu0 0.0
    %2543 = vmatpush1.msra.mxu0 0.0
    %2544 = vmatprep.subr.mxu0 0.0
    %2545 = vmatpush1.msra.mxu0 0.0
    %2546 = vmatprep.subr.mxu0 0.0
    %2547 = vmatpush1.msra.mxu0 0.0
    %2548 = vmatprep.subr.mxu0 0.0
    %2549 = vmatpush1.msra.mxu0 0.0
    %2550 = vmatprep.subr.mxu0 0.0
    %2551 = vmatpush1.msra.mxu0 0.0
    %2552 = vmatprep.subr.mxu0 0.0
    %2553 = vmatpush1.msra.mxu0 %v2527
    %2554 = vmatprep.subr.mxu0 0.0
    %2555 = vmatpush1.msra.mxu0 %v2526
    %2556 = vmatprep.subr.mxu0 0.0
    %2557 = vmatpush1.msra.mxu0 %v2525
    %2558 = vmatprep.subr.mxu0 0.0
    %2559 = vmatpush1.msra.mxu0 %v2524
    %2560 = vmatprep.subr.mxu0 0.0
    %2561 = vmatpush2.msra.mxu0 0.0
    %2562 = vmatprep.subr.mxu0 0.0
    %2563 = vmatpush2.msra.mxu0 0.0
    %2564 = vmatprep.subr.mxu0 0.0
    %2565 = vmatpush2.msra.mxu0 0.0
    %2566 = vmatprep.subr.mxu0 0.0
    %2567 = vmatpush2.msra.mxu0 0.0
    %2568 = vmatprep.subr.mxu0 0.0
    %2569 = vmatpush2.msra.mxu0 0.0
    %2570 = vmatprep.subr.mxu0 0.0
    %2571 = vmatpush2.msra.mxu0 0.0
    %2572 = vmatprep.subr.mxu0 0.0
    %2573 = vmatpush2.msra.mxu0 0.0
    %2574 = vmatprep.subr.mxu0 0.0
    %2575 = vmatpush2.msra.mxu0 0.0
    %2576 = vmatprep.subr.mxu0 0.0
    %2577 = vmatpush2.msra.mxu0 0.0
    %2578 = vmatprep.subr.mxu0 0.0
    %2579 = vmatpush2.msra.mxu0 0.0
    %2580 = vmatprep.subr.mxu0 0.0
    %2581 = vmatpush2.msra.mxu0 0.0
    %2582 = vmatprep.subr.mxu0 0.0
    %2583 = vmatpush2.msra.mxu0 0.0
    %2584 = vmatprep.subr.mxu0 0.0
    %2585 = vmatpush2.msra.mxu0 0.0
    %2586 = vmatprep.subr.mxu0 0.0
    %2587 = vmatpush2.msra.mxu0 0.0
    %2588 = vmatprep.subr.mxu0 0.0
    %2589 = vmatpush2.msra.mxu0 0.0
    %2590 = vmatprep.subr.mxu0 0.0
    %2591 = vmatpush2.msra.mxu0 0.0
    %2592 = vmatprep.mubr.f32.mxu0 0.0
    %2593 = vmatmul.mubr.f32.gmra.mxu0 %v2409
    %v2594 = vpop.f32.mrf.mxu0
    %v2595 = vadd.f32 0.0, %v2594
    %v2596 = vpop.f32.mrf.mxu0
    %2597 = vdwg.mxu0
    %v2599 = vsel %vm226, %v2519, 0
    %2601 = vmatprep.subr.mxu0 0.0
    %2602 = vmatpush1.msra.mxu0 0.0
    %2603 = vmatprep.subr.mxu0 0.0
    %2604 = vmatpush1.msra.mxu0 0.0
    %2605 = vmatprep.subr.mxu0 0.0
    %2606 = vmatpush1.msra.mxu0 0.0
    %2607 = vmatprep.subr.mxu0 0.0
    %2608 = vmatpush1.msra.mxu0 0.0
    %2609 = vmatprep.subr.mxu0 0.0
    %2610 = vmatpush1.msra.mxu0 0.0
    %2611 = vmatprep.subr.mxu0 0.0
    %2612 = vmatpush1.msra.mxu0 0.0
    %2613 = vmatprep.subr.mxu0 0.0
    %2614 = vmatpush1.msra.mxu0 0.0
    %2615 = vmatprep.subr.mxu0 0.0
    %2616 = vmatpush1.msra.mxu0 0.0
    %2617 = vmatprep.subr.mxu0 0.0
    %2618 = vmatpush1.msra.mxu0 0.0
    %2619 = vmatprep.subr.mxu0 0.0
    %2620 = vmatpush1.msra.mxu0 0.0
    %2621 = vmatprep.subr.mxu0 0.0
    %2622 = vmatpush1.msra.mxu0 0.0
    %2623 = vmatprep.subr.mxu0 0.0
    %2624 = vmatpush1.msra.mxu0 0.0
    %2625 = vmatprep.subr.mxu0 0.0
    %2626 = vmatpush1.msra.mxu0 %v2523
    %2627 = vmatprep.subr.mxu0 0.0
    %2628 = vmatpush1.msra.mxu0 %v2522
    %2629 = vmatprep.subr.mxu0 0.0
    %2630 = vmatpush1.msra.mxu0 %v2521
    %2631 = vmatprep.subr.mxu0 0.0
    %2632 = vmatpush1.msra.mxu0 %v2520
    %2633 = vmatprep.subr.mxu0 0.0
    %2634 = vmatpush2.msra.mxu0 0.0
    %2635 = vmatprep.subr.mxu0 0.0
    %2636 = vmatpush2.msra.mxu0 0.0
    %2637 = vmatprep.subr.mxu0 0.0
    %2638 = vmatpush2.msra.mxu0 0.0
    %2639 = vmatprep.subr.mxu0 0.0
    %2640 = vmatpush2.msra.mxu0 0.0
    %2641 = vmatprep.subr.mxu0 0.0
    %2642 = vmatpush2.msra.mxu0 0.0
    %2643 = vmatprep.subr.mxu0 0.0
    %2644 = vmatpush2.msra.mxu0 0.0
    %2645 = vmatprep.subr.mxu0 0.0
    %2646 = vmatpush2.msra.mxu0 0.0
    %2647 = vmatprep.subr.mxu0 0.0
    %2648 = vmatpush2.msra.mxu0 0.0
    %2649 = vmatprep.subr.mxu0 0.0
    %2650 = vmatpush2.msra.mxu0 0.0
    %2651 = vmatprep.subr.mxu0 0.0
    %2652 = vmatpush2.msra.mxu0 0.0
    %2653 = vmatprep.subr.mxu0 0.0
    %2654 = vmatpush2.msra.mxu0 0.0
    %2655 = vmatprep.subr.mxu0 0.0
    %2656 = vmatpush2.msra.mxu0 0.0
    %2657 = vmatprep.subr.mxu0 0.0
    %2658 = vmatpush2.msra.mxu0 0.0
    %2659 = vmatprep.subr.mxu0 0.0
    %2660 = vmatpush2.msra.mxu0 0.0
    %2661 = vmatprep.subr.mxu0 0.0
    %2662 = vmatpush2.msra.mxu0 0.0
    %2663 = vmatprep.subr.mxu0 0.0
    %2664 = vmatpush2.msra.mxu0 0.0
    %2665 = vmatprep.mubr.f32.mxu0 0.0
    %2666 = vmatmul.mubr.f32.gmra.mxu0 %v2599
    %v2667 = vpop.f32.mrf.mxu0
    %v2668 = vadd.f32 %v2595, %v2667
    %v2669 = vpop.f32.mrf.mxu0
    %2670 = vdwg.mxu0
    %v2671 = vld [vmem:[%s4] sm:$0x1]
    %v2673 = vlaneseq
    %v2674 = vshrl.u32 %v2673, 7
    %v2675 = vsub.s32 0, %v2674
    %v2676 = vrot.slane %v2671, %v2675
    %v2678 = vadd.f32 %v2668, %v2676
    %v2679 = vxor.u32 %v2678, 2147483648
    %v2680 = vmul.f32 %v2679, 1.442695
    %v2681 = vpow.pop %v2680
    %v2682 = vadd.f32 %v2681, 1.0
    %v2683 = vrcp.pop %v2682
    %v2684 = vmul.f32 1.0, %v2683
    %2686 = vrot.lane.b32.xlu0 %v2678, 32
    %v2687 = vpop.permute.xlu0 %2686
    %v2689 = vmul.f32 %v2684, %v2687
    %2691 = vrot.lane.b32.xlu0 %v2689, 64
    %v2692 = vpop.permute.xlu0 %2691
    %v2694 = vadd.f32 %v2678, %v2692
    %v2695 = vtanh.pop %v2694
    %v2696 = vsub.f32 1.0, %v2684
    %2698 = vrot.lane.b32.xlu0 %v2695, 96
    %v2699 = vpop.permute.xlu0 %2698
    %v2701 = vmul.f32 %v2696, %v2699
    %v2702 = vmul.f32 %v2684, %v2325
    %v2703 = vadd.f32 %v2701, %v2702
    %v2704 = vld [vmem:[%s429] sm:$0xff]
    %v2705 = vld [vmem:[%s429 + $0x8] sm:$0xff]
    %v2706 = vld [vmem:[%s429 + $0x10] sm:$0xff]
    %v2707 = vld [vmem:[%s429 + $0x18] sm:$0xff]
    %v2708 = vld [vmem:[%s434] sm:$0xff]
    %v2709 = vld [vmem:[%s434 + $0x8] sm:$0xff]
    %v2710 = vld [vmem:[%s434 + $0x10] sm:$0xff]
    %v2711 = vld [vmem:[%s434 + $0x18] sm:$0xff]
    %v2712 = vsel %vm226, %v2516, 0
    %2714 = vmatprep.subr.mxu0 0.0
    %2715 = vmatpush1.msra.mxu0 0.0
    %2716 = vmatprep.subr.mxu0 0.0
    %2717 = vmatpush1.msra.mxu0 0.0
    %2718 = vmatprep.subr.mxu0 0.0
    %2719 = vmatpush1.msra.mxu0 0.0
    %2720 = vmatprep.subr.mxu0 0.0
    %2721 = vmatpush1.msra.mxu0 0.0
    %2722 = vmatprep.subr.mxu0 0.0
    %2723 = vmatpush1.msra.mxu0 0.0
    %2724 = vmatprep.subr.mxu0 0.0
    %2725 = vmatpush1.msra.mxu0 0.0
    %2726 = vmatprep.subr.mxu0 0.0
    %2727 = vmatpush1.msra.mxu0 0.0
    %2728 = vmatprep.subr.mxu0 0.0
    %2729 = vmatpush1.msra.mxu0 0.0
    %2730 = vmatprep.subr.mxu0 0.0
    %2731 = vmatpush1.msra.mxu0 0.0
    %2732 = vmatprep.subr.mxu0 0.0
    %2733 = vmatpush1.msra.mxu0 0.0
    %2734 = vmatprep.subr.mxu0 0.0
    %2735 = vmatpush1.msra.mxu0 0.0
    %2736 = vmatprep.subr.mxu0 0.0
    %2737 = vmatpush1.msra.mxu0 0.0
    %2738 = vmatprep.subr.mxu0 0.0
    %2739 = vmatpush1.msra.mxu0 %v2711
    %2740 = vmatprep.subr.mxu0 0.0
    %2741 = vmatpush1.msra.mxu0 %v2710
    %2742 = vmatprep.subr.mxu0 0.0
    %2743 = vmatpush1.msra.mxu0 %v2709
    %2744 = vmatprep.subr.mxu0 0.0
    %2745 = vmatpush1.msra.mxu0 %v2708
    %2746 = vmatprep.subr.mxu0 0.0
    %2747 = vmatpush2.msra.mxu0 0.0
    %2748 = vmatprep.subr.mxu0 0.0
    %2749 = vmatpush2.msra.mxu0 0.0
    %2750 = vmatprep.subr.mxu0 0.0
    %2751 = vmatpush2.msra.mxu0 0.0
    %2752 = vmatprep.subr.mxu0 0.0
    %2753 = vmatpush2.msra.mxu0 0.0
    %2754 = vmatprep.subr.mxu0 0.0
    %2755 = vmatpush2.msra.mxu0 0.0
    %2756 = vmatprep.subr.mxu0 0.0
    %2757 = vmatpush2.msra.mxu0 0.0
    %2758 = vmatprep.subr.mxu0 0.0
    %2759 = vmatpush2.msra.mxu0 0.0
    %2760 = vmatprep.subr.mxu0 0.0
    %2761 = vmatpush2.msra.mxu0 0.0
    %2762 = vmatprep.subr.mxu0 0.0
    %2763 = vmatpush2.msra.mxu0 0.0
    %2764 = vmatprep.subr.mxu0 0.0
    %2765 = vmatpush2.msra.mxu0 0.0
    %2766 = vmatprep.subr.mxu0 0.0
    %2767 = vmatpush2.msra.mxu0 0.0
    %2768 = vmatprep.subr.mxu0 0.0
    %2769 = vmatpush2.msra.mxu0 0.0
    %2770 = vmatprep.subr.mxu0 0.0
    %2771 = vmatpush2.msra.mxu0 0.0
    %2772 = vmatprep.subr.mxu0 0.0
    %2773 = vmatpush2.msra.mxu0 0.0
    %2774 = vmatprep.subr.mxu0 0.0
    %2775 = vmatpush2.msra.mxu0 0.0
    %2776 = vmatprep.subr.mxu0 0.0
    %2777 = vmatpush2.msra.mxu0 0.0
    %2778 = vmatprep.mubr.f32.mxu0 0.0
    %2779 = vmatmul.mubr.f32.gmra.mxu0 %v2712
    %v2780 = vpop.f32.mrf.mxu0
    %v2781 = vadd.f32 0.0, %v2780
    %v2782 = vpop.f32.mrf.mxu0
    %2783 = vdwg.mxu0
    %2785 = vrot.lane.b32.xlu0 %v2703, 96
    %v2786 = vpop.permute.xlu0 %2785
    %v2787 = vsel %vm226, %v2786, 0
    %2789 = vmatprep.subr.mxu0 0.0
    %2790 = vmatpush1.msra.mxu0 0.0
    %2791 = vmatprep.subr.mxu0 0.0
    %2792 = vmatpush1.msra.mxu0 0.0
    %2793 = vmatprep.subr.mxu0 0.0
    %2794 = vmatpush1.msra.mxu0 0.0
    %2795 = vmatprep.subr.mxu0 0.0
    %2796 = vmatpush1.msra.mxu0 0.0
    %2797 = vmatprep.subr.mxu0 0.0
    %2798 = vmatpush1.msra.mxu0 0.0
    %2799 = vmatprep.subr.mxu0 0.0
    %2800 = vmatpush1.msra.mxu0 0.0
    %2801 = vmatprep.subr.mxu0 0.0
    %2802 = vmatpush1.msra.mxu0 0.0
    %2803 = vmatprep.subr.mxu0 0.0
    %2804 = vmatpush1.msra.mxu0 0.0
    %2805 = vmatprep.subr.mxu0 0.0
    %2806 = vmatpush1.msra.mxu0 0.0
    %2807 = vmatprep.subr.mxu0 0.0
    %2808 = vmatpush1.msra.mxu0 0.0
    %2809 = vmatprep.subr.mxu0 0.0
    %2810 = vmatpush1.msra.mxu0 0.0
    %2811 = vmatprep.subr.mxu0 0.0
    %2812 = vmatpush1.msra.mxu0 0.0
    %2813 = vmatprep.subr.mxu0 0.0
    %2814 = vmatpush1.msra.mxu0 %v2707
    %2815 = vmatprep.subr.mxu0 0.0
    %2816 = vmatpush1.msra.mxu0 %v2706
    %2817 = vmatprep.subr.mxu0 0.0
    %2818 = vmatpush1.msra.mxu0 %v2705
    %2819 = vmatprep.subr.mxu0 0.0
    %2820 = vmatpush1.msra.mxu0 %v2704
    %2821 = vmatprep.subr.mxu0 0.0
    %2822 = vmatpush2.msra.mxu0 0.0
    %2823 = vmatprep.subr.mxu0 0.0
    %2824 = vmatpush2.msra.mxu0 0.0
    %2825 = vmatprep.subr.mxu0 0.0
    %2826 = vmatpush2.msra.mxu0 0.0
    %2827 = vmatprep.subr.mxu0 0.0
    %2828 = vmatpush2.msra.mxu0 0.0
    %2829 = vmatprep.subr.mxu0 0.0
    %2830 = vmatpush2.msra.mxu0 0.0
    %2831 = vmatprep.subr.mxu0 0.0
    %2832 = vmatpush2.msra.mxu0 0.0
    %2833 = vmatprep.subr.mxu0 0.0
    %2834 = vmatpush2.msra.mxu0 0.0
    %2835 = vmatprep.subr.mxu0 0.0
    %2836 = vmatpush2.msra.mxu0 0.0
    %2837 = vmatprep.subr.mxu0 0.0
    %2838 = vmatpush2.msra.mxu0 0.0
    %2839 = vmatprep.subr.mxu0 0.0
    %2840 = vmatpush2.msra.mxu0 0.0
    %2841 = vmatprep.subr.mxu0 0.0
    %2842 = vmatpush2.msra.mxu0 0.0
    %2843 = vmatprep.subr.mxu0 0.0
    %2844 = vmatpush2.msra.mxu0 0.0
    %2845 = vmatprep.subr.mxu0 0.0
    %2846 = vmatpush2.msra.mxu0 0.0
    %2847 = vmatprep.subr.mxu0 0.0
    %2848 = vmatpush2.msra.mxu0 0.0
    %2849 = vmatprep.subr.mxu0 0.0
    %2850 = vmatpush2.msra.mxu0 0.0
    %2851 = vmatprep.subr.mxu0 0.0
    %2852 = vmatpush2.msra.mxu0 0.0
    %2853 = vmatprep.mubr.f32.mxu0 0.0
    %2854 = vmatmul.mubr.f32.gmra.mxu0 %v2787
    %v2855 = vpop.f32.mrf.mxu0
    %v2856 = vadd.f32 %v2781, %v2855
    %v2857 = vpop.f32.mrf.mxu0
    %2858 = vdwg.mxu0
    %v2859 = vld [vmem:[%s587] sm:$0x1]
    %v2861 = vlaneseq
    %v2862 = vshrl.u32 %v2861, 7
    %v2863 = vsub.s32 0, %v2862
    %v2864 = vrot.slane %v2859, %v2863
    %v2866 = vadd.f32 %v2856, %v2864
    %v2867 = vxor.u32 %v2866, 2147483648
    %v2868 = vmul.f32 %v2867, 1.442695
    %v2869 = vpow.pop %v2868
    %v2870 = vadd.f32 %v2869, 1.0
    %v2871 = vrcp.pop %v2870
    %v2872 = vmul.f32 1.0, %v2871
    %2874 = vrot.lane.b32.xlu0 %v2866, 32
    %v2875 = vpop.permute.xlu0 %2874
    %v2877 = vmul.f32 %v2872, %v2875
    %2879 = vrot.lane.b32.xlu0 %v2877, 64
    %v2880 = vpop.permute.xlu0 %2879
    %v2882 = vadd.f32 %v2866, %v2880
    %v2883 = vtanh.pop %v2882
    %v2884 = vsub.f32 1.0, %v2872
    %2886 = vrot.lane.b32.xlu0 %v2883, 96
    %v2887 = vpop.permute.xlu0 %2886
    %v2889 = vmul.f32 %v2884, %v2887
    %v2890 = vmul.f32 %v2872, %v2513
    %v2891 = vadd.f32 %v2889, %v2890
    %2893 = vrot.lane.b32.xlu0 %v2891, 96
    %v2894 = vpop.permute.xlu0 %2893
    %2896 = vst.msk [vmem:[#allocation3 + $0x30] sm:$0xff] %vm226, %v2894
    %v2897 = vld [vmem:[#allocation2 + $0x38] sm:$0xff]
    %v2898 = vld [vmem:[%s2] sm:$0xff]
    %v2899 = vld [vmem:[%s2 + $0x8] sm:$0xff]
    %v2900 = vld [vmem:[%s2 + $0x10] sm:$0xff]
    %v2901 = vld [vmem:[%s2 + $0x18] sm:$0xff]
    %v2902 = vld [vmem:[%s3] sm:$0xff]
    %v2903 = vld [vmem:[%s3 + $0x8] sm:$0xff]
    %v2904 = vld [vmem:[%s3 + $0x10] sm:$0xff]
    %v2905 = vld [vmem:[%s3 + $0x18] sm:$0xff]
    %2906 = vmatprep.subr.mxu0 0.0
    %2907 = vmatpush1.msra.mxu0 0.0
    %2908 = vmatprep.subr.mxu0 0.0
    %2909 = vmatpush1.msra.mxu0 0.0
    %2910 = vmatprep.subr.mxu0 0.0
    %2911 = vmatpush1.msra.mxu0 0.0
    %2912 = vmatprep.subr.mxu0 0.0
    %2913 = vmatpush1.msra.mxu0 0.0
    %2914 = vmatprep.subr.mxu0 0.0
    %2915 = vmatpush1.msra.mxu0 0.0
    %2916 = vmatprep.subr.mxu0 0.0
    %2917 = vmatpush1.msra.mxu0 0.0
    %2918 = vmatprep.subr.mxu0 0.0
    %2919 = vmatpush1.msra.mxu0 0.0
    %2920 = vmatprep.subr.mxu0 0.0
    %2921 = vmatpush1.msra.mxu0 0.0
    %2922 = vmatprep.subr.mxu0 0.0
    %2923 = vmatpush1.msra.mxu0 0.0
    %2924 = vmatprep.subr.mxu0 0.0
    %2925 = vmatpush1.msra.mxu0 0.0
    %2926 = vmatprep.subr.mxu0 0.0
    %2927 = vmatpush1.msra.mxu0 0.0
    %2928 = vmatprep.subr.mxu0 0.0
    %2929 = vmatpush1.msra.mxu0 0.0
    %2930 = vmatprep.subr.mxu0 0.0
    %2931 = vmatpush1.msra.mxu0 %v2905
    %2932 = vmatprep.subr.mxu0 0.0
    %2933 = vmatpush1.msra.mxu0 %v2904
    %2934 = vmatprep.subr.mxu0 0.0
    %2935 = vmatpush1.msra.mxu0 %v2903
    %2936 = vmatprep.subr.mxu0 0.0
    %2937 = vmatpush1.msra.mxu0 %v2902
    %2938 = vmatprep.subr.mxu0 0.0
    %2939 = vmatpush2.msra.mxu0 0.0
    %2940 = vmatprep.subr.mxu0 0.0
    %2941 = vmatpush2.msra.mxu0 0.0
    %2942 = vmatprep.subr.mxu0 0.0
    %2943 = vmatpush2.msra.mxu0 0.0
    %2944 = vmatprep.subr.mxu0 0.0
    %2945 = vmatpush2.msra.mxu0 0.0
    %2946 = vmatprep.subr.mxu0 0.0
    %2947 = vmatpush2.msra.mxu0 0.0
    %2948 = vmatprep.subr.mxu0 0.0
    %2949 = vmatpush2.msra.mxu0 0.0
    %2950 = vmatprep.subr.mxu0 0.0
    %2951 = vmatpush2.msra.mxu0 0.0
    %2952 = vmatprep.subr.mxu0 0.0
    %2953 = vmatpush2.msra.mxu0 0.0
    %2954 = vmatprep.subr.mxu0 0.0
    %2955 = vmatpush2.msra.mxu0 0.0
    %2956 = vmatprep.subr.mxu0 0.0
    %2957 = vmatpush2.msra.mxu0 0.0
    %2958 = vmatprep.subr.mxu0 0.0
    %2959 = vmatpush2.msra.mxu0 0.0
    %2960 = vmatprep.subr.mxu0 0.0
    %2961 = vmatpush2.msra.mxu0 0.0
    %2962 = vmatprep.subr.mxu0 0.0
    %2963 = vmatpush2.msra.mxu0 0.0
    %2964 = vmatprep.subr.mxu0 0.0
    %2965 = vmatpush2.msra.mxu0 0.0
    %2966 = vmatprep.subr.mxu0 0.0
    %2967 = vmatpush2.msra.mxu0 0.0
    %2968 = vmatprep.subr.mxu0 0.0
    %2969 = vmatpush2.msra.mxu0 0.0
    %2970 = vmatprep.mubr.f32.mxu0 0.0
    %2971 = vmatmul.mubr.f32.gmra.mxu0 %v2787
    %v2972 = vpop.f32.mrf.mxu0
    %v2973 = vadd.f32 0.0, %v2972
    %v2974 = vpop.f32.mrf.mxu0
    %2975 = vdwg.mxu0
    %v2977 = vsel %vm226, %v2897, 0
    %2979 = vmatprep.subr.mxu0 0.0
    %2980 = vmatpush1.msra.mxu0 0.0
    %2981 = vmatprep.subr.mxu0 0.0
    %2982 = vmatpush1.msra.mxu0 0.0
    %2983 = vmatprep.subr.mxu0 0.0
    %2984 = vmatpush1.msra.mxu0 0.0
    %2985 = vmatprep.subr.mxu0 0.0
    %2986 = vmatpush1.msra.mxu0 0.0
    %2987 = vmatprep.subr.mxu0 0.0
    %2988 = vmatpush1.msra.mxu0 0.0
    %2989 = vmatprep.subr.mxu0 0.0
    %2990 = vmatpush1.msra.mxu0 0.0
    %2991 = vmatprep.subr.mxu0 0.0
    %2992 = vmatpush1.msra.mxu0 0.0
    %2993 = vmatprep.subr.mxu0 0.0
    %2994 = vmatpush1.msra.mxu0 0.0
    %2995 = vmatprep.subr.mxu0 0.0
    %2996 = vmatpush1.msra.mxu0 0.0
    %2997 = vmatprep.subr.mxu0 0.0
    %2998 = vmatpush1.msra.mxu0 0.0
    %2999 = vmatprep.subr.mxu0 0.0
    %3000 = vmatpush1.msra.mxu0 0.0
    %3001 = vmatprep.subr.mxu0 0.0
    %3002 = vmatpush1.msra.mxu0 0.0
    %3003 = vmatprep.subr.mxu0 0.0
    %3004 = vmatpush1.msra.mxu0 %v2901
    %3005 = vmatprep.subr.mxu0 0.0
    %3006 = vmatpush1.msra.mxu0 %v2900
    %3007 = vmatprep.subr.mxu0 0.0
    %3008 = vmatpush1.msra.mxu0 %v2899
    %3009 = vmatprep.subr.mxu0 0.0
    %3010 = vmatpush1.msra.mxu0 %v2898
    %3011 = vmatprep.subr.mxu0 0.0
    %3012 = vmatpush2.msra.mxu0 0.0
    %3013 = vmatprep.subr.mxu0 0.0
    %3014 = vmatpush2.msra.mxu0 0.0
    %3015 = vmatprep.subr.mxu0 0.0
    %3016 = vmatpush2.msra.mxu0 0.0
    %3017 = vmatprep.subr.mxu0 0.0
    %3018 = vmatpush2.msra.mxu0 0.0
    %3019 = vmatprep.subr.mxu0 0.0
    %3020 = vmatpush2.msra.mxu0 0.0
    %3021 = vmatprep.subr.mxu0 0.0
    %3022 = vmatpush2.msra.mxu0 0.0
    %3023 = vmatprep.subr.mxu0 0.0
    %3024 = vmatpush2.msra.mxu0 0.0
    %3025 = vmatprep.subr.mxu0 0.0
    %3026 = vmatpush2.msra.mxu0 0.0
    %3027 = vmatprep.subr.mxu0 0.0
    %3028 = vmatpush2.msra.mxu0 0.0
    %3029 = vmatprep.subr.mxu0 0.0
    %3030 = vmatpush2.msra.mxu0 0.0
    %3031 = vmatprep.subr.mxu0 0.0
    %3032 = vmatpush2.msra.mxu0 0.0
    %3033 = vmatprep.subr.mxu0 0.0
    %3034 = vmatpush2.msra.mxu0 0.0
    %3035 = vmatprep.subr.mxu0 0.0
    %3036 = vmatpush2.msra.mxu0 0.0
    %3037 = vmatprep.subr.mxu0 0.0
    %3038 = vmatpush2.msra.mxu0 0.0
    %3039 = vmatprep.subr.mxu0 0.0
    %3040 = vmatpush2.msra.mxu0 0.0
    %3041 = vmatprep.subr.mxu0 0.0
    %3042 = vmatpush2.msra.mxu0 0.0
    %3043 = vmatprep.mubr.f32.mxu0 0.0
    %3044 = vmatmul.mubr.f32.gmra.mxu0 %v2977
    %v3045 = vpop.f32.mrf.mxu0
    %v3046 = vadd.f32 %v2973, %v3045
    %v3047 = vpop.f32.mrf.mxu0
    %3048 = vdwg.mxu0
    %v3049 = vld [vmem:[%s4] sm:$0x1]
    %v3051 = vlaneseq
    %v3052 = vshrl.u32 %v3051, 7
    %v3053 = vsub.s32 0, %v3052
    %v3054 = vrot.slane %v3049, %v3053
    %v3056 = vadd.f32 %v3046, %v3054
    %v3057 = vxor.u32 %v3056, 2147483648
    %v3058 = vmul.f32 %v3057, 1.442695
    %v3059 = vpow.pop %v3058
    %v3060 = vadd.f32 %v3059, 1.0
    %v3061 = vrcp.pop %v3060
    %v3062 = vmul.f32 1.0, %v3061
    %3064 = vrot.lane.b32.xlu0 %v3056, 32
    %v3065 = vpop.permute.xlu0 %3064
    %v3067 = vmul.f32 %v3062, %v3065
    %3069 = vrot.lane.b32.xlu0 %v3067, 64
    %v3070 = vpop.permute.xlu0 %3069
    %v3072 = vadd.f32 %v3056, %v3070
    %v3073 = vtanh.pop %v3072
    %v3074 = vsub.f32 1.0, %v3062
    %3076 = vrot.lane.b32.xlu0 %v3073, 96
    %v3077 = vpop.permute.xlu0 %3076
    %v3079 = vmul.f32 %v3074, %v3077
    %v3080 = vmul.f32 %v3062, %v2703
    %v3081 = vadd.f32 %v3079, %v3080
    %v3082 = vld [vmem:[%s429] sm:$0xff]
    %v3083 = vld [vmem:[%s429 + $0x8] sm:$0xff]
    %v3084 = vld [vmem:[%s429 + $0x10] sm:$0xff]
    %v3085 = vld [vmem:[%s429 + $0x18] sm:$0xff]
    %v3086 = vld [vmem:[%s434] sm:$0xff]
    %v3087 = vld [vmem:[%s434 + $0x8] sm:$0xff]
    %v3088 = vld [vmem:[%s434 + $0x10] sm:$0xff]
    %v3089 = vld [vmem:[%s434 + $0x18] sm:$0xff]
    %v3090 = vsel %vm226, %v2894, 0
    %3092 = vmatprep.subr.mxu0 0.0
    %3093 = vmatpush1.msra.mxu0 0.0
    %3094 = vmatprep.subr.mxu0 0.0
    %3095 = vmatpush1.msra.mxu0 0.0
    %3096 = vmatprep.subr.mxu0 0.0
    %3097 = vmatpush1.msra.mxu0 0.0
    %3098 = vmatprep.subr.mxu0 0.0
    %3099 = vmatpush1.msra.mxu0 0.0
    %3100 = vmatprep.subr.mxu0 0.0
    %3101 = vmatpush1.msra.mxu0 0.0
    %3102 = vmatprep.subr.mxu0 0.0
    %3103 = vmatpush1.msra.mxu0 0.0
    %3104 = vmatprep.subr.mxu0 0.0
    %3105 = vmatpush1.msra.mxu0 0.0
    %3106 = vmatprep.subr.mxu0 0.0
    %3107 = vmatpush1.msra.mxu0 0.0
    %3108 = vmatprep.subr.mxu0 0.0
    %3109 = vmatpush1.msra.mxu0 0.0
    %3110 = vmatprep.subr.mxu0 0.0
    %3111 = vmatpush1.msra.mxu0 0.0
    %3112 = vmatprep.subr.mxu0 0.0
    %3113 = vmatpush1.msra.mxu0 0.0
    %3114 = vmatprep.subr.mxu0 0.0
    %3115 = vmatpush1.msra.mxu0 0.0
    %3116 = vmatprep.subr.mxu0 0.0
    %3117 = vmatpush1.msra.mxu0 %v3089
    %3118 = vmatprep.subr.mxu0 0.0
    %3119 = vmatpush1.msra.mxu0 %v3088
    %3120 = vmatprep.subr.mxu0 0.0
    %3121 = vmatpush1.msra.mxu0 %v3087
    %3122 = vmatprep.subr.mxu0 0.0
    %3123 = vmatpush1.msra.mxu0 %v3086
    %3124 = vmatprep.subr.mxu0 0.0
    %3125 = vmatpush2.msra.mxu0 0.0
    %3126 = vmatprep.subr.mxu0 0.0
    %3127 = vmatpush2.msra.mxu0 0.0
    %3128 = vmatprep.subr.mxu0 0.0
    %3129 = vmatpush2.msra.mxu0 0.0
    %3130 = vmatprep.subr.mxu0 0.0
    %3131 = vmatpush2.msra.mxu0 0.0
    %3132 = vmatprep.subr.mxu0 0.0
    %3133 = vmatpush2.msra.mxu0 0.0
    %3134 = vmatprep.subr.mxu0 0.0
    %3135 = vmatpush2.msra.mxu0 0.0
    %3136 = vmatprep.subr.mxu0 0.0
    %3137 = vmatpush2.msra.mxu0 0.0
    %3138 = vmatprep.subr.mxu0 0.0
    %3139 = vmatpush2.msra.mxu0 0.0
    %3140 = vmatprep.subr.mxu0 0.0
    %3141 = vmatpush2.msra.mxu0 0.0
    %3142 = vmatprep.subr.mxu0 0.0
    %3143 = vmatpush2.msra.mxu0 0.0
    %3144 = vmatprep.subr.mxu0 0.0
    %3145 = vmatpush2.msra.mxu0 0.0
    %3146 = vmatprep.subr.mxu0 0.0
    %3147 = vmatpush2.msra.mxu0 0.0
    %3148 = vmatprep.subr.mxu0 0.0
    %3149 = vmatpush2.msra.mxu0 0.0
    %3150 = vmatprep.subr.mxu0 0.0
    %3151 = vmatpush2.msra.mxu0 0.0
    %3152 = vmatprep.subr.mxu0 0.0
    %3153 = vmatpush2.msra.mxu0 0.0
    %3154 = vmatprep.subr.mxu0 0.0
    %3155 = vmatpush2.msra.mxu0 0.0
    %3156 = vmatprep.mubr.f32.mxu0 0.0
    %3157 = vmatmul.mubr.f32.gmra.mxu0 %v3090
    %v3158 = vpop.f32.mrf.mxu0
    %v3159 = vadd.f32 0.0, %v3158
    %v3160 = vpop.f32.mrf.mxu0
    %3161 = vdwg.mxu0
    %3163 = vrot.lane.b32.xlu0 %v3081, 96
    %v3164 = vpop.permute.xlu0 %3163
    %v3165 = vsel %vm226, %v3164, 0
    %3167 = vmatprep.subr.mxu0 0.0
    %3168 = vmatpush1.msra.mxu0 0.0
    %3169 = vmatprep.subr.mxu0 0.0
    %3170 = vmatpush1.msra.mxu0 0.0
    %3171 = vmatprep.subr.mxu0 0.0
    %3172 = vmatpush1.msra.mxu0 0.0
    %3173 = vmatprep.subr.mxu0 0.0
    %3174 = vmatpush1.msra.mxu0 0.0
    %3175 = vmatprep.subr.mxu0 0.0
    %3176 = vmatpush1.msra.mxu0 0.0
    %3177 = vmatprep.subr.mxu0 0.0
    %3178 = vmatpush1.msra.mxu0 0.0
    %3179 = vmatprep.subr.mxu0 0.0
    %3180 = vmatpush1.msra.mxu0 0.0
    %3181 = vmatprep.subr.mxu0 0.0
    %3182 = vmatpush1.msra.mxu0 0.0
    %3183 = vmatprep.subr.mxu0 0.0
    %3184 = vmatpush1.msra.mxu0 0.0
    %3185 = vmatprep.subr.mxu0 0.0
    %3186 = vmatpush1.msra.mxu0 0.0
    %3187 = vmatprep.subr.mxu0 0.0
    %3188 = vmatpush1.msra.mxu0 0.0
    %3189 = vmatprep.subr.mxu0 0.0
    %3190 = vmatpush1.msra.mxu0 0.0
    %3191 = vmatprep.subr.mxu0 0.0
    %3192 = vmatpush1.msra.mxu0 %v3085
    %3193 = vmatprep.subr.mxu0 0.0
    %3194 = vmatpush1.msra.mxu0 %v3084
    %3195 = vmatprep.subr.mxu0 0.0
    %3196 = vmatpush1.msra.mxu0 %v3083
    %3197 = vmatprep.subr.mxu0 0.0
    %3198 = vmatpush1.msra.mxu0 %v3082
    %3199 = vmatprep.subr.mxu0 0.0
    %3200 = vmatpush2.msra.mxu0 0.0
    %3201 = vmatprep.subr.mxu0 0.0
    %3202 = vmatpush2.msra.mxu0 0.0
    %3203 = vmatprep.subr.mxu0 0.0
    %3204 = vmatpush2.msra.mxu0 0.0
    %3205 = vmatprep.subr.mxu0 0.0
    %3206 = vmatpush2.msra.mxu0 0.0
    %3207 = vmatprep.subr.mxu0 0.0
    %3208 = vmatpush2.msra.mxu0 0.0
    %3209 = vmatprep.subr.mxu0 0.0
    %3210 = vmatpush2.msra.mxu0 0.0
    %3211 = vmatprep.subr.mxu0 0.0
    %3212 = vmatpush2.msra.mxu0 0.0
    %3213 = vmatprep.subr.mxu0 0.0
    %3214 = vmatpush2.msra.mxu0 0.0
    %3215 = vmatprep.subr.mxu0 0.0
    %3216 = vmatpush2.msra.mxu0 0.0
    %3217 = vmatprep.subr.mxu0 0.0
    %3218 = vmatpush2.msra.mxu0 0.0
    %3219 = vmatprep.subr.mxu0 0.0
    %3220 = vmatpush2.msra.mxu0 0.0
    %3221 = vmatprep.subr.mxu0 0.0
    %3222 = vmatpush2.msra.mxu0 0.0
    %3223 = vmatprep.subr.mxu0 0.0
    %3224 = vmatpush2.msra.mxu0 0.0
    %3225 = vmatprep.subr.mxu0 0.0
    %3226 = vmatpush2.msra.mxu0 0.0
    %3227 = vmatprep.subr.mxu0 0.0
    %3228 = vmatpush2.msra.mxu0 0.0
    %3229 = vmatprep.subr.mxu0 0.0
    %3230 = vmatpush2.msra.mxu0 0.0
    %3231 = vmatprep.mubr.f32.mxu0 0.0
    %3232 = vmatmul.mubr.f32.gmra.mxu0 %v3165
    %v3233 = vpop.f32.mrf.mxu0
    %v3234 = vadd.f32 %v3159, %v3233
    %v3235 = vpop.f32.mrf.mxu0
    %3236 = vdwg.mxu0
    %v3237 = vld [vmem:[%s587] sm:$0x1]
    %v3239 = vlaneseq
    %v3240 = vshrl.u32 %v3239, 7
    %v3241 = vsub.s32 0, %v3240
    %v3242 = vrot.slane %v3237, %v3241
    %v3244 = vadd.f32 %v3234, %v3242
    %v3245 = vxor.u32 %v3244, 2147483648
    %v3246 = vmul.f32 %v3245, 1.442695
    %v3247 = vpow.pop %v3246
    %v3248 = vadd.f32 %v3247, 1.0
    %v3249 = vrcp.pop %v3248
    %v3250 = vmul.f32 1.0, %v3249
    %3252 = vrot.lane.b32.xlu0 %v3244, 32
    %v3253 = vpop.permute.xlu0 %3252
    %v3255 = vmul.f32 %v3250, %v3253
    %3257 = vrot.lane.b32.xlu0 %v3255, 64
    %v3258 = vpop.permute.xlu0 %3257
    %v3260 = vadd.f32 %v3244, %v3258
    %v3261 = vtanh.pop %v3260
    %v3262 = vsub.f32 1.0, %v3250
    %3264 = vrot.lane.b32.xlu0 %v3261, 96
    %v3265 = vpop.permute.xlu0 %3264
    %v3267 = vmul.f32 %v3262, %v3265
    %v3268 = vmul.f32 %v3250, %v2891
    %v3269 = vadd.f32 %v3267, %v3268
    %3271 = vrot.lane.b32.xlu0 %v3269, 96
    %v3272 = vpop.permute.xlu0 %3271
    %3274 = vst.msk [vmem:[#allocation3 + $0x38] sm:$0xff] %vm226, %v3272
    %3276 = vst.msk [vmem:[#allocation8] sm:$0xff] %vm226, %v3164
    %s3277 = scalar_lea.vmem [#allocation8], 8
    %3278 = vst.msk [vmem:[%s3277] sm:$0xff] %vm226, %v3272
    %v3279 = vld [vmem:[#allocation3] sm:$0xff]
    %v3280 = vld [vmem:[#allocation3 + $0x8] sm:$0xff]
    %v3281 = vld [vmem:[#allocation3 + $0x10] sm:$0xff]
    %v3282 = vld [vmem:[#allocation3 + $0x18] sm:$0xff]
    %v3283 = vld [vmem:[#allocation3 + $0x20] sm:$0xff]
    %v3284 = vld [vmem:[#allocation3 + $0x28] sm:$0xff]
    %v3285 = vld [vmem:[#allocation3 + $0x30] sm:$0xff]
    %v3286 = vld [vmem:[#allocation3 + $0x38] sm:$0xff]
    %v3287 = vld [vmem:[%s5] sm:$0xff]
    %v3288 = vld [vmem:[%s5 + $0x8] sm:$0xff]
    %v3289 = vld [vmem:[%s5 + $0x10] sm:$0xff]
    %v3290 = vld [vmem:[%s5 + $0x18] sm:$0xff]
    %v3291 = vld [vmem:[%s6] sm:$0x1]
    %v3293 = vlaneseq
    %v3294 = vshrl.u32 %v3293, 7
    %v3295 = vsub.s32 0, %v3294
    %v3296 = vrot.slane %v3291, %v3295
    %v3299 = vsel %vm226, %v3279, 0
    %v3302 = vsel %vm226, %v3280, 0
    %v3305 = vsel %vm226, %v3281, 0
    %v3308 = vsel %vm226, %v3282, 0
    %v3311 = vsel %vm226, %v3283, 0
    %v3314 = vsel %vm226, %v3284, 0
    %v3317 = vsel %vm226, %v3285, 0
    %v3320 = vsel %vm226, %v3286, 0
    %3322 = vmatprep.subr.mxu0 0.0
    %3323 = vmatpush1.msra.mxu0 0.0
    %3324 = vmatprep.subr.mxu0 0.0
    %3325 = vmatpush1.msra.mxu0 0.0
    %3326 = vmatprep.subr.mxu0 0.0
    %3327 = vmatpush1.msra.mxu0 0.0
    %3328 = vmatprep.subr.mxu0 0.0
    %3329 = vmatpush1.msra.mxu0 0.0
    %3330 = vmatprep.subr.mxu0 0.0
    %3331 = vmatpush1.msra.mxu0 0.0
    %3332 = vmatprep.subr.mxu0 0.0
    %3333 = vmatpush1.msra.mxu0 0.0
    %3334 = vmatprep.subr.mxu0 0.0
    %3335 = vmatpush1.msra.mxu0 0.0
    %3336 = vmatprep.subr.mxu0 0.0
    %3337 = vmatpush1.msra.mxu0 0.0
    %3338 = vmatprep.subr.mxu0 0.0
    %3339 = vmatpush1.msra.mxu0 0.0
    %3340 = vmatprep.subr.mxu0 0.0
    %3341 = vmatpush1.msra.mxu0 0.0
    %3342 = vmatprep.subr.mxu0 0.0
    %3343 = vmatpush1.msra.mxu0 0.0
    %3344 = vmatprep.subr.mxu0 0.0
    %3345 = vmatpush1.msra.mxu0 0.0
    %3346 = vmatprep.subr.mxu0 0.0
    %3347 = vmatpush1.msra.mxu0 %v3290
    %3348 = vmatprep.subr.mxu0 0.0
    %3349 = vmatpush1.msra.mxu0 %v3289
    %3350 = vmatprep.subr.mxu0 0.0
    %3351 = vmatpush1.msra.mxu0 %v3288
    %3352 = vmatprep.subr.mxu0 0.0
    %3353 = vmatpush1.msra.mxu0 %v3287
    %3354 = vmatprep.subr.mxu0 0.0
    %3355 = vmatpush2.msra.mxu0 0.0
    %3356 = vmatprep.subr.mxu0 0.0
    %3357 = vmatpush2.msra.mxu0 0.0
    %3358 = vmatprep.subr.mxu0 0.0
    %3359 = vmatpush2.msra.mxu0 0.0
    %3360 = vmatprep.subr.mxu0 0.0
    %3361 = vmatpush2.msra.mxu0 0.0
    %3362 = vmatprep.subr.mxu0 0.0
    %3363 = vmatpush2.msra.mxu0 0.0
    %3364 = vmatprep.subr.mxu0 0.0
    %3365 = vmatpush2.msra.mxu0 0.0
    %3366 = vmatprep.subr.mxu0 0.0
    %3367 = vmatpush2.msra.mxu0 0.0
    %3368 = vmatprep.subr.mxu0 0.0
    %3369 = vmatpush2.msra.mxu0 0.0
    %3370 = vmatprep.subr.mxu0 0.0
    %3371 = vmatpush2.msra.mxu0 0.0
    %3372 = vmatprep.subr.mxu0 0.0
    %3373 = vmatpush2.msra.mxu0 0.0
    %3374 = vmatprep.subr.mxu0 0.0
    %3375 = vmatpush2.msra.mxu0 0.0
    %3376 = vmatprep.subr.mxu0 0.0
    %3377 = vmatpush2.msra.mxu0 0.0
    %3378 = vmatprep.subr.mxu0 0.0
    %3379 = vmatpush2.msra.mxu0 0.0
    %3380 = vmatprep.subr.mxu0 0.0
    %3381 = vmatpush2.msra.mxu0 0.0
    %3382 = vmatprep.subr.mxu0 0.0
    %3383 = vmatpush2.msra.mxu0 0.0
    %3384 = vmatprep.subr.mxu0 0.0
    %3385 = vmatpush2.msra.mxu0 0.0
    %3386 = vmatprep.mubr.f32.mxu0 0.0
    %3387 = vmatmul.mubr.f32.gmra.mxu0 %v3299
    %v3388 = vpop.f32.mrf.mxu0
    %v3389 = vadd.f32 %v3296, %v3388
    %v3390 = vpop.f32.mrf.mxu0
    %3391 = vmatprep.mubr.f32.mxu0 0.0
    %3392 = vmatmul.mubr.f32.gmra.mxu0 %v3302
    %v3393 = vpop.f32.mrf.mxu0
    %v3394 = vadd.f32 %v3296, %v3393
    %v3395 = vpop.f32.mrf.mxu0
    %3396 = vmatprep.mubr.f32.mxu0 0.0
    %3397 = vmatmul.mubr.f32.gmra.mxu0 %v3305
    %v3398 = vpop.f32.mrf.mxu0
    %v3399 = vadd.f32 %v3296, %v3398
    %v3400 = vpop.f32.mrf.mxu0
    %3401 = vmatprep.mubr.f32.mxu0 0.0
    %3402 = vmatmul.mubr.f32.gmra.mxu0 %v3308
    %v3403 = vpop.f32.mrf.mxu0
    %v3404 = vadd.f32 %v3296, %v3403
    %v3405 = vpop.f32.mrf.mxu0
    %3406 = vmatprep.mubr.f32.mxu0 0.0
    %3407 = vmatmul.mubr.f32.gmra.mxu0 %v3311
    %v3408 = vpop.f32.mrf.mxu0
    %v3409 = vadd.f32 %v3296, %v3408
    %v3410 = vpop.f32.mrf.mxu0
    %3411 = vmatprep.mubr.f32.mxu0 0.0
    %3412 = vmatmul.mubr.f32.gmra.mxu0 %v3314
    %v3413 = vpop.f32.mrf.mxu0
    %v3414 = vadd.f32 %v3296, %v3413
    %v3415 = vpop.f32.mrf.mxu0
    %3416 = vmatprep.mubr.f32.mxu0 0.0
    %3417 = vmatmul.mubr.f32.gmra.mxu0 %v3317
    %v3418 = vpop.f32.mrf.mxu0
    %v3419 = vadd.f32 %v3296, %v3418
    %v3420 = vpop.f32.mrf.mxu0
    %3421 = vmatprep.mubr.f32.mxu0 0.0
    %3422 = vmatmul.mubr.f32.gmra.mxu0 %v3320
    %v3423 = vpop.f32.mrf.mxu0
    %v3424 = vadd.f32 %v3296, %v3423
    %v3425 = vpop.f32.mrf.mxu0
    %3426 = vdwg.mxu0
    %3427 = vmax.xlane.f32.xlu0 %v3389
    %v3428 = vpop.xlane.xlu0 %3427
    %3429 = vmax.xlane.f32.xlu0 %v3394
    %v3430 = vpop.xlane.xlu0 %3429
    %3431 = vmax.xlane.f32.xlu0 %v3399
    %v3432 = vpop.xlane.xlu0 %3431
    %3433 = vmax.xlane.f32.xlu0 %v3404
    %v3434 = vpop.xlane.xlu0 %3433
    %3435 = vmax.xlane.f32.xlu0 %v3409
    %v3436 = vpop.xlane.xlu0 %3435
    %3437 = vmax.xlane.f32.xlu0 %v3414
    %v3438 = vpop.xlane.xlu0 %3437
    %3439 = vmax.xlane.f32.xlu0 %v3419
    %v3440 = vpop.xlane.xlu0 %3439
    %3441 = vmax.xlane.f32.xlu0 %v3424
    %v3442 = vpop.xlane.xlu0 %3441
    %v3443 = vsub.f32 %v3389, %v3428
    %v3444 = vsub.f32 %v3394, %v3430
    %v3445 = vsub.f32 %v3399, %v3432
    %v3446 = vsub.f32 %v3404, %v3434
    %v3447 = vsub.f32 %v3409, %v3436
    %v3448 = vsub.f32 %v3414, %v3438
    %v3449 = vsub.f32 %v3419, %v3440
    %v3450 = vsub.f32 %v3424, %v3442
    %v3451 = vmul.f32 %v3443, 1.442695
    %v3452 = vpow.pop %v3451
    %v3453 = vmul.f32 %v3444, 1.442695
    %v3454 = vpow.pop %v3453
    %v3455 = vmul.f32 %v3445, 1.442695
    %v3456 = vpow.pop %v3455
    %v3457 = vmul.f32 %v3446, 1.442695
    %v3458 = vpow.pop %v3457
    %v3459 = vmul.f32 %v3447, 1.442695
    %v3460 = vpow.pop %v3459
    %v3461 = vmul.f32 %v3448, 1.442695
    %v3462 = vpow.pop %v3461
    %v3463 = vmul.f32 %v3449, 1.442695
    %v3464 = vpow.pop %v3463
    %v3465 = vmul.f32 %v3450, 1.442695
    %v3466 = vpow.pop %v3465
    %3467 = vadd.xlane.f32.xlu0 %v3452
    %v3468 = vpop.xlane.xlu0 %3467
    %3469 = vadd.xlane.f32.xlu0 %v3454
    %v3470 = vpop.xlane.xlu0 %3469
    %3471 = vadd.xlane.f32.xlu0 %v3456
    %v3472 = vpop.xlane.xlu0 %3471
    %3473 = vadd.xlane.f32.xlu0 %v3458
    %v3474 = vpop.xlane.xlu0 %3473
    %3475 = vadd.xlane.f32.xlu0 %v3460
    %v3476 = vpop.xlane.xlu0 %3475
    %3477 = vadd.xlane.f32.xlu0 %v3462
    %v3478 = vpop.xlane.xlu0 %3477
    %3479 = vadd.xlane.f32.xlu0 %v3464
    %v3480 = vpop.xlane.xlu0 %3479
    %3481 = vadd.xlane.f32.xlu0 %v3466
    %v3482 = vpop.xlane.xlu0 %3481
    %v3483 = vlog2.pop %v3468
    %v3484 = vmul.f32 %v3483, 0.6931472
    %v3485 = vlog2.pop %v3470
    %v3486 = vmul.f32 %v3485, 0.6931472
    %v3487 = vlog2.pop %v3472
    %v3488 = vmul.f32 %v3487, 0.6931472
    %v3489 = vlog2.pop %v3474
    %v3490 = vmul.f32 %v3489, 0.6931472
    %v3491 = vlog2.pop %v3476
    %v3492 = vmul.f32 %v3491, 0.6931472
    %v3493 = vlog2.pop %v3478
    %v3494 = vmul.f32 %v3493, 0.6931472
    %v3495 = vlog2.pop %v3480
    %v3496 = vmul.f32 %v3495, 0.6931472
    %v3497 = vlog2.pop %v3482
    %v3498 = vmul.f32 %v3497, 0.6931472
    %v3499 = vsub.f32 %v3443, %v3484
    %v3500 = vsub.f32 %v3444, %v3486
    %v3501 = vsub.f32 %v3445, %v3488
    %v3502 = vsub.f32 %v3446, %v3490
    %v3503 = vsub.f32 %v3447, %v3492
    %v3504 = vsub.f32 %v3448, %v3494
    %v3505 = vsub.f32 %v3449, %v3496
    %v3506 = vsub.f32 %v3450, %v3498
    %3507 = vst [vmem:[#allocation7] sm:$0xff] %v3499
    %3508 = vst [vmem:[#allocation7 + $0x8] sm:$0xff] %v3500
    %3509 = vst [vmem:[#allocation7 + $0x10] sm:$0xff] %v3501
    %3510 = vst [vmem:[#allocation7 + $0x18] sm:$0xff] %v3502
    %3511 = vst [vmem:[#allocation7 + $0x20] sm:$0xff] %v3503
    %3512 = vst [vmem:[#allocation7 + $0x28] sm:$0xff] %v3504
    %3513 = vst [vmem:[#allocation7 + $0x30] sm:$0xff] %v3505
    %3514 = vst [vmem:[#allocation7 + $0x38] sm:$0xff] %v3506
    // Predicated region
    $region38: #{decoder_decode.1} parent=1 // pred_check
      _
    $region39: #{decoder_decode.1} parent=1 // pred_check_branch
      %3516 = sbr.rel (0) target = $region41
    $region40: #{decoder_decode.1} parent=1 // pred_region
      %s3518 = ssub.s32 1024, 1024
      %3519 = vsyncadd [#allocation6], %s3518
      %s3520 = sshll.u32 [#allocation7], 4
      %s3521 = int_to_ptr.vmem [resolvable:$true] %s3520
      %3526 = dma.vmem_to_hbm [thread:$0]  %s3521, 1024, %s8, [#allocation6], 128, 128, 8
    $region41: #{decoder_decode.1} parent=1 // pred_fallthru
      _
    // Predicated region
    $region42: #{decoder_decode.1} parent=1 // pred_check
      _
    $region43: #{decoder_decode.1} parent=1 // pred_check_branch
      %3528 = sbr.rel (0) target = $region45
    $region44: #{decoder_decode.1} parent=1 // pred_region
      %s3530 = ssub.s32 256, 256
      %3531 = vsyncadd [#allocation9], %s3530
      %s3532 = sshll.u32 [#allocation8], 4
      %s3533 = int_to_ptr.vmem [resolvable:$true] %s3532
      %3538 = dma.vmem_to_hbm [thread:$0]  %s3533, 256, %s9, [#allocation9], 128, 128, 8
    $region45: #{decoder_decode.1} parent=1 // pred_fallthru
      _
    // Predicated region
    $region46: #{decoder_decode.1} parent=1 // pred_check
      _
    $region47: #{decoder_decode.1} parent=1 // pred_check_branch
      %3540 = sbr.rel (0) target = $region49
    $region48: #{decoder_decode.1} parent=1 // pred_region
      %3541 = dma.done [#allocation6], 1024
    $region49: #{decoder_decode.1} parent=1 // pred_fallthru
      _
    // Predicated region
    $region50: #{decoder_decode.1} parent=1 // pred_check
      _
    $region51: #{decoder_decode.1} parent=1 // pred_check_branch
      %3543 = sbr.rel (0) target = $region53
    $region52: #{decoder_decode.1} parent=1 // pred_region
      %3544 = dma.done [#allocation9], 256
    $region53: #{decoder_decode.1} parent=1 // pred_fallthru
      _
    %3545 = vsyncpa [#allocation5], 1
    %3546 = vsyncpa [#allocation6], 1
    %3547 = vsyncpa [#allocation9], 1

</llo_original>
